<compile_context>
chip_gen: v7x
topology: tpu7x:2x2x1
jax: 0.10.0
libtpu: 0.0.40
codegen_flags: <defaults>
</compile_context>

<pallas_src>
import numpy as np
import jax
import jax.numpy as jnp
from jax import lax
from jax.experimental import pallas as pl
from jax.experimental.pallas import tpu as pltpu

BN_EPS = 1e-5


def _round8(c):
    return (c + 7) // 8 * 8


# ----------------------- wrapper-side constant tables ------------------------

def _tap_masks(H, W, tile_n):
    """(9, tile_n*H*W) f32 0/1 validity masks for the 3x3 pad=1 taps.

    In the flat lane-dense layout (images concatenated along the spatial axis),
    a tap read `a[:, p + dh*W + dw]` is valid iff (h+dh, w+dw) stays inside the
    image; the mask zeroes padding reads and cross-image-seam reads.
    """
    HW = H * W
    p = np.arange(HW)
    h, w = p // W, p % W
    rows = []
    for dh in (-1, 0, 1):
        for dw in (-1, 0, 1):
            valid = (h + dh >= 0) & (h + dh < H) & (w + dw >= 0) & (w + dw < W)
            rows.append(np.tile(valid.astype(np.float32), tile_n))
    return jnp.asarray(np.stack(rows, axis=0))


def _pool_select(H, W, tile_n):
    """(L, L//4) bf16 0/1 matrix keeping the top-left lane of every 2x2 window
    (block-diagonal over the tile_n images packed along the flat spatial axis)."""
    HW, hw4, W2 = H * W, (H // 2) * (W // 2), W // 2
    L = tile_n * HW
    sel = np.zeros((L, L // 4), np.float32)
    q = np.arange(L // 4)
    n_img, qi = q // hw4, q % hw4
    src = n_img * HW + (2 * (qi // W2)) * W + 2 * (qi % W2)
    sel[src, q] = 1.0
    return jnp.asarray(sel).astype(jnp.bfloat16)


def fold_bn(gamma, beta, mean, var):
    # Inference-mode BatchNorm folded to per-channel scale/shift.
    scale = gamma / jnp.sqrt(var + BN_EPS)
    shift = beta - mean * scale
    return scale, shift


# ------------------------------ in-kernel ops --------------------------------

def _conv3x3_relu_bn(a, w_ref, p_ref, mask_ref, buf_ref, W, L, pad):
    """Conv2d(3x3, pad=1)+bias -> ReLU -> BatchNorm2d (inference, folded).

    a        : (Cin, L) f32, L = tile_n*H*W flat lane-dense layout.
    w_ref    : (Cout, 9*Cin) bf16 tap-major repacked weight.
    p_ref    : (Cout, 3) f32 packed [bias, bn_scale, bn_shift].
    mask_ref : (9, L) f32 0/1 tap-validity masks.
    buf_ref  : (C_max, L0 + 2*pad) f32 halo scratch (shared across layers).
    """
    cin = a.shape[0]
    # Stage the activation once; each 3x3 tap is then a static-offset VMEM
    # window read (replaces the old O(C*HW^2) MXU gather matmuls).
    buf_ref[pl.ds(0, cin), pl.ds(pad, L)] = a
    masks = mask_ref[...]
    pieces = []
    k = 0
    for dh in (-1, 0, 1):
        for dw in (-1, 0, 1):
            off = dh * W + dw
            if off == 0:
                pieces.append(a)                      # centre tap: mask is all ones
            else:
                win = buf_ref[pl.ds(0, cin), pl.ds(pad + off, L)]
                pieces.append(win * masks[k:k + 1, :])
            k += 1
    # Fused K = 9*Cin matmul; single bf16 cast of the assembled RHS per layer.
    rhs = jnp.concatenate(pieces, axis=0).astype(jnp.bfloat16)       # (9*Cin, L)
    y = jnp.dot(w_ref[...], rhs, preferred_element_type=jnp.float32)  # (Cout, L)
    pv = p_ref[...]
    bias, scale, shift = pv[:, 0:1], pv[:, 1:2], pv[:, 2:3]
    return jnp.maximum(y + bias, 0.0) * scale + shift   # ReLU precedes BN (as in module)


def _maxpool2x2(a, sel_ref, buf_ref, W, L, pad):
    """2x2 / stride-2 max pool on a (C, L) f32 map -> (C, L//4) f32."""
    c = a.shape[0]
    buf_ref[pl.ds(0, c), pl.ds(pad, L)] = a
    n1 = buf_ref[pl.ds(0, c), pl.ds(pad + 1, L)]
    n2 = buf_ref[pl.ds(0, c), pl.ds(pad + W, L)]
    n3 = buf_ref[pl.ds(0, c), pl.ds(pad + W + 1, L)]
    mx = jnp.maximum(jnp.maximum(a, n1), jnp.maximum(n2, n3))
    # TODO(synk): the anchor down-select is still one small bf16 0/1 matmul
    # (O(C*L^2/4)); replace with a strided store/load decimation to take the
    # last non-conv work off the MXU at large spatial sizes.
    return jnp.dot(mx.astype(jnp.bfloat16), sel_ref[...],
                   preferred_element_type=jnp.float32)


def _make_kernel(widths, lengths, pad):
    def kernel(x_ref, w1, p1, w2, p2, w3, p3, w4, p4, w5, p5, w6, p6,
               m1, m2, m3, s1, s2, s3, seg_ref, wl_ref, bl_ref, o_ref, buf_ref):
        # Halo scratch may hold NaN/Inf bit patterns on first use; zero it so every
        # masked-out / discarded read stays finite (0 * finite == 0 exactly).
        buf_ref[...] = jnp.zeros(buf_ref.shape, buf_ref.dtype)
        convs = ((w1, p1), (w2, p2), (w3, p3), (w4, p4), (w5, p5), (w6, p6))
        masks = (m1, m2, m3)
        sels = (s1, s2, s3)
        a = x_ref[0]                                    # (Cin_pad, L0) f32
        for blk in range(3):                            # conv-conv-maxpool x 3
            W, L = widths[blk], lengths[blk]
            a = _conv3x3_relu_bn(a, *convs[2 * blk], masks[blk], buf_ref, W, L, pad)
            a = _conv3x3_relu_bn(a, *convs[2 * blk + 1], masks[blk], buf_ref, W, L, pad)
            a = _maxpool2x2(a, sels[blk], buf_ref, W, L, pad)
        # AdaptiveAvgPool2d(1) + Flatten + Dropout(eval: identity) + Linear.
        # seg_ref (tile_n, L_last) holds 1/hw_last per image -> per-image means,
        # contracted against a's spatial axis (A @ B^T, the standard NT dot).
        pooled_t = lax.dot_general(seg_ref[...], a, (((1,), (1,)), ((), ())),
                                   preferred_element_type=jnp.float32)   # (tile_n, C_last)
        out = jnp.dot(pooled_t, wl_ref[...],
                      preferred_element_type=jnp.float32) + bl_ref[...]  # (tile_n, OUT)
        o_ref[0] = out.astype(o_ref.dtype)
    return kernel


# ------------------------------ fused forward --------------------------------

def enhanced_model_forward(params, x_nchw, tile_n=None):
    """Whole EnhancedModel forward (inference) as a single fused pallas_call."""
    N, c_in, H0, W0 = x_nchw.shape
    assert H0 % 8 == 0 and W0 % 8 == 0, "three 2x2 maxpools need spatial % 8 == 0"
    if tile_n is None:
        # Biggest per-step batch tile (lane density) that still leaves >= 2 grid
        # steps (v7x megacore) and divides N.
        tile_n = 1
        for cand in range(min(8, max(1, N // 2)), 0, -1):
            if N % cand == 0:
                tile_n = cand
                break
    assert N % tile_n == 0
    G = N // tile_n

    widths = (W0, W0 // 2, W0 // 4)
    heights = (H0, H0 // 2, H0 // 4)
    lengths = tuple(tile_n * h * w for h, w in zip(heights, widths))
    hw_last = (H0 // 8) * (W0 // 8)
    L_last = tile_n * hw_last
    pad = 128                                    # halo >= W0+1, lane-aligned staging

    # ---- constant operand packing (wrapper side, plain XLA) ----
    cin_pad = _round8(c_in)
    conv_w, conv_p, chan = [], [], []
    for j, (w_hwio, b, gamma, beta, mean, var) in enumerate(params["convs"]):
        ci, co = int(w_hwio.shape[2]), int(w_hwio.shape[3])
        ci_pad = _round8(ci) if j == 0 else ci
        assert ci_pad % 8 == 0 and co % 8 == 0, (
            "fused-K layout needs conv channel counts that are multiples of 8")
        if ci_pad != ci:
            w_hwio = jnp.pad(w_hwio, ((0, 0), (0, 0), (0, ci_pad - ci), (0, 0)))
        # (3,3,Ci,Co) -> (Co, 9*Ci), tap-major (k = 3*(dh+1) + (dw+1)).
        wk = jnp.transpose(w_hwio.reshape(9, ci_pad, co), (2, 0, 1)).reshape(co, 9 * ci_pad)
        conv_w.append(wk.astype(jnp.bfloat16))
        scale, shift = fold_bn(gamma, beta, mean, var)
        conv_p.append(jnp.stack([b, scale, shift], axis=1).astype(jnp.float32))
        chan += [ci_pad, co]
    assert chan[0] == cin_pad

    masks = [_tap_masks(h, w, tile_n) for h, w in zip(heights, widths)]
    sels = [_pool_select(h, w, tile_n) for h, w in zip(heights, widths)]

    seg = np.zeros((tile_n, L_last), np.float32)      # per-image mean weights
    for n in range(tile_n):
        seg[n, n * hw_last:(n + 1) * hw_last] = 1.0 / hw_last
    seg = jnp.asarray(seg)

    wl, bl = params["linear"]
    wl_f = wl.astype(jnp.float32)                     # (C_last, OUT)
    bl_f = bl.reshape(1, -1).astype(jnp.float32)      # (1, OUT)
    out_dim = int(wl_f.shape[1])

    # ---- input repack: NCHW -> (G, Cin_pad, tile_n*H*W), lane-dense flat layout ----
    x = x_nchw.reshape(N, c_in, H0 * W0).astype(jnp.float32)
    if cin_pad != c_in:
        x = jnp.pad(x, ((0, 0), (0, cin_pad - c_in), (0, 0)))
    x = (x.reshape(G, tile_n, cin_pad, H0 * W0)
          .transpose(0, 2, 1, 3)
          .reshape(G, cin_pad, lengths[0]))

    def _const_spec(arr):
        nd = arr.ndim
        return pl.BlockSpec(arr.shape, lambda g, _nd=nd: (0,) * _nd,
                            pipeline_mode=pl.Buffered(1))

    operands = [x]
    in_specs = [pl.BlockSpec((1, cin_pad, lengths[0]), lambda g: (g, 0, 0))]
    for wk, pk in zip(conv_w, conv_p):
        operands += [wk, pk]
        in_specs += [_const_spec(wk), _const_spec(pk)]
    for m in masks:
        operands.append(m)
        in_specs.append(_const_spec(m))
    for s in sels:
        operands.append(s)
        in_specs.append(_const_spec(s))
    operands += [seg, wl_f, bl_f]
    in_specs += [_const_spec(seg), _const_spec(wl_f), _const_spec(bl_f)]

    c_buf = max(chan)
    out = pl.pallas_call(
        _make_kernel(widths, lengths, pad),
        out_shape=jax.ShapeDtypeStruct((G, tile_n, out_dim), jnp.float32),
        grid=(G,),
        in_specs=in_specs,
        out_specs=pl.BlockSpec((1, tile_n, out_dim), lambda g: (g, 0, 0)),
        scratch_shapes=[pltpu.VMEM((c_buf, lengths[0] + 2 * pad), jnp.float32)],
        compiler_params=pltpu.CompilerParams(
            dimension_semantics=("parallel",)),
    )(*operands)
    return out.reshape(N, out_dim)


# ------------------------------ reference path --------------------------------

def _maxpool2x2_ref(x):
    n, h, w, c = x.shape
    return x.reshape(n, h // 2, 2, w // 2, 2, c).max(axis=(2, 4))


def reference_forward(params, x_nchw):
    # Pure-JAX/XLA reference with the same precision policy (bf16 conv inputs /
    # weights, f32 accumulation + f32 epilogue) for apples-to-apples checking.
    a = jnp.transpose(x_nchw, (0, 2, 3, 1)).astype(jnp.float32)   # NHWC
    for blk in range(3):
        for j in range(2):
            w, b, gamma, beta, mean, var = params["convs"][2 * blk + j]
            y = lax.conv_general_dilated(
                a.astype(jnp.bfloat16), w.astype(jnp.bfloat16), (1, 1), "SAME",
                dimension_numbers=("NHWC", "HWIO", "NHWC"),
                preferred_element_type=jnp.float32)
            scale, shift = fold_bn(gamma, beta, mean, var)
            a = jnp.maximum(y + b, 0.0) * scale + shift
        a = _maxpool2x2_ref(a)
    pooled = jnp.mean(a, axis=(1, 2))
    wl, bl = params["linear"]
    return pooled @ wl + bl


# ------------------------------ model setup -----------------------------------

def init_params(key, in_ch, hidden, out_dim):
    chans = [(in_ch, hidden), (hidden, hidden),
             (hidden, 2 * hidden), (2 * hidden, 2 * hidden),
             (2 * hidden, 4 * hidden), (4 * hidden, 4 * hidden)]
    convs = []
    for (ci, co) in chans:
        key, kw, kb, kg, kbe, km, kv = jax.random.split(key, 7)
        w = jax.random.normal(kw, (3, 3, ci, co), jnp.float32) / jnp.sqrt(9.0 * ci)
        b = 0.1 * jax.random.normal(kb, (co,), jnp.float32)
        gamma = jax.random.uniform(kg, (co,), jnp.float32, 0.8, 1.2)
        beta = 0.1 * jax.random.normal(kbe, (co,), jnp.float32)
        mean = 0.1 * jax.random.normal(km, (co,), jnp.float32)
        var = jax.random.uniform(kv, (co,), jnp.float32, 0.9, 1.1)
        convs.append((w, b, gamma, beta, mean, var))
    key, kw, kb = jax.random.split(key, 3)
    wl = jax.random.normal(kw, (4 * hidden, out_dim), jnp.float32) / jnp.sqrt(4.0 * hidden)
    bl = 0.1 * jax.random.normal(kb, (out_dim,), jnp.float32)
    return {"convs": convs, "linear": (wl, bl)}


# ----------------------------------- main --------------------------------------

if __name__ == "__main__":
    key = jax.random.PRNGKey(0)
    k_x, k_p = jax.random.split(key)

    N, C_IN, HW = 4, 4, 16          # batch 4 -> tile_n=2 per step, grid of 2
    HIDDEN, OUT = 8, 10

    x = jax.random.normal(k_x, (N, C_IN, HW, HW), jnp.float32)   # NCHW like PyTorch
    params = init_params(k_p, C_IN, HIDDEN, OUT)

    fwd = jax.jit(enhanced_model_forward)
    out = jax.block_until_ready(fwd(params, x))

    ref = reference_forward(params, x)
    assert out.shape == (N, OUT), out.shape
    if not bool(jnp.allclose(out, ref, atol=3e-2, rtol=3e-2)):
        raise AssertionError(
            f"Pallas output mismatch, max abs diff = {float(jnp.max(jnp.abs(out - ref)))}")

    print("KERNEL_OK")
</pallas_src>

<mosaic_0001>
module attributes {stable_mosaic.version = 11 : i64} {
  func.func @kernel(%arg0: i32, %arg1: memref<1x8x512xf32, #tpu.memory_space<vmem>>, %arg2: memref<8x72xbf16, #tpu.memory_space<vmem>>, %arg3: memref<8x3xf32, #tpu.memory_space<vmem>>, %arg4: memref<8x72xbf16, #tpu.memory_space<vmem>>, %arg5: memref<8x3xf32, #tpu.memory_space<vmem>>, %arg6: memref<16x72xbf16, #tpu.memory_space<vmem>>, %arg7: memref<16x3xf32, #tpu.memory_space<vmem>>, %arg8: memref<16x144xbf16, #tpu.memory_space<vmem>>, %arg9: memref<16x3xf32, #tpu.memory_space<vmem>>, %arg10: memref<32x144xbf16, #tpu.memory_space<vmem>>, %arg11: memref<32x3xf32, #tpu.memory_space<vmem>>, %arg12: memref<32x288xbf16, #tpu.memory_space<vmem>>, %arg13: memref<32x3xf32, #tpu.memory_space<vmem>>, %arg14: memref<9x512xf32, #tpu.memory_space<vmem>>, %arg15: memref<9x128xf32, #tpu.memory_space<vmem>>, %arg16: memref<9x32xf32, #tpu.memory_space<vmem>>, %arg17: memref<512x128xbf16, #tpu.memory_space<vmem>>, %arg18: memref<128x32xbf16, #tpu.memory_space<vmem>>, %arg19: memref<32x8xbf16, #tpu.memory_space<vmem>>, %arg20: memref<2x8xf32, #tpu.memory_space<vmem>>, %arg21: memref<32x10xf32, #tpu.memory_space<vmem>>, %arg22: memref<1x10xf32, #tpu.memory_space<vmem>>, %arg23: memref<1x2x10xf32, #tpu.memory_space<vmem>>, %arg24: memref<32x768xf32, #tpu.memory_space<vmem>>) attributes {dimension_semantics = [#tpu.dimension_semantics<parallel>], iteration_bounds = array<i64: 2>, scalar_prefetch = 0 : i64, scratch_operands = 1 : i64, tpu.core_type = #tpu.core_type<tc>, window_params = [{transform_indices = @transform_0, window_bounds = array<i64: 1, 8, 512>}, {pipeline_mode = #tpu.pipeline_mode<synchronous>, transform_indices = @transform_1, window_bounds = array<i64: 8, 72>}, {pipeline_mode = #tpu.pipeline_mode<synchronous>, transform_indices = @transform_2, window_bounds = array<i64: 8, 3>}, {pipeline_mode = #tpu.pipeline_mode<synchronous>, transform_indices = @transform_3, window_bounds = array<i64: 8, 72>}, {pipeline_mode = #tpu.pipeline_mode<synchronous>, transform_indices = @transform_4, window_bounds = array<i64: 8, 3>}, {pipeline_mode = #tpu.pipeline_mode<synchronous>, transform_indices = @transform_5, window_bounds = array<i64: 16, 72>}, {pipeline_mode = #tpu.pipeline_mode<synchronous>, transform_indices = @transform_6, window_bounds = array<i64: 16, 3>}, {pipeline_mode = #tpu.pipeline_mode<synchronous>, transform_indices = @transform_7, window_bounds = array<i64: 16, 144>}, {pipeline_mode = #tpu.pipeline_mode<synchronous>, transform_indices = @transform_8, window_bounds = array<i64: 16, 3>}, {pipeline_mode = #tpu.pipeline_mode<synchronous>, transform_indices = @transform_9, window_bounds = array<i64: 32, 144>}, {pipeline_mode = #tpu.pipeline_mode<synchronous>, transform_indices = @transform_10, window_bounds = array<i64: 32, 3>}, {pipeline_mode = #tpu.pipeline_mode<synchronous>, transform_indices = @transform_11, window_bounds = array<i64: 32, 288>}, {pipeline_mode = #tpu.pipeline_mode<synchronous>, transform_indices = @transform_12, window_bounds = array<i64: 32, 3>}, {pipeline_mode = #tpu.pipeline_mode<synchronous>, transform_indices = @transform_13, window_bounds = array<i64: 9, 512>}, {pipeline_mode = #tpu.pipeline_mode<synchronous>, transform_indices = @transform_14, window_bounds = array<i64: 9, 128>}, {pipeline_mode = #tpu.pipeline_mode<synchronous>, transform_indices = @transform_15, window_bounds = array<i64: 9, 32>}, {pipeline_mode = #tpu.pipeline_mode<synchronous>, transform_indices = @transform_16, window_bounds = array<i64: 512, 128>}, {pipeline_mode = #tpu.pipeline_mode<synchronous>, transform_indices = @transform_17, window_bounds = array<i64: 128, 32>}, {pipeline_mode = #tpu.pipeline_mode<synchronous>, transform_indices = @transform_18, window_bounds = array<i64: 32, 8>}, {pipeline_mode = #tpu.pipeline_mode<synchronous>, transform_indices = @transform_19, window_bounds = array<i64: 2, 8>}, {pipeline_mode = #tpu.pipeline_mode<synchronous>, transform_indices = @transform_20, window_bounds = array<i64: 32, 10>}, {pipeline_mode = #tpu.pipeline_mode<synchronous>, transform_indices = @transform_21, window_bounds = array<i64: 1, 10>}, {transform_indices = @transform_22, window_bounds = array<i64: 1, 2, 10>}]} {
    %cst = arith.constant 0.000000e+00 : f32
    %0 = vector.broadcast %cst : f32 to vector<32x768xf32>
    %c0 = arith.constant 0 : index
    %c0_0 = arith.constant 0 : index
    %1 = vector.load %arg24[%c0, %c0_0] : memref<32x768xf32, #tpu.memory_space<vmem>>, vector<32x768xf32>
    tpu.vector_store %arg24[%c0, %c0_0], %0 {strides = array<i32>} : memref<32x768xf32, #tpu.memory_space<vmem>>, vector<32x768xf32>,
    %c0_1 = arith.constant 0 : index
    %c0_2 = arith.constant 0 : index
    %c0_3 = arith.constant 0 : index
    %2 = vector.load %arg1[%c0_1, %c0_2, %c0_3] : memref<1x8x512xf32, #tpu.memory_space<vmem>>, vector<1x8x512xf32>
    %3 = vector.shape_cast %2 : vector<1x8x512xf32> to vector<8x512xf32>
    %c0_4 = arith.constant 0 : index
    %c128 = arith.constant 128 : index
    %4 = vector.load %arg24[%c0_4, %c128] : memref<32x768xf32, #tpu.memory_space<vmem>>, vector<8x512xf32>
    tpu.vector_store %arg24[%c0_4, %c128], %3 {strides = array<i32>} : memref<32x768xf32, #tpu.memory_space<vmem>>, vector<8x512xf32>,
    %c0_5 = arith.constant 0 : index
    %c0_6 = arith.constant 0 : index
    %5 = vector.load %arg14[%c0_5, %c0_6] : memref<9x512xf32, #tpu.memory_space<vmem>>, vector<9x512xf32>
    %c0_7 = arith.constant 0 : index
    %c111 = arith.constant 111 : index
    %6 = vector.load %arg24[%c0_7, %c111] : memref<32x768xf32, #tpu.memory_space<vmem>>, vector<8x512xf32>
    %7 = vector.extract_strided_slice %5 {offsets = [0, 0], sizes = [1, 512], strides = [1, 1]} : vector<9x512xf32> to vector<1x512xf32>
    %8 = vector.broadcast %7 : vector<1x512xf32> to vector<8x512xf32>
    %9 = arith.mulf %6, %8 : vector<8x512xf32>
    %c0_8 = arith.constant 0 : index
    %c112 = arith.constant 112 : index
    %10 = vector.load %arg24[%c0_8, %c112] : memref<32x768xf32, #tpu.memory_space<vmem>>, vector<8x512xf32>
    %11 = vector.extract_strided_slice %5 {offsets = [1, 0], sizes = [1, 512], strides = [1, 1]} : vector<9x512xf32> to vector<1x512xf32>
    %12 = vector.broadcast %11 : vector<1x512xf32> to vector<8x512xf32>
    %13 = arith.mulf %10, %12 : vector<8x512xf32>
    %c0_9 = arith.constant 0 : index
    %c113 = arith.constant 113 : index
    %14 = vector.load %arg24[%c0_9, %c113] : memref<32x768xf32, #tpu.memory_space<vmem>>, vector<8x512xf32>
    %15 = vector.extract_strided_slice %5 {offsets = [2, 0], sizes = [1, 512], strides = [1, 1]} : vector<9x512xf32> to vector<1x512xf32>
    %16 = vector.broadcast %15 : vector<1x512xf32> to vector<8x512xf32>
    %17 = arith.mulf %14, %16 : vector<8x512xf32>
    %c0_10 = arith.constant 0 : index
    %c127 = arith.constant 127 : index
    %18 = vector.load %arg24[%c0_10, %c127] : memref<32x768xf32, #tpu.memory_space<vmem>>, vector<8x512xf32>
    %19 = vector.extract_strided_slice %5 {offsets = [3, 0], sizes = [1, 512], strides = [1, 1]} : vector<9x512xf32> to vector<1x512xf32>
    %20 = vector.broadcast %19 : vector<1x512xf32> to vector<8x512xf32>
    %21 = arith.mulf %18, %20 : vector<8x512xf32>
    %c0_11 = arith.constant 0 : index
    %c129 = arith.constant 129 : index
    %22 = vector.load %arg24[%c0_11, %c129] : memref<32x768xf32, #tpu.memory_space<vmem>>, vector<8x512xf32>
    %23 = vector.extract_strided_slice %5 {offsets = [5, 0], sizes = [1, 512], strides = [1, 1]} : vector<9x512xf32> to vector<1x512xf32>
    %24 = vector.broadcast %23 : vector<1x512xf32> to vector<8x512xf32>
    %25 = arith.mulf %22, %24 : vector<8x512xf32>
    %c0_12 = arith.constant 0 : index
    %c143 = arith.constant 143 : index
    %26 = vector.load %arg24[%c0_12, %c143] : memref<32x768xf32, #tpu.memory_space<vmem>>, vector<8x512xf32>
    %27 = vector.extract_strided_slice %5 {offsets = [6, 0], sizes = [1, 512], strides = [1, 1]} : vector<9x512xf32> to vector<1x512xf32>
    %28 = vector.broadcast %27 : vector<1x512xf32> to vector<8x512xf32>
    %29 = arith.mulf %26, %28 : vector<8x512xf32>
    %c0_13 = arith.constant 0 : index
    %c144 = arith.constant 144 : index
    %30 = vector.load %arg24[%c0_13, %c144] : memref<32x768xf32, #tpu.memory_space<vmem>>, vector<8x512xf32>
    %31 = vector.extract_strided_slice %5 {offsets = [7, 0], sizes = [1, 512], strides = [1, 1]} : vector<9x512xf32> to vector<1x512xf32>
    %32 = vector.broadcast %31 : vector<1x512xf32> to vector<8x512xf32>
    %33 = arith.mulf %30, %32 : vector<8x512xf32>
    %c0_14 = arith.constant 0 : index
    %c145 = arith.constant 145 : index
    %34 = vector.load %arg24[%c0_14, %c145] : memref<32x768xf32, #tpu.memory_space<vmem>>, vector<8x512xf32>
    %35 = vector.extract_strided_slice %5 {offsets = [8, 0], sizes = [1, 512], strides = [1, 1]} : vector<9x512xf32> to vector<1x512xf32>
    %36 = vector.broadcast %35 : vector<1x512xf32> to vector<8x512xf32>
    %37 = arith.mulf %34, %36 : vector<8x512xf32>
    %38 = tpu.concatenate %9, %13, %17, %21, %3, %25, %29, %33, %37 in 0 : vector<8x512xf32>, vector<8x512xf32>, vector<8x512xf32>, vector<8x512xf32>, vector<8x512xf32>, vector<8x512xf32>, vector<8x512xf32>, vector<8x512xf32>, vector<8x512xf32> -> vector<72x512xf32>
    %39 = arith.truncf %38 : vector<72x512xf32> to vector<72x512xbf16>
    %c0_15 = arith.constant 0 : index
    %c0_16 = arith.constant 0 : index
    %40 = vector.load %arg2[%c0_15, %c0_16] : memref<8x72xbf16, #tpu.memory_space<vmem>>, vector<8x72xbf16>
    %cst_17 = arith.constant dense<0.000000e+00> : vector<8x512xf32>
    %41 = tpu.matmul %40, %39, %cst_17 {dimension_numbers = #tpu.dot_dimension_numbers<[1], [0], [0], [1], [0, 0, 1, 1], [], []>} : vector<8x72xbf16>, vector<72x512xbf16>, vector<8x512xf32> -> vector<8x512xf32>
    %c0_18 = arith.constant 0 : index
    %c0_19 = arith.constant 0 : index
    %42 = vector.load %arg3[%c0_18, %c0_19] : memref<8x3xf32, #tpu.memory_space<vmem>>, vector<8x3xf32>
    %43 = vector.extract_strided_slice %42 {offsets = [0, 0], sizes = [8, 1], strides = [1, 1]} : vector<8x3xf32> to vector<8x1xf32>
    %44 = vector.extract_strided_slice %42 {offsets = [0, 1], sizes = [8, 1], strides = [1, 1]} : vector<8x3xf32> to vector<8x1xf32>
    %45 = vector.extract_strided_slice %42 {offsets = [0, 2], sizes = [8, 1], strides = [1, 1]} : vector<8x3xf32> to vector<8x1xf32>
    %46 = vector.broadcast %43 : vector<8x1xf32> to vector<8x512xf32>
    %47 = arith.addf %41, %46 : vector<8x512xf32>
    %cst_20 = arith.constant 0.000000e+00 : f32
    %48 = vector.broadcast %cst_20 : f32 to vector<8x512xf32>
    %49 = arith.maximumf %47, %48 : vector<8x512xf32>
    %50 = vector.broadcast %44 : vector<8x1xf32> to vector<8x512xf32>
    %51 = arith.mulf %49, %50 : vector<8x512xf32>
    %52 = vector.broadcast %45 : vector<8x1xf32> to vector<8x512xf32>
    %53 = arith.addf %51, %52 : vector<8x512xf32>
    %c0_21 = arith.constant 0 : index
    %c128_22 = arith.constant 128 : index
    %54 = vector.load %arg24[%c0_21, %c128_22] : memref<32x768xf32, #tpu.memory_space<vmem>>, vector<8x512xf32>
    tpu.vector_store %arg24[%c0_21, %c128_22], %53 {strides = array<i32>} : memref<32x768xf32, #tpu.memory_space<vmem>>, vector<8x512xf32>,
    %c0_23 = arith.constant 0 : index
    %c0_24 = arith.constant 0 : index
    %55 = vector.load %arg14[%c0_23, %c0_24] : memref<9x512xf32, #tpu.memory_space<vmem>>, vector<9x512xf32>
    %c0_25 = arith.constant 0 : index
    %c111_26 = arith.constant 111 : index
    %56 = vector.load %arg24[%c0_25, %c111_26] : memref<32x768xf32, #tpu.memory_space<vmem>>, vector<8x512xf32>
    %57 = vector.extract_strided_slice %55 {offsets = [0, 0], sizes = [1, 512], strides = [1, 1]} : vector<9x512xf32> to vector<1x512xf32>
    %58 = vector.broadcast %57 : vector<1x512xf32> to vector<8x512xf32>
    %59 = arith.mulf %56, %58 : vector<8x512xf32>
    %c0_27 = arith.constant 0 : index
    %c112_28 = arith.constant 112 : index
    %60 = vector.load %arg24[%c0_27, %c112_28] : memref<32x768xf32, #tpu.memory_space<vmem>>, vector<8x512xf32>
    %61 = vector.extract_strided_slice %55 {offsets = [1, 0], sizes = [1, 512], strides = [1, 1]} : vector<9x512xf32> to vector<1x512xf32>
    %62 = vector.broadcast %61 : vector<1x512xf32> to vector<8x512xf32>
    %63 = arith.mulf %60, %62 : vector<8x512xf32>
    %c0_29 = arith.constant 0 : index
    %c113_30 = arith.constant 113 : index
    %64 = vector.load %arg24[%c0_29, %c113_30] : memref<32x768xf32, #tpu.memory_space<vmem>>, vector<8x512xf32>
    %65 = vector.extract_strided_slice %55 {offsets = [2, 0], sizes = [1, 512], strides = [1, 1]} : vector<9x512xf32> to vector<1x512xf32>
    %66 = vector.broadcast %65 : vector<1x512xf32> to vector<8x512xf32>
    %67 = arith.mulf %64, %66 : vector<8x512xf32>
    %c0_31 = arith.constant 0 : index
    %c127_32 = arith.constant 127 : index
    %68 = vector.load %arg24[%c0_31, %c127_32] : memref<32x768xf32, #tpu.memory_space<vmem>>, vector<8x512xf32>
    %69 = vector.extract_strided_slice %55 {offsets = [3, 0], sizes = [1, 512], strides = [1, 1]} : vector<9x512xf32> to vector<1x512xf32>
    %70 = vector.broadcast %69 : vector<1x512xf32> to vector<8x512xf32>
    %71 = arith.mulf %68, %70 : vector<8x512xf32>
    %c0_33 = arith.constant 0 : index
    %c129_34 = arith.constant 129 : index
    %72 = vector.load %arg24[%c0_33, %c129_34] : memref<32x768xf32, #tpu.memory_space<vmem>>, vector<8x512xf32>
    %73 = vector.extract_strided_slice %55 {offsets = [5, 0], sizes = [1, 512], strides = [1, 1]} : vector<9x512xf32> to vector<1x512xf32>
    %74 = vector.broadcast %73 : vector<1x512xf32> to vector<8x512xf32>
    %75 = arith.mulf %72, %74 : vector<8x512xf32>
    %c0_35 = arith.constant 0 : index
    %c143_36 = arith.constant 143 : index
    %76 = vector.load %arg24[%c0_35, %c143_36] : memref<32x768xf32, #tpu.memory_space<vmem>>, vector<8x512xf32>
    %77 = vector.extract_strided_slice %55 {offsets = [6, 0], sizes = [1, 512], strides = [1, 1]} : vector<9x512xf32> to vector<1x512xf32>
    %78 = vector.broadcast %77 : vector<1x512xf32> to vector<8x512xf32>
    %79 = arith.mulf %76, %78 : vector<8x512xf32>
    %c0_37 = arith.constant 0 : index
    %c144_38 = arith.constant 144 : index
    %80 = vector.load %arg24[%c0_37, %c144_38] : memref<32x768xf32, #tpu.memory_space<vmem>>, vector<8x512xf32>
    %81 = vector.extract_strided_slice %55 {offsets = [7, 0], sizes = [1, 512], strides = [1, 1]} : vector<9x512xf32> to vector<1x512xf32>
    %82 = vector.broadcast %81 : vector<1x512xf32> to vector<8x512xf32>
    %83 = arith.mulf %80, %82 : vector<8x512xf32>
    %c0_39 = arith.constant 0 : index
    %c145_40 = arith.constant 145 : index
    %84 = vector.load %arg24[%c0_39, %c145_40] : memref<32x768xf32, #tpu.memory_space<vmem>>, vector<8x512xf32>
    %85 = vector.extract_strided_slice %55 {offsets = [8, 0], sizes = [1, 512], strides = [1, 1]} : vector<9x512xf32> to vector<1x512xf32>
    %86 = vector.broadcast %85 : vector<1x512xf32> to vector<8x512xf32>
    %87 = arith.mulf %84, %86 : vector<8x512xf32>
    %88 = tpu.concatenate %59, %63, %67, %71, %53, %75, %79, %83, %87 in 0 : vector<8x512xf32>, vector<8x512xf32>, vector<8x512xf32>, vector<8x512xf32>, vector<8x512xf32>, vector<8x512xf32>, vector<8x512xf32>, vector<8x512xf32>, vector<8x512xf32> -> vector<72x512xf32>
    %89 = arith.truncf %88 : vector<72x512xf32> to vector<72x512xbf16>
    %c0_41 = arith.constant 0 : index
    %c0_42 = arith.constant 0 : index
    %90 = vector.load %arg4[%c0_41, %c0_42] : memref<8x72xbf16, #tpu.memory_space<vmem>>, vector<8x72xbf16>
    %cst_43 = arith.constant dense<0.000000e+00> : vector<8x512xf32>
    %91 = tpu.matmul %90, %89, %cst_43 {dimension_numbers = #tpu.dot_dimension_numbers<[1], [0], [0], [1], [0, 0, 1, 1], [], []>} : vector<8x72xbf16>, vector<72x512xbf16>, vector<8x512xf32> -> vector<8x512xf32>
    %c0_44 = arith.constant 0 : index
    %c0_45 = arith.constant 0 : index
    %92 = vector.load %arg5[%c0_44, %c0_45] : memref<8x3xf32, #tpu.memory_space<vmem>>, vector<8x3xf32>
    %93 = vector.extract_strided_slice %92 {offsets = [0, 0], sizes = [8, 1], strides = [1, 1]} : vector<8x3xf32> to vector<8x1xf32>
    %94 = vector.extract_strided_slice %92 {offsets = [0, 1], sizes = [8, 1], strides = [1, 1]} : vector<8x3xf32> to vector<8x1xf32>
    %95 = vector.extract_strided_slice %92 {offsets = [0, 2], sizes = [8, 1], strides = [1, 1]} : vector<8x3xf32> to vector<8x1xf32>
    %96 = vector.broadcast %93 : vector<8x1xf32> to vector<8x512xf32>
    %97 = arith.addf %91, %96 : vector<8x512xf32>
    %cst_46 = arith.constant 0.000000e+00 : f32
    %98 = vector.broadcast %cst_46 : f32 to vector<8x512xf32>
    %99 = arith.maximumf %97, %98 : vector<8x512xf32>
    %100 = vector.broadcast %94 : vector<8x1xf32> to vector<8x512xf32>
    %101 = arith.mulf %99, %100 : vector<8x512xf32>
    %102 = vector.broadcast %95 : vector<8x1xf32> to vector<8x512xf32>
    %103 = arith.addf %101, %102 : vector<8x512xf32>
    %c0_47 = arith.constant 0 : index
    %c128_48 = arith.constant 128 : index
    %104 = vector.load %arg24[%c0_47, %c128_48] : memref<32x768xf32, #tpu.memory_space<vmem>>, vector<8x512xf32>
    tpu.vector_store %arg24[%c0_47, %c128_48], %103 {strides = array<i32>} : memref<32x768xf32, #tpu.memory_space<vmem>>, vector<8x512xf32>,
    %c0_49 = arith.constant 0 : index
    %c129_50 = arith.constant 129 : index
    %105 = vector.load %arg24[%c0_49, %c129_50] : memref<32x768xf32, #tpu.memory_space<vmem>>, vector<8x512xf32>
    %c0_51 = arith.constant 0 : index
    %c144_52 = arith.constant 144 : index
    %106 = vector.load %arg24[%c0_51, %c144_52] : memref<32x768xf32, #tpu.memory_space<vmem>>, vector<8x512xf32>
    %c0_53 = arith.constant 0 : index
    %c145_54 = arith.constant 145 : index
    %107 = vector.load %arg24[%c0_53, %c145_54] : memref<32x768xf32, #tpu.memory_space<vmem>>, vector<8x512xf32>
    %108 = arith.maximumf %103, %105 : vector<8x512xf32>
    %109 = arith.maximumf %106, %107 : vector<8x512xf32>
    %110 = arith.maximumf %108, %109 : vector<8x512xf32>
    %111 = arith.truncf %110 : vector<8x512xf32> to vector<8x512xbf16>
    %c0_55 = arith.constant 0 : index
    %c0_56 = arith.constant 0 : index
    %112 = vector.load %arg17[%c0_55, %c0_56] : memref<512x128xbf16, #tpu.memory_space<vmem>>, vector<512x128xbf16>
    %cst_57 = arith.constant dense<0.000000e+00> : vector<8x128xf32>
    %113 = tpu.matmul %111, %112, %cst_57 {dimension_numbers = #tpu.dot_dimension_numbers<[1], [0], [0], [1], [0, 0, 1, 1], [], []>} : vector<8x512xbf16>, vector<512x128xbf16>, vector<8x128xf32> -> vector<8x128xf32>
    %c0_58 = arith.constant 0 : index
    %c128_59 = arith.constant 128 : index
    %114 = vector.load %arg24[%c0_58, %c128_59] : memref<32x768xf32, #tpu.memory_space<vmem>>, vector<8x128xf32>
    tpu.vector_store %arg24[%c0_58, %c128_59], %113 {strides = array<i32>} : memref<32x768xf32, #tpu.memory_space<vmem>>, vector<8x128xf32>,
    %c0_60 = arith.constant 0 : index
    %c0_61 = arith.constant 0 : index
    %115 = vector.load %arg15[%c0_60, %c0_61] : memref<9x128xf32, #tpu.memory_space<vmem>>, vector<9x128xf32>
    %c0_62 = arith.constant 0 : index
    %c119 = arith.constant 119 : index
    %116 = vector.load %arg24[%c0_62, %c119] : memref<32x768xf32, #tpu.memory_space<vmem>>, vector<8x128xf32>
    %117 = vector.extract_strided_slice %115 {offsets = [0, 0], sizes = [1, 128], strides = [1, 1]} : vector<9x128xf32> to vector<1x128xf32>
    %118 = vector.broadcast %117 : vector<1x128xf32> to vector<8x128xf32>
    %119 = arith.mulf %116, %118 : vector<8x128xf32>
    %c0_63 = arith.constant 0 : index
    %c120 = arith.constant 120 : index
    %120 = vector.load %arg24[%c0_63, %c120] : memref<32x768xf32, #tpu.memory_space<vmem>>, vector<8x128xf32>
    %121 = vector.extract_strided_slice %115 {offsets = [1, 0], sizes = [1, 128], strides = [1, 1]} : vector<9x128xf32> to vector<1x128xf32>
    %122 = vector.broadcast %121 : vector<1x128xf32> to vector<8x128xf32>
    %123 = arith.mulf %120, %122 : vector<8x128xf32>
    %c0_64 = arith.constant 0 : index
    %c121 = arith.constant 121 : index
    %124 = vector.load %arg24[%c0_64, %c121] : memref<32x768xf32, #tpu.memory_space<vmem>>, vector<8x128xf32>
    %125 = vector.extract_strided_slice %115 {offsets = [2, 0], sizes = [1, 128], strides = [1, 1]} : vector<9x128xf32> to vector<1x128xf32>
    %126 = vector.broadcast %125 : vector<1x128xf32> to vector<8x128xf32>
    %127 = arith.mulf %124, %126 : vector<8x128xf32>
    %c0_65 = arith.constant 0 : index
    %c127_66 = arith.constant 127 : index
    %128 = vector.load %arg24[%c0_65, %c127_66] : memref<32x768xf32, #tpu.memory_space<vmem>>, vector<8x128xf32>
    %129 = vector.extract_strided_slice %115 {offsets = [3, 0], sizes = [1, 128], strides = [1, 1]} : vector<9x128xf32> to vector<1x128xf32>
    %130 = vector.broadcast %129 : vector<1x128xf32> to vector<8x128xf32>
    %131 = arith.mulf %128, %130 : vector<8x128xf32>
    %c0_67 = arith.constant 0 : index
    %c129_68 = arith.constant 129 : index
    %132 = vector.load %arg24[%c0_67, %c129_68] : memref<32x768xf32, #tpu.memory_space<vmem>>, vector<8x128xf32>
    %133 = vector.extract_strided_slice %115 {offsets = [5, 0], sizes = [1, 128], strides = [1, 1]} : vector<9x128xf32> to vector<1x128xf32>
    %134 = vector.broadcast %133 : vector<1x128xf32> to vector<8x128xf32>
    %135 = arith.mulf %132, %134 : vector<8x128xf32>
    %c0_69 = arith.constant 0 : index
    %c135 = arith.constant 135 : index
    %136 = vector.load %arg24[%c0_69, %c135] : memref<32x768xf32, #tpu.memory_space<vmem>>, vector<8x128xf32>
    %137 = vector.extract_strided_slice %115 {offsets = [6, 0], sizes = [1, 128], strides = [1, 1]} : vector<9x128xf32> to vector<1x128xf32>
    %138 = vector.broadcast %137 : vector<1x128xf32> to vector<8x128xf32>
    %139 = arith.mulf %136, %138 : vector<8x128xf32>
    %c0_70 = arith.constant 0 : index
    %c136 = arith.constant 136 : index
    %140 = vector.load %arg24[%c0_70, %c136] : memref<32x768xf32, #tpu.memory_space<vmem>>, vector<8x128xf32>
    %141 = vector.extract_strided_slice %115 {offsets = [7, 0], sizes = [1, 128], strides = [1, 1]} : vector<9x128xf32> to vector<1x128xf32>
    %142 = vector.broadcast %141 : vector<1x128xf32> to vector<8x128xf32>
    %143 = arith.mulf %140, %142 : vector<8x128xf32>
    %c0_71 = arith.constant 0 : index
    %c137 = arith.constant 137 : index
    %144 = vector.load %arg24[%c0_71, %c137] : memref<32x768xf32, #tpu.memory_space<vmem>>, vector<8x128xf32>
    %145 = vector.extract_strided_slice %115 {offsets = [8, 0], sizes = [1, 128], strides = [1, 1]} : vector<9x128xf32> to vector<1x128xf32>
    %146 = vector.broadcast %145 : vector<1x128xf32> to vector<8x128xf32>
    %147 = arith.mulf %144, %146 : vector<8x128xf32>
    %148 = tpu.concatenate %119, %123, %127, %131, %113, %135, %139, %143, %147 in 0 : vector<8x128xf32>, vector<8x128xf32>, vector<8x128xf32>, vector<8x128xf32>, vector<8x128xf32>, vector<8x128xf32>, vector<8x128xf32>, vector<8x128xf32>, vector<8x128xf32> -> vector<72x128xf32>
    %149 = arith.truncf %148 : vector<72x128xf32> to vector<72x128xbf16>
    %c0_72 = arith.constant 0 : index
    %c0_73 = arith.constant 0 : index
    %150 = vector.load %arg6[%c0_72, %c0_73] : memref<16x72xbf16, #tpu.memory_space<vmem>>, vector<16x72xbf16>
    %cst_74 = arith.constant dense<0.000000e+00> : vector<16x128xf32>
    %151 = tpu.matmul %150, %149, %cst_74 {dimension_numbers = #tpu.dot_dimension_numbers<[1], [0], [0], [1], [0, 0, 1, 1], [], []>} : vector<16x72xbf16>, vector<72x128xbf16>, vector<16x128xf32> -> vector<16x128xf32>
    %c0_75 = arith.constant 0 : index
    %c0_76 = arith.constant 0 : index
    %152 = vector.load %arg7[%c0_75, %c0_76] : memref<16x3xf32, #tpu.memory_space<vmem>>, vector<16x3xf32>
    %153 = vector.extract_strided_slice %152 {offsets = [0, 0], sizes = [16, 1], strides = [1, 1]} : vector<16x3xf32> to vector<16x1xf32>
    %154 = vector.extract_strided_slice %152 {offsets = [0, 1], sizes = [16, 1], strides = [1, 1]} : vector<16x3xf32> to vector<16x1xf32>
    %155 = vector.extract_strided_slice %152 {offsets = [0, 2], sizes = [16, 1], strides = [1, 1]} : vector<16x3xf32> to vector<16x1xf32>
    %156 = vector.broadcast %153 : vector<16x1xf32> to vector<16x128xf32>
    %157 = arith.addf %151, %156 : vector<16x128xf32>
    %cst_77 = arith.constant 0.000000e+00 : f32
    %158 = vector.broadcast %cst_77 : f32 to vector<16x128xf32>
    %159 = arith.maximumf %157, %158 : vector<16x128xf32>
    %160 = vector.broadcast %154 : vector<16x1xf32> to vector<16x128xf32>
    %161 = arith.mulf %159, %160 : vector<16x128xf32>
    %162 = vector.broadcast %155 : vector<16x1xf32> to vector<16x128xf32>
    %163 = arith.addf %161, %162 : vector<16x128xf32>
    %c0_78 = arith.constant 0 : index
    %c128_79 = arith.constant 128 : index
    %164 = vector.load %arg24[%c0_78, %c128_79] : memref<32x768xf32, #tpu.memory_space<vmem>>, vector<16x128xf32>
    tpu.vector_store %arg24[%c0_78, %c128_79], %163 {strides = array<i32>} : memref<32x768xf32, #tpu.memory_space<vmem>>, vector<16x128xf32>,
    %c0_80 = arith.constant 0 : index
    %c0_81 = arith.constant 0 : index
    %165 = vector.load %arg15[%c0_80, %c0_81] : memref<9x128xf32, #tpu.memory_space<vmem>>, vector<9x128xf32>
    %c0_82 = arith.constant 0 : index
    %c119_83 = arith.constant 119 : index
    %166 = vector.load %arg24[%c0_82, %c119_83] : memref<32x768xf32, #tpu.memory_space<vmem>>, vector<16x128xf32>
    %167 = vector.extract_strided_slice %165 {offsets = [0, 0], sizes = [1, 128], strides = [1, 1]} : vector<9x128xf32> to vector<1x128xf32>
    %168 = vector.broadcast %167 : vector<1x128xf32> to vector<16x128xf32>
    %169 = arith.mulf %166, %168 : vector<16x128xf32>
    %c0_84 = arith.constant 0 : index
    %c120_85 = arith.constant 120 : index
    %170 = vector.load %arg24[%c0_84, %c120_85] : memref<32x768xf32, #tpu.memory_space<vmem>>, vector<16x128xf32>
    %171 = vector.extract_strided_slice %165 {offsets = [1, 0], sizes = [1, 128], strides = [1, 1]} : vector<9x128xf32> to vector<1x128xf32>
    %172 = vector.broadcast %171 : vector<1x128xf32> to vector<16x128xf32>
    %173 = arith.mulf %170, %172 : vector<16x128xf32>
    %c0_86 = arith.constant 0 : index
    %c121_87 = arith.constant 121 : index
    %174 = vector.load %arg24[%c0_86, %c121_87] : memref<32x768xf32, #tpu.memory_space<vmem>>, vector<16x128xf32>
    %175 = vector.extract_strided_slice %165 {offsets = [2, 0], sizes = [1, 128], strides = [1, 1]} : vector<9x128xf32> to vector<1x128xf32>
    %176 = vector.broadcast %175 : vector<1x128xf32> to vector<16x128xf32>
    %177 = arith.mulf %174, %176 : vector<16x128xf32>
    %c0_88 = arith.constant 0 : index
    %c127_89 = arith.constant 127 : index
    %178 = vector.load %arg24[%c0_88, %c127_89] : memref<32x768xf32, #tpu.memory_space<vmem>>, vector<16x128xf32>
    %179 = vector.extract_strided_slice %165 {offsets = [3, 0], sizes = [1, 128], strides = [1, 1]} : vector<9x128xf32> to vector<1x128xf32>
    %180 = vector.broadcast %179 : vector<1x128xf32> to vector<16x128xf32>
    %181 = arith.mulf %178, %180 : vector<16x128xf32>
    %c0_90 = arith.constant 0 : index
    %c129_91 = arith.constant 129 : index
    %182 = vector.load %arg24[%c0_90, %c129_91] : memref<32x768xf32, #tpu.memory_space<vmem>>, vector<16x128xf32>
    %183 = vector.extract_strided_slice %165 {offsets = [5, 0], sizes = [1, 128], strides = [1, 1]} : vector<9x128xf32> to vector<1x128xf32>
    %184 = vector.broadcast %183 : vector<1x128xf32> to vector<16x128xf32>
    %185 = arith.mulf %182, %184 : vector<16x128xf32>
    %c0_92 = arith.constant 0 : index
    %c135_93 = arith.constant 135 : index
    %186 = vector.load %arg24[%c0_92, %c135_93] : memref<32x768xf32, #tpu.memory_space<vmem>>, vector<16x128xf32>
    %187 = vector.extract_strided_slice %165 {offsets = [6, 0], sizes = [1, 128], strides = [1, 1]} : vector<9x128xf32> to vector<1x128xf32>
    %188 = vector.broadcast %187 : vector<1x128xf32> to vector<16x128xf32>
    %189 = arith.mulf %186, %188 : vector<16x128xf32>
    %c0_94 = arith.constant 0 : index
    %c136_95 = arith.constant 136 : index
    %190 = vector.load %arg24[%c0_94, %c136_95] : memref<32x768xf32, #tpu.memory_space<vmem>>, vector<16x128xf32>
    %191 = vector.extract_strided_slice %165 {offsets = [7, 0], sizes = [1, 128], strides = [1, 1]} : vector<9x128xf32> to vector<1x128xf32>
    %192 = vector.broadcast %191 : vector<1x128xf32> to vector<16x128xf32>
    %193 = arith.mulf %190, %192 : vector<16x128xf32>
    %c0_96 = arith.constant 0 : index
    %c137_97 = arith.constant 137 : index
    %194 = vector.load %arg24[%c0_96, %c137_97] : memref<32x768xf32, #tpu.memory_space<vmem>>, vector<16x128xf32>
    %195 = vector.extract_strided_slice %165 {offsets = [8, 0], sizes = [1, 128], strides = [1, 1]} : vector<9x128xf32> to vector<1x128xf32>
    %196 = vector.broadcast %195 : vector<1x128xf32> to vector<16x128xf32>
    %197 = arith.mulf %194, %196 : vector<16x128xf32>
    %198 = tpu.concatenate %169, %173, %177, %181, %163, %185, %189, %193, %197 in 0 : vector<16x128xf32>, vector<16x128xf32>, vector<16x128xf32>, vector<16x128xf32>, vector<16x128xf32>, vector<16x128xf32>, vector<16x128xf32>, vector<16x128xf32>, vector<16x128xf32> -> vector<144x128xf32>
    %199 = arith.truncf %198 : vector<144x128xf32> to vector<144x128xbf16>
    %c0_98 = arith.constant 0 : index
    %c0_99 = arith.constant 0 : index
    %200 = vector.load %arg8[%c0_98, %c0_99] : memref<16x144xbf16, #tpu.memory_space<vmem>>, vector<16x144xbf16>
    %cst_100 = arith.constant dense<0.000000e+00> : vector<16x128xf32>
    %201 = tpu.matmul %200, %199, %cst_100 {dimension_numbers = #tpu.dot_dimension_numbers<[1], [0], [0], [1], [0, 0, 1, 1], [], []>} : vector<16x144xbf16>, vector<144x128xbf16>, vector<16x128xf32> -> vector<16x128xf32>
    %c0_101 = arith.constant 0 : index
    %c0_102 = arith.constant 0 : index
    %202 = vector.load %arg9[%c0_101, %c0_102] : memref<16x3xf32, #tpu.memory_space<vmem>>, vector<16x3xf32>
    %203 = vector.extract_strided_slice %202 {offsets = [0, 0], sizes = [16, 1], strides = [1, 1]} : vector<16x3xf32> to vector<16x1xf32>
    %204 = vector.extract_strided_slice %202 {offsets = [0, 1], sizes = [16, 1], strides = [1, 1]} : vector<16x3xf32> to vector<16x1xf32>
    %205 = vector.extract_strided_slice %202 {offsets = [0, 2], sizes = [16, 1], strides = [1, 1]} : vector<16x3xf32> to vector<16x1xf32>
    %206 = vector.broadcast %203 : vector<16x1xf32> to vector<16x128xf32>
    %207 = arith.addf %201, %206 : vector<16x128xf32>
    %cst_103 = arith.constant 0.000000e+00 : f32
    %208 = vector.broadcast %cst_103 : f32 to vector<16x128xf32>
    %209 = arith.maximumf %207, %208 : vector<16x128xf32>
    %210 = vector.broadcast %204 : vector<16x1xf32> to vector<16x128xf32>
    %211 = arith.mulf %209, %210 : vector<16x128xf32>
    %212 = vector.broadcast %205 : vector<16x1xf32> to vector<16x128xf32>
    %213 = arith.addf %211, %212 : vector<16x128xf32>
    %c0_104 = arith.constant 0 : index
    %c128_105 = arith.constant 128 : index
    %214 = vector.load %arg24[%c0_104, %c128_105] : memref<32x768xf32, #tpu.memory_space<vmem>>, vector<16x128xf32>
    tpu.vector_store %arg24[%c0_104, %c128_105], %213 {strides = array<i32>} : memref<32x768xf32, #tpu.memory_space<vmem>>, vector<16x128xf32>,
    %c0_106 = arith.constant 0 : index
    %c129_107 = arith.constant 129 : index
    %215 = vector.load %arg24[%c0_106, %c129_107] : memref<32x768xf32, #tpu.memory_space<vmem>>, vector<16x128xf32>
    %c0_108 = arith.constant 0 : index
    %c136_109 = arith.constant 136 : index
    %216 = vector.load %arg24[%c0_108, %c136_109] : memref<32x768xf32, #tpu.memory_space<vmem>>, vector<16x128xf32>
    %c0_110 = arith.constant 0 : index
    %c137_111 = arith.constant 137 : index
    %217 = vector.load %arg24[%c0_110, %c137_111] : memref<32x768xf32, #tpu.memory_space<vmem>>, vector<16x128xf32>
    %218 = arith.maximumf %213, %215 : vector<16x128xf32>
    %219 = arith.maximumf %216, %217 : vector<16x128xf32>
    %220 = arith.maximumf %218, %219 : vector<16x128xf32>
    %221 = arith.truncf %220 : vector<16x128xf32> to vector<16x128xbf16>
    %c0_112 = arith.constant 0 : index
    %c0_113 = arith.constant 0 : index
    %222 = vector.load %arg18[%c0_112, %c0_113] : memref<128x32xbf16, #tpu.memory_space<vmem>>, vector<128x32xbf16>
    %cst_114 = arith.constant dense<0.000000e+00> : vector<16x32xf32>
    %223 = tpu.matmul %221, %222, %cst_114 {dimension_numbers = #tpu.dot_dimension_numbers<[1], [0], [0], [1], [0, 0, 1, 1], [], []>} : vector<16x128xbf16>, vector<128x32xbf16>, vector<16x32xf32> -> vector<16x32xf32>
    %c0_115 = arith.constant 0 : index
    %c128_116 = arith.constant 128 : index
    %224 = vector.load %arg24[%c0_115, %c128_116] : memref<32x768xf32, #tpu.memory_space<vmem>>, vector<16x32xf32>
    tpu.vector_store %arg24[%c0_115, %c128_116], %223 {strides = array<i32>} : memref<32x768xf32, #tpu.memory_space<vmem>>, vector<16x32xf32>,
    %c0_117 = arith.constant 0 : index
    %c0_118 = arith.constant 0 : index
    %225 = vector.load %arg16[%c0_117, %c0_118] : memref<9x32xf32, #tpu.memory_space<vmem>>, vector<9x32xf32>
    %c0_119 = arith.constant 0 : index
    %c123 = arith.constant 123 : index
    %226 = vector.load %arg24[%c0_119, %c123] : memref<32x768xf32, #tpu.memory_space<vmem>>, vector<16x32xf32>
    %227 = vector.extract_strided_slice %225 {offsets = [0, 0], sizes = [1, 32], strides = [1, 1]} : vector<9x32xf32> to vector<1x32xf32>
    %228 = vector.broadcast %227 : vector<1x32xf32> to vector<16x32xf32>
    %229 = arith.mulf %226, %228 : vector<16x32xf32>
    %c0_120 = arith.constant 0 : index
    %c124 = arith.constant 124 : index
    %230 = vector.load %arg24[%c0_120, %c124] : memref<32x768xf32, #tpu.memory_space<vmem>>, vector<16x32xf32>
    %231 = vector.extract_strided_slice %225 {offsets = [1, 0], sizes = [1, 32], strides = [1, 1]} : vector<9x32xf32> to vector<1x32xf32>
    %232 = vector.broadcast %231 : vector<1x32xf32> to vector<16x32xf32>
    %233 = arith.mulf %230, %232 : vector<16x32xf32>
    %c0_121 = arith.constant 0 : index
    %c125 = arith.constant 125 : index
    %234 = vector.load %arg24[%c0_121, %c125] : memref<32x768xf32, #tpu.memory_space<vmem>>, vector<16x32xf32>
    %235 = vector.extract_strided_slice %225 {offsets = [2, 0], sizes = [1, 32], strides = [1, 1]} : vector<9x32xf32> to vector<1x32xf32>
    %236 = vector.broadcast %235 : vector<1x32xf32> to vector<16x32xf32>
    %237 = arith.mulf %234, %236 : vector<16x32xf32>
    %c0_122 = arith.constant 0 : index
    %c127_123 = arith.constant 127 : index
    %238 = vector.load %arg24[%c0_122, %c127_123] : memref<32x768xf32, #tpu.memory_space<vmem>>, vector<16x32xf32>
    %239 = vector.extract_strided_slice %225 {offsets = [3, 0], sizes = [1, 32], strides = [1, 1]} : vector<9x32xf32> to vector<1x32xf32>
    %240 = vector.broadcast %239 : vector<1x32xf32> to vector<16x32xf32>
    %241 = arith.mulf %238, %240 : vector<16x32xf32>
    %c0_124 = arith.constant 0 : index
    %c129_125 = arith.constant 129 : index
    %242 = vector.load %arg24[%c0_124, %c129_125] : memref<32x768xf32, #tpu.memory_space<vmem>>, vector<16x32xf32>
    %243 = vector.extract_strided_slice %225 {offsets = [5, 0], sizes = [1, 32], strides = [1, 1]} : vector<9x32xf32> to vector<1x32xf32>
    %244 = vector.broadcast %243 : vector<1x32xf32> to vector<16x32xf32>
    %245 = arith.mulf %242, %244 : vector<16x32xf32>
    %c0_126 = arith.constant 0 : index
    %c131 = arith.constant 131 : index
    %246 = vector.load %arg24[%c0_126, %c131] : memref<32x768xf32, #tpu.memory_space<vmem>>, vector<16x32xf32>
    %247 = vector.extract_strided_slice %225 {offsets = [6, 0], sizes = [1, 32], strides = [1, 1]} : vector<9x32xf32> to vector<1x32xf32>
    %248 = vector.broadcast %247 : vector<1x32xf32> to vector<16x32xf32>
    %249 = arith.mulf %246, %248 : vector<16x32xf32>
    %c0_127 = arith.constant 0 : index
    %c132 = arith.constant 132 : index
    %250 = vector.load %arg24[%c0_127, %c132] : memref<32x768xf32, #tpu.memory_space<vmem>>, vector<16x32xf32>
    %251 = vector.extract_strided_slice %225 {offsets = [7, 0], sizes = [1, 32], strides = [1, 1]} : vector<9x32xf32> to vector<1x32xf32>
    %252 = vector.broadcast %251 : vector<1x32xf32> to vector<16x32xf32>
    %253 = arith.mulf %250, %252 : vector<16x32xf32>
    %c0_128 = arith.constant 0 : index
    %c133 = arith.constant 133 : index
    %254 = vector.load %arg24[%c0_128, %c133] : memref<32x768xf32, #tpu.memory_space<vmem>>, vector<16x32xf32>
    %255 = vector.extract_strided_slice %225 {offsets = [8, 0], sizes = [1, 32], strides = [1, 1]} : vector<9x32xf32> to vector<1x32xf32>
    %256 = vector.broadcast %255 : vector<1x32xf32> to vector<16x32xf32>
    %257 = arith.mulf %254, %256 : vector<16x32xf32>
    %258 = tpu.concatenate %229, %233, %237, %241, %223, %245, %249, %253, %257 in 0 : vector<16x32xf32>, vector<16x32xf32>, vector<16x32xf32>, vector<16x32xf32>, vector<16x32xf32>, vector<16x32xf32>, vector<16x32xf32>, vector<16x32xf32>, vector<16x32xf32> -> vector<144x32xf32>
    %259 = arith.truncf %258 : vector<144x32xf32> to vector<144x32xbf16>
    %c0_129 = arith.constant 0 : index
    %c0_130 = arith.constant 0 : index
    %260 = vector.load %arg10[%c0_129, %c0_130] : memref<32x144xbf16, #tpu.memory_space<vmem>>, vector<32x144xbf16>
    %cst_131 = arith.constant dense<0.000000e+00> : vector<32x32xf32>
    %261 = tpu.matmul %260, %259, %cst_131 {dimension_numbers = #tpu.dot_dimension_numbers<[1], [0], [0], [1], [0, 0, 1, 1], [], []>} : vector<32x144xbf16>, vector<144x32xbf16>, vector<32x32xf32> -> vector<32x32xf32>
    %c0_132 = arith.constant 0 : index
    %c0_133 = arith.constant 0 : index
    %262 = vector.load %arg11[%c0_132, %c0_133] : memref<32x3xf32, #tpu.memory_space<vmem>>, vector<32x3xf32>
    %263 = vector.extract_strided_slice %262 {offsets = [0, 0], sizes = [32, 1], strides = [1, 1]} : vector<32x3xf32> to vector<32x1xf32>
    %264 = vector.extract_strided_slice %262 {offsets = [0, 1], sizes = [32, 1], strides = [1, 1]} : vector<32x3xf32> to vector<32x1xf32>
    %265 = vector.extract_strided_slice %262 {offsets = [0, 2], sizes = [32, 1], strides = [1, 1]} : vector<32x3xf32> to vector<32x1xf32>
    %266 = vector.broadcast %263 : vector<32x1xf32> to vector<32x32xf32>
    %267 = arith.addf %261, %266 : vector<32x32xf32>
    %cst_134 = arith.constant 0.000000e+00 : f32
    %268 = vector.broadcast %cst_134 : f32 to vector<32x32xf32>
    %269 = arith.maximumf %267, %268 : vector<32x32xf32>
    %270 = vector.broadcast %264 : vector<32x1xf32> to vector<32x32xf32>
    %271 = arith.mulf %269, %270 : vector<32x32xf32>
    %272 = vector.broadcast %265 : vector<32x1xf32> to vector<32x32xf32>
    %273 = arith.addf %271, %272 : vector<32x32xf32>
    %c0_135 = arith.constant 0 : index
    %c128_136 = arith.constant 128 : index
    %274 = vector.load %arg24[%c0_135, %c128_136] : memref<32x768xf32, #tpu.memory_space<vmem>>, vector<32x32xf32>
    tpu.vector_store %arg24[%c0_135, %c128_136], %273 {strides = array<i32>} : memref<32x768xf32, #tpu.memory_space<vmem>>, vector<32x32xf32>,
    %c0_137 = arith.constant 0 : index
    %c0_138 = arith.constant 0 : index
    %275 = vector.load %arg16[%c0_137, %c0_138] : memref<9x32xf32, #tpu.memory_space<vmem>>, vector<9x32xf32>
    %c0_139 = arith.constant 0 : index
    %c123_140 = arith.constant 123 : index
    %276 = vector.load %arg24[%c0_139, %c123_140] : memref<32x768xf32, #tpu.memory_space<vmem>>, vector<32x32xf32>
    %277 = vector.extract_strided_slice %275 {offsets = [0, 0], sizes = [1, 32], strides = [1, 1]} : vector<9x32xf32> to vector<1x32xf32>
    %278 = vector.broadcast %277 : vector<1x32xf32> to vector<32x32xf32>
    %279 = arith.mulf %276, %278 : vector<32x32xf32>
    %c0_141 = arith.constant 0 : index
    %c124_142 = arith.constant 124 : index
    %280 = vector.load %arg24[%c0_141, %c124_142] : memref<32x768xf32, #tpu.memory_space<vmem>>, vector<32x32xf32>
    %281 = vector.extract_strided_slice %275 {offsets = [1, 0], sizes = [1, 32], strides = [1, 1]} : vector<9x32xf32> to vector<1x32xf32>
    %282 = vector.broadcast %281 : vector<1x32xf32> to vector<32x32xf32>
    %283 = arith.mulf %280, %282 : vector<32x32xf32>
    %c0_143 = arith.constant 0 : index
    %c125_144 = arith.constant 125 : index
    %284 = vector.load %arg24[%c0_143, %c125_144] : memref<32x768xf32, #tpu.memory_space<vmem>>, vector<32x32xf32>
    %285 = vector.extract_strided_slice %275 {offsets = [2, 0], sizes = [1, 32], strides = [1, 1]} : vector<9x32xf32> to vector<1x32xf32>
    %286 = vector.broadcast %285 : vector<1x32xf32> to vector<32x32xf32>
    %287 = arith.mulf %284, %286 : vector<32x32xf32>
    %c0_145 = arith.constant 0 : index
    %c127_146 = arith.constant 127 : index
    %288 = vector.load %arg24[%c0_145, %c127_146] : memref<32x768xf32, #tpu.memory_space<vmem>>, vector<32x32xf32>
    %289 = vector.extract_strided_slice %275 {offsets = [3, 0], sizes = [1, 32], strides = [1, 1]} : vector<9x32xf32> to vector<1x32xf32>
    %290 = vector.broadcast %289 : vector<1x32xf32> to vector<32x32xf32>
    %291 = arith.mulf %288, %290 : vector<32x32xf32>
    %c0_147 = arith.constant 0 : index
    %c129_148 = arith.constant 129 : index
    %292 = vector.load %arg24[%c0_147, %c129_148] : memref<32x768xf32, #tpu.memory_space<vmem>>, vector<32x32xf32>
    %293 = vector.extract_strided_slice %275 {offsets = [5, 0], sizes = [1, 32], strides = [1, 1]} : vector<9x32xf32> to vector<1x32xf32>
    %294 = vector.broadcast %293 : vector<1x32xf32> to vector<32x32xf32>
    %295 = arith.mulf %292, %294 : vector<32x32xf32>
    %c0_149 = arith.constant 0 : index
    %c131_150 = arith.constant 131 : index
    %296 = vector.load %arg24[%c0_149, %c131_150] : memref<32x768xf32, #tpu.memory_space<vmem>>, vector<32x32xf32>
    %297 = vector.extract_strided_slice %275 {offsets = [6, 0], sizes = [1, 32], strides = [1, 1]} : vector<9x32xf32> to vector<1x32xf32>
    %298 = vector.broadcast %297 : vector<1x32xf32> to vector<32x32xf32>
    %299 = arith.mulf %296, %298 : vector<32x32xf32>
    %c0_151 = arith.constant 0 : index
    %c132_152 = arith.constant 132 : index
    %300 = vector.load %arg24[%c0_151, %c132_152] : memref<32x768xf32, #tpu.memory_space<vmem>>, vector<32x32xf32>
    %301 = vector.extract_strided_slice %275 {offsets = [7, 0], sizes = [1, 32], strides = [1, 1]} : vector<9x32xf32> to vector<1x32xf32>
    %302 = vector.broadcast %301 : vector<1x32xf32> to vector<32x32xf32>
    %303 = arith.mulf %300, %302 : vector<32x32xf32>
    %c0_153 = arith.constant 0 : index
    %c133_154 = arith.constant 133 : index
    %304 = vector.load %arg24[%c0_153, %c133_154] : memref<32x768xf32, #tpu.memory_space<vmem>>, vector<32x32xf32>
    %305 = vector.extract_strided_slice %275 {offsets = [8, 0], sizes = [1, 32], strides = [1, 1]} : vector<9x32xf32> to vector<1x32xf32>
    %306 = vector.broadcast %305 : vector<1x32xf32> to vector<32x32xf32>
    %307 = arith.mulf %304, %306 : vector<32x32xf32>
    %308 = tpu.concatenate %279, %283, %287, %291, %273, %295, %299, %303, %307 in 0 : vector<32x32xf32>, vector<32x32xf32>, vector<32x32xf32>, vector<32x32xf32>, vector<32x32xf32>, vector<32x32xf32>, vector<32x32xf32>, vector<32x32xf32>, vector<32x32xf32> -> vector<288x32xf32>
    %309 = arith.truncf %308 : vector<288x32xf32> to vector<288x32xbf16>
    %c0_155 = arith.constant 0 : index
    %c0_156 = arith.constant 0 : index
    %310 = vector.load %arg12[%c0_155, %c0_156] : memref<32x288xbf16, #tpu.memory_space<vmem>>, vector<32x288xbf16>
    %cst_157 = arith.constant dense<0.000000e+00> : vector<32x32xf32>
    %311 = tpu.matmul %310, %309, %cst_157 {dimension_numbers = #tpu.dot_dimension_numbers<[1], [0], [0], [1], [0, 0, 1, 1], [], []>} : vector<32x288xbf16>, vector<288x32xbf16>, vector<32x32xf32> -> vector<32x32xf32>
    %c0_158 = arith.constant 0 : index
    %c0_159 = arith.constant 0 : index
    %312 = vector.load %arg13[%c0_158, %c0_159] : memref<32x3xf32, #tpu.memory_space<vmem>>, vector<32x3xf32>
    %313 = vector.extract_strided_slice %312 {offsets = [0, 0], sizes = [32, 1], strides = [1, 1]} : vector<32x3xf32> to vector<32x1xf32>
    %314 = vector.extract_strided_slice %312 {offsets = [0, 1], sizes = [32, 1], strides = [1, 1]} : vector<32x3xf32> to vector<32x1xf32>
    %315 = vector.extract_strided_slice %312 {offsets = [0, 2], sizes = [32, 1], strides = [1, 1]} : vector<32x3xf32> to vector<32x1xf32>
    %316 = vector.broadcast %313 : vector<32x1xf32> to vector<32x32xf32>
    %317 = arith.addf %311, %316 : vector<32x32xf32>
    %cst_160 = arith.constant 0.000000e+00 : f32
    %318 = vector.broadcast %cst_160 : f32 to vector<32x32xf32>
    %319 = arith.maximumf %317, %318 : vector<32x32xf32>
    %320 = vector.broadcast %314 : vector<32x1xf32> to vector<32x32xf32>
    %321 = arith.mulf %319, %320 : vector<32x32xf32>
    %322 = vector.broadcast %315 : vector<32x1xf32> to vector<32x32xf32>
    %323 = arith.addf %321, %322 : vector<32x32xf32>
    %c0_161 = arith.constant 0 : index
    %c128_162 = arith.constant 128 : index
    %324 = vector.load %arg24[%c0_161, %c128_162] : memref<32x768xf32, #tpu.memory_space<vmem>>, vector<32x32xf32>
    tpu.vector_store %arg24[%c0_161, %c128_162], %323 {strides = array<i32>} : memref<32x768xf32, #tpu.memory_space<vmem>>, vector<32x32xf32>,
    %c0_163 = arith.constant 0 : index
    %c129_164 = arith.constant 129 : index
    %325 = vector.load %arg24[%c0_163, %c129_164] : memref<32x768xf32, #tpu.memory_space<vmem>>, vector<32x32xf32>
    %c0_165 = arith.constant 0 : index
    %c132_166 = arith.constant 132 : index
    %326 = vector.load %arg24[%c0_165, %c132_166] : memref<32x768xf32, #tpu.memory_space<vmem>>, vector<32x32xf32>
    %c0_167 = arith.constant 0 : index
    %c133_168 = arith.constant 133 : index
    %327 = vector.load %arg24[%c0_167, %c133_168] : memref<32x768xf32, #tpu.memory_space<vmem>>, vector<32x32xf32>
    %328 = arith.maximumf %323, %325 : vector<32x32xf32>
    %329 = arith.maximumf %326, %327 : vector<32x32xf32>
    %330 = arith.maximumf %328, %329 : vector<32x32xf32>
    %331 = arith.truncf %330 : vector<32x32xf32> to vector<32x32xbf16>
    %c0_169 = arith.constant 0 : index
    %c0_170 = arith.constant 0 : index
    %332 = vector.load %arg19[%c0_169, %c0_170] : memref<32x8xbf16, #tpu.memory_space<vmem>>, vector<32x8xbf16>
    %cst_171 = arith.constant dense<0.000000e+00> : vector<32x8xf32>
    %333 = tpu.matmul %331, %332, %cst_171 {dimension_numbers = #tpu.dot_dimension_numbers<[1], [0], [0], [1], [0, 0, 1, 1], [], []>} : vector<32x32xbf16>, vector<32x8xbf16>, vector<32x8xf32> -> vector<32x8xf32>
    %c0_172 = arith.constant 0 : index
    %c0_173 = arith.constant 0 : index
    %334 = vector.load %arg20[%c0_172, %c0_173] : memref<2x8xf32, #tpu.memory_space<vmem>>, vector<2x8xf32>
    %cst_174 = arith.constant dense<0.000000e+00> : vector<2x32xf32>
    %335 = tpu.matmul %334, %333, %cst_174 {dimension_numbers = #tpu.dot_dimension_numbers<[1], [1], [0], [0], [0, 0, 1, 0], [], []>} : vector<2x8xf32>, vector<32x8xf32>, vector<2x32xf32> -> vector<2x32xf32>
    %c0_175 = arith.constant 0 : index
    %c0_176 = arith.constant 0 : index
    %336 = vector.load %arg21[%c0_175, %c0_176] : memref<32x10xf32, #tpu.memory_space<vmem>>, vector<32x10xf32>
    %cst_177 = arith.constant dense<0.000000e+00> : vector<2x10xf32>
    %337 = tpu.matmul %335, %336, %cst_177 {dimension_numbers = #tpu.dot_dimension_numbers<[1], [0], [0], [1], [0, 0, 1, 1], [], []>} : vector<2x32xf32>, vector<32x10xf32>, vector<2x10xf32> -> vector<2x10xf32>
    %c0_178 = arith.constant 0 : index
    %c0_179 = arith.constant 0 : index
    %338 = vector.load %arg22[%c0_178, %c0_179] : memref<1x10xf32, #tpu.memory_space<vmem>>, vector<1x10xf32>
    %339 = vector.broadcast %338 : vector<1x10xf32> to vector<2x10xf32>
    %340 = arith.addf %337, %339 : vector<2x10xf32>
    %c0_180 = arith.constant 0 : index
    %c0_181 = arith.constant 0 : index
    %c0_182 = arith.constant 0 : index
    %341 = vector.load %arg23[%c0_180, %c0_181, %c0_182] : memref<1x2x10xf32, #tpu.memory_space<vmem>>, vector<1x2x10xf32>
    %342 = vector.shape_cast %341 : vector<1x2x10xf32> to vector<2x10xf32>
    %343 = vector.shape_cast %340 : vector<2x10xf32> to vector<1x2x10xf32>
    tpu.vector_store %arg23[%c0_180, %c0_181, %c0_182], %343 {strides = array<i32>} : memref<1x2x10xf32, #tpu.memory_space<vmem>>, vector<1x2x10xf32>,
    return
  }
  func.func @transform_0(%arg0: i32) -> (i32, i32, i32) {
    %c0_i32 = arith.constant 0 : i32
    %c0_i32_0 = arith.constant 0 : i32
    %c0_i32_1 = arith.constant 0 : i32
    return %arg0, %c0_i32, %c0_i32_0 : i32, i32, i32
  }
  func.func @transform_1(%arg0: i32) -> (i32, i32) {
    %c0_i32 = arith.constant 0 : i32
    %c0_i32_0 = arith.constant 0 : i32
    %c0_i32_1 = arith.constant 0 : i32
    return %c0_i32, %c0_i32_0 : i32, i32
  }
  func.func @transform_2(%arg0: i32) -> (i32, i32) {
    %c0_i32 = arith.constant 0 : i32
    %c0_i32_0 = arith.constant 0 : i32
    %c0_i32_1 = arith.constant 0 : i32
    return %c0_i32, %c0_i32_0 : i32, i32
  }
  func.func @transform_3(%arg0: i32) -> (i32, i32) {
    %c0_i32 = arith.constant 0 : i32
    %c0_i32_0 = arith.constant 0 : i32
    %c0_i32_1 = arith.constant 0 : i32
    return %c0_i32, %c0_i32_0 : i32, i32
  }
  func.func @transform_4(%arg0: i32) -> (i32, i32) {
    %c0_i32 = arith.constant 0 : i32
    %c0_i32_0 = arith.constant 0 : i32
    %c0_i32_1 = arith.constant 0 : i32
    return %c0_i32, %c0_i32_0 : i32, i32
  }
  func.func @transform_5(%arg0: i32) -> (i32, i32) {
    %c0_i32 = arith.constant 0 : i32
    %c0_i32_0 = arith.constant 0 : i32
    %c0_i32_1 = arith.constant 0 : i32
    return %c0_i32, %c0_i32_0 : i32, i32
  }
  func.func @transform_6(%arg0: i32) -> (i32, i32) {
    %c0_i32 = arith.constant 0 : i32
    %c0_i32_0 = arith.constant 0 : i32
    %c0_i32_1 = arith.constant 0 : i32
    return %c0_i32, %c0_i32_0 : i32, i32
  }
  func.func @transform_7(%arg0: i32) -> (i32, i32) {
    %c0_i32 = arith.constant 0 : i32
    %c0_i32_0 = arith.constant 0 : i32
    %c0_i32_1 = arith.constant 0 : i32
    return %c0_i32, %c0_i32_0 : i32, i32
  }
  func.func @transform_8(%arg0: i32) -> (i32, i32) {
    %c0_i32 = arith.constant 0 : i32
    %c0_i32_0 = arith.constant 0 : i32
    %c0_i32_1 = arith.constant 0 : i32
    return %c0_i32, %c0_i32_0 : i32, i32
  }
  func.func @transform_9(%arg0: i32) -> (i32, i32) {
    %c0_i32 = arith.constant 0 : i32
    %c0_i32_0 = arith.constant 0 : i32
    %c0_i32_1 = arith.constant 0 : i32
    return %c0_i32, %c0_i32_0 : i32, i32
  }
  func.func @transform_10(%arg0: i32) -> (i32, i32) {
    %c0_i32 = arith.constant 0 : i32
    %c0_i32_0 = arith.constant 0 : i32
    %c0_i32_1 = arith.constant 0 : i32
    return %c0_i32, %c0_i32_0 : i32, i32
  }
  func.func @transform_11(%arg0: i32) -> (i32, i32) {
    %c0_i32 = arith.constant 0 : i32
    %c0_i32_0 = arith.constant 0 : i32
    %c0_i32_1 = arith.constant 0 : i32
    return %c0_i32, %c0_i32_0 : i32, i32
  }
  func.func @transform_12(%arg0: i32) -> (i32, i32) {
    %c0_i32 = arith.constant 0 : i32
    %c0_i32_0 = arith.constant 0 : i32
    %c0_i32_1 = arith.constant 0 : i32
    return %c0_i32, %c0_i32_0 : i32, i32
  }
  func.func @transform_13(%arg0: i32) -> (i32, i32) {
    %c0_i32 = arith.constant 0 : i32
    %c0_i32_0 = arith.constant 0 : i32
    %c0_i32_1 = arith.constant 0 : i32
    return %c0_i32, %c0_i32_0 : i32, i32
  }
  func.func @transform_14(%arg0: i32) -> (i32, i32) {
    %c0_i32 = arith.constant 0 : i32
    %c0_i32_0 = arith.constant 0 : i32
    %c0_i32_1 = arith.constant 0 : i32
    return %c0_i32, %c0_i32_0 : i32, i32
  }
  func.func @transform_15(%arg0: i32) -> (i32, i32) {
    %c0_i32 = arith.constant 0 : i32
    %c0_i32_0 = arith.constant 0 : i32
    %c0_i32_1 = arith.constant 0 : i32
    return %c0_i32, %c0_i32_0 : i32, i32
  }
  func.func @transform_16(%arg0: i32) -> (i32, i32) {
    %c0_i32 = arith.constant 0 : i32
    %c0_i32_0 = arith.constant 0 : i32
    %c0_i32_1 = arith.constant 0 : i32
    return %c0_i32, %c0_i32_0 : i32, i32
  }
  func.func @transform_17(%arg0: i32) -> (i32, i32) {
    %c0_i32 = arith.constant 0 : i32
    %c0_i32_0 = arith.constant 0 : i32
    %c0_i32_1 = arith.constant 0 : i32
    return %c0_i32, %c0_i32_0 : i32, i32
  }
  func.func @transform_18(%arg0: i32) -> (i32, i32) {
    %c0_i32 = arith.constant 0 : i32
    %c0_i32_0 = arith.constant 0 : i32
    %c0_i32_1 = arith.constant 0 : i32
    return %c0_i32, %c0_i32_0 : i32, i32
  }
  func.func @transform_19(%arg0: i32) -> (i32, i32) {
    %c0_i32 = arith.constant 0 : i32
    %c0_i32_0 = arith.constant 0 : i32
    %c0_i32_1 = arith.constant 0 : i32
    return %c0_i32, %c0_i32_0 : i32, i32
  }
  func.func @transform_20(%arg0: i32) -> (i32, i32) {
    %c0_i32 = arith.constant 0 : i32
    %c0_i32_0 = arith.constant 0 : i32
    %c0_i32_1 = arith.constant 0 : i32
    return %c0_i32, %c0_i32_0 : i32, i32
  }
  func.func @transform_21(%arg0: i32) -> (i32, i32) {
    %c0_i32 = arith.constant 0 : i32
    %c0_i32_0 = arith.constant 0 : i32
    %c0_i32_1 = arith.constant 0 : i32
    return %c0_i32, %c0_i32_0 : i32, i32
  }
  func.func @transform_22(%arg0: i32) -> (i32, i32, i32) {
    %c0_i32 = arith.constant 0 : i32
    %c0_i32_0 = arith.constant 0 : i32
    %c0_i32_1 = arith.constant 0 : i32
    return %arg0, %c0_i32, %c0_i32_0 : i32, i32, i32
  }
}

</mosaic_0001>

<llo_original>
// kernel: enhanced_model_forward.1
$region0: #{enhanced_model_forward.1}
  #allocation0 [shape = 'u32[]', space=smem, size = 0x4, offset = 0x4, fixed_abs, tag = 'smem constant byte address 0x4 - core index']
  #allocation1 [shape = 'u32[144,128]{1,0:T(1,128)}', space=vmem, size = 0x12000, scoped, tag = 'internal scratch']
  #allocation2 [shape = 'f32[32,768]{1,0:T(8,128)}', space=vmem, size = 0x18000, scoped, tag = 'scratch operand']
  %s0 = inlined_call_operand.vmem [shape: f32[2,8,512], index: 0, kind: input, shape index: {}]
  %s1 = inlined_call_operand.vmem [shape: bf16[8,72], index: 1, kind: input, shape index: {}]
  %s2 = inlined_call_operand.vmem [shape: f32[8,3], index: 2, kind: input, shape index: {}]
  %s3 = inlined_call_operand.vmem [shape: bf16[8,72], index: 3, kind: input, shape index: {}]
  %s4 = inlined_call_operand.vmem [shape: f32[8,3], index: 4, kind: input, shape index: {}]
  %s5 = inlined_call_operand.vmem [shape: bf16[16,72], index: 5, kind: input, shape index: {}]
  %s6 = inlined_call_operand.vmem [shape: f32[16,3], index: 6, kind: input, shape index: {}]
  %s7 = inlined_call_operand.vmem [shape: bf16[16,144], index: 7, kind: input, shape index: {}]
  %s8 = inlined_call_operand.vmem [shape: f32[16,3], index: 8, kind: input, shape index: {}]
  %s9 = inlined_call_operand.vmem [shape: bf16[32,144], index: 9, kind: input, shape index: {}]
  %s10 = inlined_call_operand.vmem [shape: f32[32,3], index: 10, kind: input, shape index: {}]
  %s11 = inlined_call_operand.vmem [shape: bf16[32,288], index: 11, kind: input, shape index: {}]
  %s12 = inlined_call_operand.vmem [shape: f32[32,3], index: 12, kind: input, shape index: {}]
  %s13 = inlined_call_operand.vmem [shape: f32[9,512], index: 13, kind: input, shape index: {}]
  %s14 = inlined_call_operand.vmem [shape: f32[9,128], index: 14, kind: input, shape index: {}]
  %s15 = inlined_call_operand.vmem [shape: f32[9,32], index: 15, kind: input, shape index: {}]
  %s16 = inlined_call_operand.vmem [shape: bf16[512,128], index: 16, kind: input, shape index: {}]
  %s17 = inlined_call_operand.vmem [shape: bf16[128,32], index: 17, kind: input, shape index: {}]
  %s18 = inlined_call_operand.vmem [shape: bf16[32,8], index: 18, kind: input, shape index: {}]
  %s19 = inlined_call_operand.vmem [shape: f32[2,8], index: 19, kind: input, shape index: {}]
  %s20 = inlined_call_operand.vmem [shape: f32[32,10], index: 20, kind: input, shape index: {}]
  %s21 = inlined_call_operand.vmem [shape: f32[1,10], index: 21, kind: input, shape index: {}]
  %s22 = inlined_call_operand.hbm [shape: f32[2,2,10], index: 22, kind: output, shape index: {}]
  %s23 = sld [smem:[#allocation0]]
  $region121: #{enhanced_model_forward.1} parent=0
    _
  %s25 = ssub.s32 1, %s23
  %s26 = scalar_select 0, %s25, %s23
  $region1: #{enhanced_model_forward.1} parent=0
    #allocation3 [shape = 'u8[2048]{0}', space=vmem, size = 0x800, scoped, tag = 'output window, operand 0']
    #allocation4 [shape = 's32[2]{0}', space=sflag, size = 0x8, scoped, tag = 'scoped memory for enhanced_model_forward.1']
    %27 = vsyncpa [#allocation4], 0
    %s28 = scalar_lea.sflag [#allocation4], 1
    %29 = vsyncpa %s28, 0
    loop: start=0, step=1, limit=4
    $region2: #{enhanced_model_forward.1} parent=1 // loop_pre_header
      _
    $region3: #{enhanced_model_forward.1} parent=1 // loop_header
      %s31 = sphi 0, %s35
      %p32 = scmp.ge.s32.totalorder %s31, 4
      %s41 = sphi 0, %s43
      %s44 = sphi 0, %s41
      %s45 = sphi 0, %s44
      %s61 = sphi 0, %s45
      %s65 = sphi 0, %s65
      %s67 = sphi 0, %s65
      %s68 = sphi 0, %s67
      %s82 = sphi 0, %s68
      %s86 = sphi 0, %s86
      %s88 = sphi 0, %s86
      %s89 = sphi 0, %s88
      %s103 = sphi 0, %s89
      %s107 = sphi 0, %s107
      %s109 = sphi 0, %s107
      %s110 = sphi 0, %s109
      %s124 = sphi 0, %s110
      %s128 = sphi 0, %s128
      %s130 = sphi 0, %s128
      %s131 = sphi 0, %s130
      %s145 = sphi 0, %s131
      %s149 = sphi 0, %s149
      %s151 = sphi 0, %s149
      %s152 = sphi 0, %s151
      %s166 = sphi 0, %s152
      %s170 = sphi 0, %s170
      %s172 = sphi 0, %s170
      %s173 = sphi 0, %s172
      %s187 = sphi 0, %s173
      %s191 = sphi 0, %s191
      %s193 = sphi 0, %s191
      %s194 = sphi 0, %s193
      %s208 = sphi 0, %s194
      %s212 = sphi 0, %s212
      %s214 = sphi 0, %s212
      %s215 = sphi 0, %s214
      %s229 = sphi 0, %s215
      %s233 = sphi 0, %s233
      %s235 = sphi 0, %s233
      %s236 = sphi 0, %s235
      %s250 = sphi 0, %s236
      %s254 = sphi 0, %s254
      %s256 = sphi 0, %s254
      %s257 = sphi 0, %s256
      %s271 = sphi 0, %s257
      %s275 = sphi 0, %s275
      %s277 = sphi 0, %s275
      %s278 = sphi 0, %s277
      %s292 = sphi 0, %s278
      %s296 = sphi 0, %s296
      %s298 = sphi 0, %s296
      %s299 = sphi 0, %s298
      %s313 = sphi 0, %s299
      %s317 = sphi 0, %s317
      %s319 = sphi 0, %s317
      %s320 = sphi 0, %s319
      %s334 = sphi 0, %s320
      %s338 = sphi 0, %s338
      %s340 = sphi 0, %s338
      %s341 = sphi 0, %s340
      %s355 = sphi 0, %s341
      %s359 = sphi 0, %s359
      %s361 = sphi 0, %s359
      %s362 = sphi 0, %s361
      %s376 = sphi 0, %s362
      %s380 = sphi 0, %s380
      %s382 = sphi 0, %s380
      %s383 = sphi 0, %s382
      %s397 = sphi 0, %s383
      %s401 = sphi 0, %s401
      %s403 = sphi 0, %s401
      %s404 = sphi 0, %s403
      %s418 = sphi 0, %s404
      %s422 = sphi 0, %s422
      %s424 = sphi 0, %s422
      %s425 = sphi 0, %s424
      %s439 = sphi 0, %s425
      %s443 = sphi 0, %s443
      %s445 = sphi 0, %s443
      %s446 = sphi 0, %s445
      %s460 = sphi 0, %s446
      %s464 = sphi 0, %s464
      %s466 = sphi 0, %s464
      %s467 = sphi 0, %s466
      %s481 = sphi 0, %s467
      %s485 = sphi 0, %s485
      %s487 = sphi 0, %s485
      %s488 = sphi 0, %s487
      %s502 = sphi 0, %s488
      %s508 = sphi 0, %s510
      %s511 = sphi 0, %s508
      %s512 = sphi 0, %s511
      %s528 = sphi 0, %s512
    $region4: #{enhanced_model_forward.1} parent=1 // loop_header_branch
      %34 = sbr.rel (%p32) target = $region8
    $region5: #{enhanced_model_forward.1} parent=1 // loop_body
      %s36 = ssub.s32 %s31, 1
      %s37 = ssub.s32 %s31, 2
      %s38 = sadd.s32 %s31, 1
      %s39 = ssub.s32 %s31, %s38
      %p40 = scmp.eq.s32.totalorder %s39, 0
      %s42 = sadd.s32 %s41, 1
      %s43 = scalar_select %p40, %s41, %s42
      %p46 = pneg %p40
      %p47 = scmp.eq.s32.totalorder %s31, 1
      %p48 = por %p46, %p47
      %p49 = scmp.ne.s32.totalorder %s41, %s44
      %p50 = scmp.eq.s32.totalorder %s31, 0
      %p51 = por %p49, %p50
      %p52 = scmp.ne.s32.totalorder %s41, %s44
      %p53 = scmp.eq.s32.totalorder %s36, 1
      %p54 = por %p52, %p53
      %p55 = scmp.ne.s32.totalorder %s44, %s45
      %p56 = scmp.eq.s32.totalorder %s36, 0
      %p57 = por %p55, %p56
      %p58 = scmp.ne.s32.totalorder %s44, %s45
      %p59 = scmp.eq.s32.totalorder %s37, 1
      %p60 = por %p58, %p59
      %p62 = scmp.ne.s32.totalorder %s45, %s61
      %p63 = scmp.eq.s32.totalorder %s37, 0
      %p64 = por %p62, %p63
      %s66 = sadd.s32 %s65, 1
      %p69 = scmp.eq.s32.totalorder %s31, 1
      %p70 = scmp.ne.s32.totalorder %s65, %s67
      %p71 = scmp.eq.s32.totalorder %s31, 0
      %p72 = por %p70, %p71
      %p73 = scmp.ne.s32.totalorder %s65, %s67
      %p74 = scmp.eq.s32.totalorder %s36, 1
      %p75 = por %p73, %p74
      %p76 = scmp.ne.s32.totalorder %s67, %s68
      %p77 = scmp.eq.s32.totalorder %s36, 0
      %p78 = por %p76, %p77
      %p79 = scmp.ne.s32.totalorder %s67, %s68
      %p80 = scmp.eq.s32.totalorder %s37, 1
      %p81 = por %p79, %p80
      %p83 = scmp.ne.s32.totalorder %s68, %s82
      %p84 = scmp.eq.s32.totalorder %s37, 0
      %p85 = por %p83, %p84
      %s87 = sadd.s32 %s86, 1
      %p90 = scmp.eq.s32.totalorder %s31, 1
      %p91 = scmp.ne.s32.totalorder %s86, %s88
      %p92 = scmp.eq.s32.totalorder %s31, 0
      %p93 = por %p91, %p92
      %p94 = scmp.ne.s32.totalorder %s86, %s88
      %p95 = scmp.eq.s32.totalorder %s36, 1
      %p96 = por %p94, %p95
      %p97 = scmp.ne.s32.totalorder %s88, %s89
      %p98 = scmp.eq.s32.totalorder %s36, 0
      %p99 = por %p97, %p98
      %p100 = scmp.ne.s32.totalorder %s88, %s89
      %p101 = scmp.eq.s32.totalorder %s37, 1
      %p102 = por %p100, %p101
      %p104 = scmp.ne.s32.totalorder %s89, %s103
      %p105 = scmp.eq.s32.totalorder %s37, 0
      %p106 = por %p104, %p105
      %s108 = sadd.s32 %s107, 1
      %p111 = scmp.eq.s32.totalorder %s31, 1
      %p112 = scmp.ne.s32.totalorder %s107, %s109
      %p113 = scmp.eq.s32.totalorder %s31, 0
      %p114 = por %p112, %p113
      %p115 = scmp.ne.s32.totalorder %s107, %s109
      %p116 = scmp.eq.s32.totalorder %s36, 1
      %p117 = por %p115, %p116
      %p118 = scmp.ne.s32.totalorder %s109, %s110
      %p119 = scmp.eq.s32.totalorder %s36, 0
      %p120 = por %p118, %p119
      %p121 = scmp.ne.s32.totalorder %s109, %s110
      %p122 = scmp.eq.s32.totalorder %s37, 1
      %p123 = por %p121, %p122
      %p125 = scmp.ne.s32.totalorder %s110, %s124
      %p126 = scmp.eq.s32.totalorder %s37, 0
      %p127 = por %p125, %p126
      %s129 = sadd.s32 %s128, 1
      %p132 = scmp.eq.s32.totalorder %s31, 1
      %p133 = scmp.ne.s32.totalorder %s128, %s130
      %p134 = scmp.eq.s32.totalorder %s31, 0
      %p135 = por %p133, %p134
      %p136 = scmp.ne.s32.totalorder %s128, %s130
      %p137 = scmp.eq.s32.totalorder %s36, 1
      %p138 = por %p136, %p137
      %p139 = scmp.ne.s32.totalorder %s130, %s131
      %p140 = scmp.eq.s32.totalorder %s36, 0
      %p141 = por %p139, %p140
      %p142 = scmp.ne.s32.totalorder %s130, %s131
      %p143 = scmp.eq.s32.totalorder %s37, 1
      %p144 = por %p142, %p143
      %p146 = scmp.ne.s32.totalorder %s131, %s145
      %p147 = scmp.eq.s32.totalorder %s37, 0
      %p148 = por %p146, %p147
      %s150 = sadd.s32 %s149, 1
      %p153 = scmp.eq.s32.totalorder %s31, 1
      %p154 = scmp.ne.s32.totalorder %s149, %s151
      %p155 = scmp.eq.s32.totalorder %s31, 0
      %p156 = por %p154, %p155
      %p157 = scmp.ne.s32.totalorder %s149, %s151
      %p158 = scmp.eq.s32.totalorder %s36, 1
      %p159 = por %p157, %p158
      %p160 = scmp.ne.s32.totalorder %s151, %s152
      %p161 = scmp.eq.s32.totalorder %s36, 0
      %p162 = por %p160, %p161
      %p163 = scmp.ne.s32.totalorder %s151, %s152
      %p164 = scmp.eq.s32.totalorder %s37, 1
      %p165 = por %p163, %p164
      %p167 = scmp.ne.s32.totalorder %s152, %s166
      %p168 = scmp.eq.s32.totalorder %s37, 0
      %p169 = por %p167, %p168
      %s171 = sadd.s32 %s170, 1
      %p174 = scmp.eq.s32.totalorder %s31, 1
      %p175 = scmp.ne.s32.totalorder %s170, %s172
      %p176 = scmp.eq.s32.totalorder %s31, 0
      %p177 = por %p175, %p176
      %p178 = scmp.ne.s32.totalorder %s170, %s172
      %p179 = scmp.eq.s32.totalorder %s36, 1
      %p180 = por %p178, %p179
      %p181 = scmp.ne.s32.totalorder %s172, %s173
      %p182 = scmp.eq.s32.totalorder %s36, 0
      %p183 = por %p181, %p182
      %p184 = scmp.ne.s32.totalorder %s172, %s173
      %p185 = scmp.eq.s32.totalorder %s37, 1
      %p186 = por %p184, %p185
      %p188 = scmp.ne.s32.totalorder %s173, %s187
      %p189 = scmp.eq.s32.totalorder %s37, 0
      %p190 = por %p188, %p189
      %s192 = sadd.s32 %s191, 1
      %p195 = scmp.eq.s32.totalorder %s31, 1
      %p196 = scmp.ne.s32.totalorder %s191, %s193
      %p197 = scmp.eq.s32.totalorder %s31, 0
      %p198 = por %p196, %p197
      %p199 = scmp.ne.s32.totalorder %s191, %s193
      %p200 = scmp.eq.s32.totalorder %s36, 1
      %p201 = por %p199, %p200
      %p202 = scmp.ne.s32.totalorder %s193, %s194
      %p203 = scmp.eq.s32.totalorder %s36, 0
      %p204 = por %p202, %p203
      %p205 = scmp.ne.s32.totalorder %s193, %s194
      %p206 = scmp.eq.s32.totalorder %s37, 1
      %p207 = por %p205, %p206
      %p209 = scmp.ne.s32.totalorder %s194, %s208
      %p210 = scmp.eq.s32.totalorder %s37, 0
      %p211 = por %p209, %p210
      %s213 = sadd.s32 %s212, 1
      %p216 = scmp.eq.s32.totalorder %s31, 1
      %p217 = scmp.ne.s32.totalorder %s212, %s214
      %p218 = scmp.eq.s32.totalorder %s31, 0
      %p219 = por %p217, %p218
      %p220 = scmp.ne.s32.totalorder %s212, %s214
      %p221 = scmp.eq.s32.totalorder %s36, 1
      %p222 = por %p220, %p221
      %p223 = scmp.ne.s32.totalorder %s214, %s215
      %p224 = scmp.eq.s32.totalorder %s36, 0
      %p225 = por %p223, %p224
      %p226 = scmp.ne.s32.totalorder %s214, %s215
      %p227 = scmp.eq.s32.totalorder %s37, 1
      %p228 = por %p226, %p227
      %p230 = scmp.ne.s32.totalorder %s215, %s229
      %p231 = scmp.eq.s32.totalorder %s37, 0
      %p232 = por %p230, %p231
      %s234 = sadd.s32 %s233, 1
      %p237 = scmp.eq.s32.totalorder %s31, 1
      %p238 = scmp.ne.s32.totalorder %s233, %s235
      %p239 = scmp.eq.s32.totalorder %s31, 0
      %p240 = por %p238, %p239
      %p241 = scmp.ne.s32.totalorder %s233, %s235
      %p242 = scmp.eq.s32.totalorder %s36, 1
      %p243 = por %p241, %p242
      %p244 = scmp.ne.s32.totalorder %s235, %s236
      %p245 = scmp.eq.s32.totalorder %s36, 0
      %p246 = por %p244, %p245
      %p247 = scmp.ne.s32.totalorder %s235, %s236
      %p248 = scmp.eq.s32.totalorder %s37, 1
      %p249 = por %p247, %p248
      %p251 = scmp.ne.s32.totalorder %s236, %s250
      %p252 = scmp.eq.s32.totalorder %s37, 0
      %p253 = por %p251, %p252
      %s255 = sadd.s32 %s254, 1
      %p258 = scmp.eq.s32.totalorder %s31, 1
      %p259 = scmp.ne.s32.totalorder %s254, %s256
      %p260 = scmp.eq.s32.totalorder %s31, 0
      %p261 = por %p259, %p260
      %p262 = scmp.ne.s32.totalorder %s254, %s256
      %p263 = scmp.eq.s32.totalorder %s36, 1
      %p264 = por %p262, %p263
      %p265 = scmp.ne.s32.totalorder %s256, %s257
      %p266 = scmp.eq.s32.totalorder %s36, 0
      %p267 = por %p265, %p266
      %p268 = scmp.ne.s32.totalorder %s256, %s257
      %p269 = scmp.eq.s32.totalorder %s37, 1
      %p270 = por %p268, %p269
      %p272 = scmp.ne.s32.totalorder %s257, %s271
      %p273 = scmp.eq.s32.totalorder %s37, 0
      %p274 = por %p272, %p273
      %s276 = sadd.s32 %s275, 1
      %p279 = scmp.eq.s32.totalorder %s31, 1
      %p280 = scmp.ne.s32.totalorder %s275, %s277
      %p281 = scmp.eq.s32.totalorder %s31, 0
      %p282 = por %p280, %p281
      %p283 = scmp.ne.s32.totalorder %s275, %s277
      %p284 = scmp.eq.s32.totalorder %s36, 1
      %p285 = por %p283, %p284
      %p286 = scmp.ne.s32.totalorder %s277, %s278
      %p287 = scmp.eq.s32.totalorder %s36, 0
      %p288 = por %p286, %p287
      %p289 = scmp.ne.s32.totalorder %s277, %s278
      %p290 = scmp.eq.s32.totalorder %s37, 1
      %p291 = por %p289, %p290
      %p293 = scmp.ne.s32.totalorder %s278, %s292
      %p294 = scmp.eq.s32.totalorder %s37, 0
      %p295 = por %p293, %p294
      %s297 = sadd.s32 %s296, 1
      %p300 = scmp.eq.s32.totalorder %s31, 1
      %p301 = scmp.ne.s32.totalorder %s296, %s298
      %p302 = scmp.eq.s32.totalorder %s31, 0
      %p303 = por %p301, %p302
      %p304 = scmp.ne.s32.totalorder %s296, %s298
      %p305 = scmp.eq.s32.totalorder %s36, 1
      %p306 = por %p304, %p305
      %p307 = scmp.ne.s32.totalorder %s298, %s299
      %p308 = scmp.eq.s32.totalorder %s36, 0
      %p309 = por %p307, %p308
      %p310 = scmp.ne.s32.totalorder %s298, %s299
      %p311 = scmp.eq.s32.totalorder %s37, 1
      %p312 = por %p310, %p311
      %p314 = scmp.ne.s32.totalorder %s299, %s313
      %p315 = scmp.eq.s32.totalorder %s37, 0
      %p316 = por %p314, %p315
      %s318 = sadd.s32 %s317, 1
      %p321 = scmp.eq.s32.totalorder %s31, 1
      %p322 = scmp.ne.s32.totalorder %s317, %s319
      %p323 = scmp.eq.s32.totalorder %s31, 0
      %p324 = por %p322, %p323
      %p325 = scmp.ne.s32.totalorder %s317, %s319
      %p326 = scmp.eq.s32.totalorder %s36, 1
      %p327 = por %p325, %p326
      %p328 = scmp.ne.s32.totalorder %s319, %s320
      %p329 = scmp.eq.s32.totalorder %s36, 0
      %p330 = por %p328, %p329
      %p331 = scmp.ne.s32.totalorder %s319, %s320
      %p332 = scmp.eq.s32.totalorder %s37, 1
      %p333 = por %p331, %p332
      %p335 = scmp.ne.s32.totalorder %s320, %s334
      %p336 = scmp.eq.s32.totalorder %s37, 0
      %p337 = por %p335, %p336
      %s339 = sadd.s32 %s338, 1
      %p342 = scmp.eq.s32.totalorder %s31, 1
      %p343 = scmp.ne.s32.totalorder %s338, %s340
      %p344 = scmp.eq.s32.totalorder %s31, 0
      %p345 = por %p343, %p344
      %p346 = scmp.ne.s32.totalorder %s338, %s340
      %p347 = scmp.eq.s32.totalorder %s36, 1
      %p348 = por %p346, %p347
      %p349 = scmp.ne.s32.totalorder %s340, %s341
      %p350 = scmp.eq.s32.totalorder %s36, 0
      %p351 = por %p349, %p350
      %p352 = scmp.ne.s32.totalorder %s340, %s341
      %p353 = scmp.eq.s32.totalorder %s37, 1
      %p354 = por %p352, %p353
      %p356 = scmp.ne.s32.totalorder %s341, %s355
      %p357 = scmp.eq.s32.totalorder %s37, 0
      %p358 = por %p356, %p357
      %s360 = sadd.s32 %s359, 1
      %p363 = scmp.eq.s32.totalorder %s31, 1
      %p364 = scmp.ne.s32.totalorder %s359, %s361
      %p365 = scmp.eq.s32.totalorder %s31, 0
      %p366 = por %p364, %p365
      %p367 = scmp.ne.s32.totalorder %s359, %s361
      %p368 = scmp.eq.s32.totalorder %s36, 1
      %p369 = por %p367, %p368
      %p370 = scmp.ne.s32.totalorder %s361, %s362
      %p371 = scmp.eq.s32.totalorder %s36, 0
      %p372 = por %p370, %p371
      %p373 = scmp.ne.s32.totalorder %s361, %s362
      %p374 = scmp.eq.s32.totalorder %s37, 1
      %p375 = por %p373, %p374
      %p377 = scmp.ne.s32.totalorder %s362, %s376
      %p378 = scmp.eq.s32.totalorder %s37, 0
      %p379 = por %p377, %p378
      %s381 = sadd.s32 %s380, 1
      %p384 = scmp.eq.s32.totalorder %s31, 1
      %p385 = scmp.ne.s32.totalorder %s380, %s382
      %p386 = scmp.eq.s32.totalorder %s31, 0
      %p387 = por %p385, %p386
      %p388 = scmp.ne.s32.totalorder %s380, %s382
      %p389 = scmp.eq.s32.totalorder %s36, 1
      %p390 = por %p388, %p389
      %p391 = scmp.ne.s32.totalorder %s382, %s383
      %p392 = scmp.eq.s32.totalorder %s36, 0
      %p393 = por %p391, %p392
      %p394 = scmp.ne.s32.totalorder %s382, %s383
      %p395 = scmp.eq.s32.totalorder %s37, 1
      %p396 = por %p394, %p395
      %p398 = scmp.ne.s32.totalorder %s383, %s397
      %p399 = scmp.eq.s32.totalorder %s37, 0
      %p400 = por %p398, %p399
      %s402 = sadd.s32 %s401, 1
      %p405 = scmp.eq.s32.totalorder %s31, 1
      %p406 = scmp.ne.s32.totalorder %s401, %s403
      %p407 = scmp.eq.s32.totalorder %s31, 0
      %p408 = por %p406, %p407
      %p409 = scmp.ne.s32.totalorder %s401, %s403
      %p410 = scmp.eq.s32.totalorder %s36, 1
      %p411 = por %p409, %p410
      %p412 = scmp.ne.s32.totalorder %s403, %s404
      %p413 = scmp.eq.s32.totalorder %s36, 0
      %p414 = por %p412, %p413
      %p415 = scmp.ne.s32.totalorder %s403, %s404
      %p416 = scmp.eq.s32.totalorder %s37, 1
      %p417 = por %p415, %p416
      %p419 = scmp.ne.s32.totalorder %s404, %s418
      %p420 = scmp.eq.s32.totalorder %s37, 0
      %p421 = por %p419, %p420
      %s423 = sadd.s32 %s422, 1
      %p426 = scmp.eq.s32.totalorder %s31, 1
      %p427 = scmp.ne.s32.totalorder %s422, %s424
      %p428 = scmp.eq.s32.totalorder %s31, 0
      %p429 = por %p427, %p428
      %p430 = scmp.ne.s32.totalorder %s422, %s424
      %p431 = scmp.eq.s32.totalorder %s36, 1
      %p432 = por %p430, %p431
      %p433 = scmp.ne.s32.totalorder %s424, %s425
      %p434 = scmp.eq.s32.totalorder %s36, 0
      %p435 = por %p433, %p434
      %p436 = scmp.ne.s32.totalorder %s424, %s425
      %p437 = scmp.eq.s32.totalorder %s37, 1
      %p438 = por %p436, %p437
      %p440 = scmp.ne.s32.totalorder %s425, %s439
      %p441 = scmp.eq.s32.totalorder %s37, 0
      %p442 = por %p440, %p441
      %s444 = sadd.s32 %s443, 1
      %p447 = scmp.eq.s32.totalorder %s31, 1
      %p448 = scmp.ne.s32.totalorder %s443, %s445
      %p449 = scmp.eq.s32.totalorder %s31, 0
      %p450 = por %p448, %p449
      %p451 = scmp.ne.s32.totalorder %s443, %s445
      %p452 = scmp.eq.s32.totalorder %s36, 1
      %p453 = por %p451, %p452
      %p454 = scmp.ne.s32.totalorder %s445, %s446
      %p455 = scmp.eq.s32.totalorder %s36, 0
      %p456 = por %p454, %p455
      %p457 = scmp.ne.s32.totalorder %s445, %s446
      %p458 = scmp.eq.s32.totalorder %s37, 1
      %p459 = por %p457, %p458
      %p461 = scmp.ne.s32.totalorder %s446, %s460
      %p462 = scmp.eq.s32.totalorder %s37, 0
      %p463 = por %p461, %p462
      %s465 = sadd.s32 %s464, 1
      %p468 = scmp.eq.s32.totalorder %s31, 1
      %p469 = scmp.ne.s32.totalorder %s464, %s466
      %p470 = scmp.eq.s32.totalorder %s31, 0
      %p471 = por %p469, %p470
      %p472 = scmp.ne.s32.totalorder %s464, %s466
      %p473 = scmp.eq.s32.totalorder %s36, 1
      %p474 = por %p472, %p473
      %p475 = scmp.ne.s32.totalorder %s466, %s467
      %p476 = scmp.eq.s32.totalorder %s36, 0
      %p477 = por %p475, %p476
      %p478 = scmp.ne.s32.totalorder %s466, %s467
      %p479 = scmp.eq.s32.totalorder %s37, 1
      %p480 = por %p478, %p479
      %p482 = scmp.ne.s32.totalorder %s467, %s481
      %p483 = scmp.eq.s32.totalorder %s37, 0
      %p484 = por %p482, %p483
      %s486 = sadd.s32 %s485, 1
      %p489 = scmp.eq.s32.totalorder %s31, 1
      %p490 = scmp.ne.s32.totalorder %s485, %s487
      %p491 = scmp.eq.s32.totalorder %s31, 0
      %p492 = por %p490, %p491
      %p493 = scmp.ne.s32.totalorder %s485, %s487
      %p494 = scmp.eq.s32.totalorder %s36, 1
      %p495 = por %p493, %p494
      %p496 = scmp.ne.s32.totalorder %s487, %s488
      %p497 = scmp.eq.s32.totalorder %s36, 0
      %p498 = por %p496, %p497
      %p499 = scmp.ne.s32.totalorder %s487, %s488
      %p500 = scmp.eq.s32.totalorder %s37, 1
      %p501 = por %p499, %p500
      %p503 = scmp.ne.s32.totalorder %s488, %s502
      %p504 = scmp.eq.s32.totalorder %s37, 0
      %p505 = por %p503, %p504
      %s506 = ssub.s32 %s31, %s38
      %p507 = scmp.eq.s32.totalorder %s506, 0
      %s509 = sadd.s32 %s508, 1
      %s510 = scalar_select %p507, %s508, %s509
      %p513 = pneg %p507
      %p514 = scmp.eq.s32.totalorder %s31, 1
      %p515 = por %p513, %p514
      %p516 = scmp.ne.s32.totalorder %s508, %s511
      %p517 = scmp.eq.s32.totalorder %s31, 0
      %p518 = por %p516, %p517
      %p519 = scmp.ne.s32.totalorder %s508, %s511
      %p520 = scmp.eq.s32.totalorder %s36, 1
      %p521 = por %p519, %p520
      %p522 = scmp.ne.s32.totalorder %s511, %s512
      %p523 = scmp.eq.s32.totalorder %s36, 0
      %p524 = por %p522, %p523
      %p525 = scmp.ne.s32.totalorder %s511, %s512
      %p526 = scmp.eq.s32.totalorder %s37, 1
      %p527 = por %p525, %p526
      %p529 = scmp.ne.s32.totalorder %s512, %s528
      %p530 = scmp.eq.s32.totalorder %s37, 0
      %p531 = por %p529, %p530
      %p532 = scmp.le.s32.totalorder 1, %s31
      %p533 = scmp.lt.s32.totalorder %s31, 3
      %p534 = pnand %p532, %p533
      %p535 = pneg %p534
      // Predicated region
      $region9: #{enhanced_model_forward.1} parent=5 // pred_check
        _
      $region10: #{enhanced_model_forward.1} parent=5 // pred_check_branch
        %537 = sbr.rel (%p534) target = $region12
      $region11: #{enhanced_model_forward.1} parent=5 // pred_region
        %s538 = ssub.s32 %s31, 1
        // Predicated region
        $region13: #{enhanced_model_forward.1} parent=11 // pred_check
          %p539 = pneg %p78
        $region14: #{enhanced_model_forward.1} parent=11 // pred_check_branch
          %541 = sbr.rel (%p539) target = $region16
        $region15: #{enhanced_model_forward.1} parent=11 // pred_region
          _
        $region16: #{enhanced_model_forward.1} parent=11 // pred_fallthru
          _
        // Predicated region
        $region17: #{enhanced_model_forward.1} parent=11 // pred_check
          %p542 = pneg %p99
        $region18: #{enhanced_model_forward.1} parent=11 // pred_check_branch
          %544 = sbr.rel (%p542) target = $region20
        $region19: #{enhanced_model_forward.1} parent=11 // pred_region
          _
        $region20: #{enhanced_model_forward.1} parent=11 // pred_fallthru
          _
        // Predicated region
        $region21: #{enhanced_model_forward.1} parent=11 // pred_check
          %p545 = pneg %p120
        $region22: #{enhanced_model_forward.1} parent=11 // pred_check_branch
          %547 = sbr.rel (%p545) target = $region24
        $region23: #{enhanced_model_forward.1} parent=11 // pred_region
          _
        $region24: #{enhanced_model_forward.1} parent=11 // pred_fallthru
          _
        // Predicated region
        $region25: #{enhanced_model_forward.1} parent=11 // pred_check
          %p548 = pneg %p141
        $region26: #{enhanced_model_forward.1} parent=11 // pred_check_branch
          %550 = sbr.rel (%p548) target = $region28
        $region27: #{enhanced_model_forward.1} parent=11 // pred_region
          _
        $region28: #{enhanced_model_forward.1} parent=11 // pred_fallthru
          _
        // Predicated region
        $region29: #{enhanced_model_forward.1} parent=11 // pred_check
          %p551 = pneg %p162
        $region30: #{enhanced_model_forward.1} parent=11 // pred_check_branch
          %553 = sbr.rel (%p551) target = $region32
        $region31: #{enhanced_model_forward.1} parent=11 // pred_region
          _
        $region32: #{enhanced_model_forward.1} parent=11 // pred_fallthru
          _
        // Predicated region
        $region33: #{enhanced_model_forward.1} parent=11 // pred_check
          %p554 = pneg %p183
        $region34: #{enhanced_model_forward.1} parent=11 // pred_check_branch
          %556 = sbr.rel (%p554) target = $region36
        $region35: #{enhanced_model_forward.1} parent=11 // pred_region
          _
        $region36: #{enhanced_model_forward.1} parent=11 // pred_fallthru
          _
        // Predicated region
        $region37: #{enhanced_model_forward.1} parent=11 // pred_check
          %p557 = pneg %p204
        $region38: #{enhanced_model_forward.1} parent=11 // pred_check_branch
          %559 = sbr.rel (%p557) target = $region40
        $region39: #{enhanced_model_forward.1} parent=11 // pred_region
          _
        $region40: #{enhanced_model_forward.1} parent=11 // pred_fallthru
          _
        // Predicated region
        $region41: #{enhanced_model_forward.1} parent=11 // pred_check
          %p560 = pneg %p225
        $region42: #{enhanced_model_forward.1} parent=11 // pred_check_branch
          %562 = sbr.rel (%p560) target = $region44
        $region43: #{enhanced_model_forward.1} parent=11 // pred_region
          _
        $region44: #{enhanced_model_forward.1} parent=11 // pred_fallthru
          _
        // Predicated region
        $region45: #{enhanced_model_forward.1} parent=11 // pred_check
          %p563 = pneg %p246
        $region46: #{enhanced_model_forward.1} parent=11 // pred_check_branch
          %565 = sbr.rel (%p563) target = $region48
        $region47: #{enhanced_model_forward.1} parent=11 // pred_region
          _
        $region48: #{enhanced_model_forward.1} parent=11 // pred_fallthru
          _
        // Predicated region
        $region49: #{enhanced_model_forward.1} parent=11 // pred_check
          %p566 = pneg %p267
        $region50: #{enhanced_model_forward.1} parent=11 // pred_check_branch
          %568 = sbr.rel (%p566) target = $region52
        $region51: #{enhanced_model_forward.1} parent=11 // pred_region
          _
        $region52: #{enhanced_model_forward.1} parent=11 // pred_fallthru
          _
        // Predicated region
        $region53: #{enhanced_model_forward.1} parent=11 // pred_check
          %p569 = pneg %p288
        $region54: #{enhanced_model_forward.1} parent=11 // pred_check_branch
          %571 = sbr.rel (%p569) target = $region56
        $region55: #{enhanced_model_forward.1} parent=11 // pred_region
          _
        $region56: #{enhanced_model_forward.1} parent=11 // pred_fallthru
          _
        // Predicated region
        $region57: #{enhanced_model_forward.1} parent=11 // pred_check
          %p572 = pneg %p309
        $region58: #{enhanced_model_forward.1} parent=11 // pred_check_branch
          %574 = sbr.rel (%p572) target = $region60
        $region59: #{enhanced_model_forward.1} parent=11 // pred_region
          _
        $region60: #{enhanced_model_forward.1} parent=11 // pred_fallthru
          _
        // Predicated region
        $region61: #{enhanced_model_forward.1} parent=11 // pred_check
          %p575 = pneg %p330
        $region62: #{enhanced_model_forward.1} parent=11 // pred_check_branch
          %577 = sbr.rel (%p575) target = $region64
        $region63: #{enhanced_model_forward.1} parent=11 // pred_region
          _
        $region64: #{enhanced_model_forward.1} parent=11 // pred_fallthru
          _
        // Predicated region
        $region65: #{enhanced_model_forward.1} parent=11 // pred_check
          %p578 = pneg %p351
        $region66: #{enhanced_model_forward.1} parent=11 // pred_check_branch
          %580 = sbr.rel (%p578) target = $region68
        $region67: #{enhanced_model_forward.1} parent=11 // pred_region
          _
        $region68: #{enhanced_model_forward.1} parent=11 // pred_fallthru
          _
        // Predicated region
        $region69: #{enhanced_model_forward.1} parent=11 // pred_check
          %p581 = pneg %p372
        $region70: #{enhanced_model_forward.1} parent=11 // pred_check_branch
          %583 = sbr.rel (%p581) target = $region72
        $region71: #{enhanced_model_forward.1} parent=11 // pred_region
          _
        $region72: #{enhanced_model_forward.1} parent=11 // pred_fallthru
          _
        // Predicated region
        $region73: #{enhanced_model_forward.1} parent=11 // pred_check
          %p584 = pneg %p393
        $region74: #{enhanced_model_forward.1} parent=11 // pred_check_branch
          %586 = sbr.rel (%p584) target = $region76
        $region75: #{enhanced_model_forward.1} parent=11 // pred_region
          _
        $region76: #{enhanced_model_forward.1} parent=11 // pred_fallthru
          _
        // Predicated region
        $region77: #{enhanced_model_forward.1} parent=11 // pred_check
          %p587 = pneg %p414
        $region78: #{enhanced_model_forward.1} parent=11 // pred_check_branch
          %589 = sbr.rel (%p587) target = $region80
        $region79: #{enhanced_model_forward.1} parent=11 // pred_region
          _
        $region80: #{enhanced_model_forward.1} parent=11 // pred_fallthru
          _
        // Predicated region
        $region81: #{enhanced_model_forward.1} parent=11 // pred_check
          %p590 = pneg %p435
        $region82: #{enhanced_model_forward.1} parent=11 // pred_check_branch
          %592 = sbr.rel (%p590) target = $region84
        $region83: #{enhanced_model_forward.1} parent=11 // pred_region
          _
        $region84: #{enhanced_model_forward.1} parent=11 // pred_fallthru
          _
        // Predicated region
        $region85: #{enhanced_model_forward.1} parent=11 // pred_check
          %p593 = pneg %p456
        $region86: #{enhanced_model_forward.1} parent=11 // pred_check_branch
          %595 = sbr.rel (%p593) target = $region88
        $region87: #{enhanced_model_forward.1} parent=11 // pred_region
          _
        $region88: #{enhanced_model_forward.1} parent=11 // pred_fallthru
          _
        // Predicated region
        $region89: #{enhanced_model_forward.1} parent=11 // pred_check
          %p596 = pneg %p477
        $region90: #{enhanced_model_forward.1} parent=11 // pred_check_branch
          %598 = sbr.rel (%p596) target = $region92
        $region91: #{enhanced_model_forward.1} parent=11 // pred_region
          _
        $region92: #{enhanced_model_forward.1} parent=11 // pred_fallthru
          _
        // Predicated region
        $region93: #{enhanced_model_forward.1} parent=11 // pred_check
          %p599 = pneg %p498
        $region94: #{enhanced_model_forward.1} parent=11 // pred_check_branch
          %601 = sbr.rel (%p599) target = $region96
        $region95: #{enhanced_model_forward.1} parent=11 // pred_region
          _
        $region96: #{enhanced_model_forward.1} parent=11 // pred_fallthru
          _
      $region12: #{enhanced_model_forward.1} parent=5 // pred_fallthru
        _
      %p602 = scmp.lt.s32.totalorder %s31, 2
      // Predicated region
      $region97: #{enhanced_model_forward.1} parent=5 // pred_check
        %p603 = pneg %p602
      $region98: #{enhanced_model_forward.1} parent=5 // pred_check_branch
        %605 = sbr.rel (%p603) target = $region100
      $region99: #{enhanced_model_forward.1} parent=5 // pred_region
        // Predicated region
        $region101: #{enhanced_model_forward.1} parent=99 // pred_check
          %p606 = pneg %p51
        $region102: #{enhanced_model_forward.1} parent=99 // pred_check_branch
          %608 = sbr.rel (%p606) target = $region104
        $region103: #{enhanced_model_forward.1} parent=99 // pred_region
          %p609 = scmp.lt.s32.totalorder %s31, 1
          %s610 = scalar_select %p609, %s31, 1
          %s611 = smul.addr %s610, 4
          %s612 = smul.addr %s611, 8
          %s613 = scalar_lea.vmem %s0, %s612
        $region104: #{enhanced_model_forward.1} parent=99 // pred_fallthru
          _
      $region100: #{enhanced_model_forward.1} parent=5 // pred_fallthru
        _
      %p614 = scmp.le.s32.totalorder 1, %s31
      %p615 = scmp.lt.s32.totalorder %s31, 3
      %p616 = pnand %p614, %p615
      %p617 = pneg %p616
      // Predicated region
      $region105: #{enhanced_model_forward.1} parent=5 // pred_check
        _
      $region106: #{enhanced_model_forward.1} parent=5 // pred_check_branch
        %619 = sbr.rel (%p616) target = $region108
      $region107: #{enhanced_model_forward.1} parent=5 // pred_region
        %s620 = ssub.s32 %s31, 1
        %p621 = scmp.lt.s32.totalorder %s36, 1
        %s622 = scalar_select %p621, %s36, 1
        %s623 = smul.addr %s622, 4
        %s624 = smul.addr %s623, 8
        %s625 = scalar_lea.vmem %s0, %s624
        %p626 = pneg %p57
        %p627 = pneg %p54
        %p628 = pneg %p78
        %p629 = pneg %p75
        %p630 = pneg %p99
        %p631 = pneg %p96
        %p632 = pneg %p120
        %p633 = pneg %p117
        %p634 = pneg %p141
        %p635 = pneg %p138
        %p636 = pneg %p162
        %p637 = pneg %p159
        %p638 = pneg %p183
        %p639 = pneg %p180
        %p640 = pneg %p204
        %p641 = pneg %p201
        %p642 = pneg %p225
        %p643 = pneg %p222
        %p644 = pneg %p246
        %p645 = pneg %p243
        %p646 = pneg %p267
        %p647 = pneg %p264
        %p648 = pneg %p288
        %p649 = pneg %p285
        %p650 = pneg %p309
        %p651 = pneg %p306
        %p652 = pneg %p330
        %p653 = pneg %p327
        %p654 = pneg %p351
        %p655 = pneg %p348
        %p656 = pneg %p372
        %p657 = pneg %p369
        %p658 = pneg %p393
        %p659 = pneg %p390
        %p660 = pneg %p414
        %p661 = pneg %p411
        %p662 = pneg %p435
        %p663 = pneg %p432
        %p664 = pneg %p456
        %p665 = pneg %p453
        %p666 = pneg %p477
        %p667 = pneg %p474
        %p668 = pneg %p498
        %p669 = pneg %p495
        %p670 = pneg %p524
        %p671 = pneg %p521
        %s672 = sand.u32 %s511, 1
        %s673 = scalar_lea.sflag [#allocation4], %s672
        %s674 = sand.u32 %s511, 1
        %s675 = smul.addr %s674, 2
        %s676 = scalar_lea.vmem [#allocation3], %s675
        %p677 = scmp.lt.s32.totalorder %s36, 1
        %s678 = scalar_select %p677, %s36, 1
        %s679 = smul.addr %s678, 4
        %s680 = smul.addr %s679, 8
        %s681 = scalar_lea.vmem %s0, %s680
        %683 = vst [vmem:[#allocation2] sm:$0xff] 0.0
        %684 = vst [vmem:[#allocation2 + $0x8] sm:$0xff] 0.0
        %685 = vst [vmem:[#allocation2 + $0x10] sm:$0xff] 0.0
        %686 = vst [vmem:[#allocation2 + $0x18] sm:$0xff] 0.0
        %687 = vst [vmem:[#allocation2 + $0x20] sm:$0xff] 0.0
        %688 = vst [vmem:[#allocation2 + $0x28] sm:$0xff] 0.0
        %689 = vst [vmem:[#allocation2 + $0x30] sm:$0xff] 0.0
        %690 = vst [vmem:[#allocation2 + $0x38] sm:$0xff] 0.0
        %691 = vst [vmem:[#allocation2 + $0x40] sm:$0xff] 0.0
        %692 = vst [vmem:[#allocation2 + $0x48] sm:$0xff] 0.0
        %693 = vst [vmem:[#allocation2 + $0x50] sm:$0xff] 0.0
        %694 = vst [vmem:[#allocation2 + $0x58] sm:$0xff] 0.0
        %695 = vst [vmem:[#allocation2 + $0x60] sm:$0xff] 0.0
        %696 = vst [vmem:[#allocation2 + $0x68] sm:$0xff] 0.0
        %697 = vst [vmem:[#allocation2 + $0x70] sm:$0xff] 0.0
        %698 = vst [vmem:[#allocation2 + $0x78] sm:$0xff] 0.0
        %699 = vst [vmem:[#allocation2 + $0x80] sm:$0xff] 0.0
        %700 = vst [vmem:[#allocation2 + $0x88] sm:$0xff] 0.0
        %701 = vst [vmem:[#allocation2 + $0x90] sm:$0xff] 0.0
        %702 = vst [vmem:[#allocation2 + $0x98] sm:$0xff] 0.0
        %703 = vst [vmem:[#allocation2 + $0xa0] sm:$0xff] 0.0
        %704 = vst [vmem:[#allocation2 + $0xa8] sm:$0xff] 0.0
        %705 = vst [vmem:[#allocation2 + $0xb0] sm:$0xff] 0.0
        %706 = vst [vmem:[#allocation2 + $0xb8] sm:$0xff] 0.0
        %v707 = vld [vmem:[%s681] sm:$0xff]
        %v708 = vld [vmem:[%s681 + $0x8] sm:$0xff]
        %v709 = vld [vmem:[%s681 + $0x10] sm:$0xff]
        %v710 = vld [vmem:[%s681 + $0x18] sm:$0xff]
        %711 = vst [vmem:[#allocation2 + $0x8] sm:$0xff] %v707
        %712 = vst [vmem:[#allocation2 + $0x10] sm:$0xff] %v708
        %713 = vst [vmem:[#allocation2 + $0x18] sm:$0xff] %v709
        %714 = vst [vmem:[#allocation2 + $0x20] sm:$0xff] %v710
        %v715 = vld [vmem:[%s13] sm:$0xff]
        %v716 = vld [vmem:[%s13 + $0x8] sm:$0xff]
        %v717 = vld [vmem:[%s13 + $0x10] sm:$0xff]
        %v718 = vld [vmem:[%s13 + $0x18] sm:$0xff]
        %v719 = vld [vmem:[%s13 + $0x20] sm:$0x1]
        %v720 = vld [vmem:[%s13 + $0x28] sm:$0x1]
        %v721 = vld [vmem:[%s13 + $0x30] sm:$0x1]
        %v722 = vld [vmem:[%s13 + $0x38] sm:$0x1]
        %v723 = vld [vmem:[#allocation2] sm:$0xff]
        %v724 = vld [vmem:[#allocation2 + $0x8] sm:$0xff]
        %v725 = vld [vmem:[#allocation2 + $0x10] sm:$0xff]
        %v726 = vld [vmem:[#allocation2 + $0x18] sm:$0xff]
        %v727 = vld [vmem:[#allocation2 + $0x20] sm:$0xff]
        %v728 = vlaneseq
        %v729 = vshrl.u32 %v728, 7
        %v730 = vsub.s32 0, %v729
        %v731 = vrot.slane %v715, %v730
        %v732 = vlaneseq
        %v733 = vshrl.u32 %v732, 7
        %v734 = vsub.s32 0, %v733
        %v735 = vrot.slane %v716, %v734
        %v736 = vlaneseq
        %v737 = vshrl.u32 %v736, 7
        %v738 = vsub.s32 0, %v737
        %v739 = vrot.slane %v717, %v738
        %v740 = vlaneseq
        %v741 = vshrl.u32 %v740, 7
        %v742 = vsub.s32 0, %v741
        %v743 = vrot.slane %v718, %v742
        %748 = vrot.lane.b32.xlu0 %v731, 111
        %v749 = vpop.permute.xlu0 %748
        %750 = vrot.lane.b32.xlu0 %v735, 111
        %v751 = vpop.permute.xlu0 %750
        %752 = vrot.lane.b32.xlu0 %v739, 111
        %v753 = vpop.permute.xlu0 %752
        %754 = vrot.lane.b32.xlu0 %v743, 111
        %v755 = vpop.permute.xlu0 %754
        %vm756 = vcmask 908288
        %v757 = vsel %vm756, %v749, %v751
        %v758 = vsel %vm756, %v751, %v753
        %v759 = vsel %vm756, %v753, %v755
        %v765 = vmul.f32 %v723, %v749
        %v766 = vmul.f32 %v724, %v757
        %v767 = vmul.f32 %v725, %v758
        %v768 = vmul.f32 %v726, %v759
        %v769 = vmul.f32 %v727, %v755
        %v770 = vlaneseq
        %v771 = vshrl.u32 %v770, 7
        %v772 = vsub.s32 1, %v771
        %v773 = vrot.slane %v715, %v772
        %v774 = vlaneseq
        %v775 = vshrl.u32 %v774, 7
        %v776 = vsub.s32 1, %v775
        %v777 = vrot.slane %v716, %v776
        %v778 = vlaneseq
        %v779 = vshrl.u32 %v778, 7
        %v780 = vsub.s32 1, %v779
        %v781 = vrot.slane %v717, %v780
        %v782 = vlaneseq
        %v783 = vshrl.u32 %v782, 7
        %v784 = vsub.s32 1, %v783
        %v785 = vrot.slane %v718, %v784
        %790 = vrot.lane.b32.xlu0 %v773, 112
        %v791 = vpop.permute.xlu0 %790
        %792 = vrot.lane.b32.xlu0 %v777, 112
        %v793 = vpop.permute.xlu0 %792
        %794 = vrot.lane.b32.xlu0 %v781, 112
        %v795 = vpop.permute.xlu0 %794
        %796 = vrot.lane.b32.xlu0 %v785, 112
        %v797 = vpop.permute.xlu0 %796
        %vm798 = vcmask 916480
        %v799 = vsel %vm798, %v791, %v793
        %v800 = vsel %vm798, %v793, %v795
        %v801 = vsel %vm798, %v795, %v797
        %v807 = vmul.f32 %v723, %v791
        %v808 = vmul.f32 %v724, %v799
        %v809 = vmul.f32 %v725, %v800
        %v810 = vmul.f32 %v726, %v801
        %v811 = vmul.f32 %v727, %v797
        %v812 = vlaneseq
        %v813 = vshrl.u32 %v812, 7
        %v814 = vsub.s32 2, %v813
        %v815 = vrot.slane %v715, %v814
        %v816 = vlaneseq
        %v817 = vshrl.u32 %v816, 7
        %v818 = vsub.s32 2, %v817
        %v819 = vrot.slane %v716, %v818
        %v820 = vlaneseq
        %v821 = vshrl.u32 %v820, 7
        %v822 = vsub.s32 2, %v821
        %v823 = vrot.slane %v717, %v822
        %v824 = vlaneseq
        %v825 = vshrl.u32 %v824, 7
        %v826 = vsub.s32 2, %v825
        %v827 = vrot.slane %v718, %v826
        %832 = vrot.lane.b32.xlu0 %v815, 113
        %v833 = vpop.permute.xlu0 %832
        %834 = vrot.lane.b32.xlu0 %v819, 113
        %v835 = vpop.permute.xlu0 %834
        %836 = vrot.lane.b32.xlu0 %v823, 113
        %v837 = vpop.permute.xlu0 %836
        %838 = vrot.lane.b32.xlu0 %v827, 113
        %v839 = vpop.permute.xlu0 %838
        %vm840 = vcmask 924672
        %v841 = vsel %vm840, %v833, %v835
        %v842 = vsel %vm840, %v835, %v837
        %v843 = vsel %vm840, %v837, %v839
        %v849 = vmul.f32 %v723, %v833
        %v850 = vmul.f32 %v724, %v841
        %v851 = vmul.f32 %v725, %v842
        %v852 = vmul.f32 %v726, %v843
        %v853 = vmul.f32 %v727, %v839
        %v854 = vlaneseq
        %v855 = vshrl.u32 %v854, 7
        %v856 = vsub.s32 3, %v855
        %v857 = vrot.slane %v715, %v856
        %v858 = vlaneseq
        %v859 = vshrl.u32 %v858, 7
        %v860 = vsub.s32 3, %v859
        %v861 = vrot.slane %v716, %v860
        %v862 = vlaneseq
        %v863 = vshrl.u32 %v862, 7
        %v864 = vsub.s32 3, %v863
        %v865 = vrot.slane %v717, %v864
        %v866 = vlaneseq
        %v867 = vshrl.u32 %v866, 7
        %v868 = vsub.s32 3, %v867
        %v869 = vrot.slane %v718, %v868
        %874 = vrot.lane.b32.xlu0 %v857, 127
        %v875 = vpop.permute.xlu0 %874
        %876 = vrot.lane.b32.xlu0 %v861, 127
        %v877 = vpop.permute.xlu0 %876
        %878 = vrot.lane.b32.xlu0 %v865, 127
        %v879 = vpop.permute.xlu0 %878
        %880 = vrot.lane.b32.xlu0 %v869, 127
        %v881 = vpop.permute.xlu0 %880
        %vm882 = vcmask 1039360
        %v883 = vsel %vm882, %v875, %v877
        %v884 = vsel %vm882, %v877, %v879
        %v885 = vsel %vm882, %v879, %v881
        %v891 = vmul.f32 %v723, %v875
        %v892 = vmul.f32 %v724, %v883
        %v893 = vmul.f32 %v725, %v884
        %v894 = vmul.f32 %v726, %v885
        %v895 = vmul.f32 %v727, %v881
        %v896 = vld [vmem:[#allocation2 + $0x28] sm:$0xff]
        %v897 = vlaneseq
        %v898 = vshrl.u32 %v897, 7
        %v899 = vsub.s32 5, %v898
        %v900 = vrot.slane %v715, %v899
        %v901 = vlaneseq
        %v902 = vshrl.u32 %v901, 7
        %v903 = vsub.s32 5, %v902
        %v904 = vrot.slane %v716, %v903
        %v905 = vlaneseq
        %v906 = vshrl.u32 %v905, 7
        %v907 = vsub.s32 5, %v906
        %v908 = vrot.slane %v717, %v907
        %v909 = vlaneseq
        %v910 = vshrl.u32 %v909, 7
        %v911 = vsub.s32 5, %v910
        %v912 = vrot.slane %v718, %v911
        %917 = vrot.lane.b32.xlu0 %v900, 1
        %v918 = vpop.permute.xlu0 %917
        %919 = vrot.lane.b32.xlu0 %v904, 1
        %v920 = vpop.permute.xlu0 %919
        %921 = vrot.lane.b32.xlu0 %v908, 1
        %v922 = vpop.permute.xlu0 %921
        %923 = vrot.lane.b32.xlu0 %v912, 1
        %v924 = vpop.permute.xlu0 %923
        %vm925 = vcmask 7168
        %v926 = vsel %vm925, %v918, %v920
        %v927 = vsel %vm925, %v920, %v922
        %v928 = vsel %vm925, %v922, %v924
        %v934 = vmul.f32 %v724, %v918
        %v935 = vmul.f32 %v725, %v926
        %v936 = vmul.f32 %v726, %v927
        %v937 = vmul.f32 %v727, %v928
        %v938 = vmul.f32 %v896, %v924
        %v939 = vlaneseq
        %v940 = vshrl.u32 %v939, 7
        %v941 = vsub.s32 6, %v940
        %v942 = vrot.slane %v715, %v941
        %v943 = vlaneseq
        %v944 = vshrl.u32 %v943, 7
        %v945 = vsub.s32 6, %v944
        %v946 = vrot.slane %v716, %v945
        %v947 = vlaneseq
        %v948 = vshrl.u32 %v947, 7
        %v949 = vsub.s32 6, %v948
        %v950 = vrot.slane %v717, %v949
        %v951 = vlaneseq
        %v952 = vshrl.u32 %v951, 7
        %v953 = vsub.s32 6, %v952
        %v954 = vrot.slane %v718, %v953
        %959 = vrot.lane.b32.xlu0 %v942, 15
        %v960 = vpop.permute.xlu0 %959
        %961 = vrot.lane.b32.xlu0 %v946, 15
        %v962 = vpop.permute.xlu0 %961
        %963 = vrot.lane.b32.xlu0 %v950, 15
        %v964 = vpop.permute.xlu0 %963
        %965 = vrot.lane.b32.xlu0 %v954, 15
        %v966 = vpop.permute.xlu0 %965
        %vm967 = vcmask 121856
        %v968 = vsel %vm967, %v960, %v962
        %v969 = vsel %vm967, %v962, %v964
        %v970 = vsel %vm967, %v964, %v966
        %v976 = vmul.f32 %v724, %v960
        %v977 = vmul.f32 %v725, %v968
        %v978 = vmul.f32 %v726, %v969
        %v979 = vmul.f32 %v727, %v970
        %v980 = vmul.f32 %v896, %v966
        %v981 = vlaneseq
        %v982 = vshrl.u32 %v981, 7
        %v983 = vsub.s32 7, %v982
        %v984 = vrot.slane %v715, %v983
        %v985 = vlaneseq
        %v986 = vshrl.u32 %v985, 7
        %v987 = vsub.s32 7, %v986
        %v988 = vrot.slane %v716, %v987
        %v989 = vlaneseq
        %v990 = vshrl.u32 %v989, 7
        %v991 = vsub.s32 7, %v990
        %v992 = vrot.slane %v717, %v991
        %v993 = vlaneseq
        %v994 = vshrl.u32 %v993, 7
        %v995 = vsub.s32 7, %v994
        %v996 = vrot.slane %v718, %v995
        %1001 = vrot.lane.b32.xlu0 %v984, 16
        %v1002 = vpop.permute.xlu0 %1001
        %1003 = vrot.lane.b32.xlu0 %v988, 16
        %v1004 = vpop.permute.xlu0 %1003
        %1005 = vrot.lane.b32.xlu0 %v992, 16
        %v1006 = vpop.permute.xlu0 %1005
        %1007 = vrot.lane.b32.xlu0 %v996, 16
        %v1008 = vpop.permute.xlu0 %1007
        %vm1009 = vcmask 130048
        %v1010 = vsel %vm1009, %v1002, %v1004
        %v1011 = vsel %vm1009, %v1004, %v1006
        %v1012 = vsel %vm1009, %v1006, %v1008
        %v1018 = vmul.f32 %v724, %v1002
        %v1019 = vmul.f32 %v725, %v1010
        %v1020 = vmul.f32 %v726, %v1011
        %v1021 = vmul.f32 %v727, %v1012
        %v1022 = vmul.f32 %v896, %v1008
        %v1023 = vlaneseq
        %v1024 = vshrl.u32 %v1023, 7
        %v1025 = vsub.s32 0, %v1024
        %v1026 = vrot.slane %v719, %v1025
        %v1027 = vlaneseq
        %v1028 = vshrl.u32 %v1027, 7
        %v1029 = vsub.s32 0, %v1028
        %v1030 = vrot.slane %v720, %v1029
        %v1031 = vlaneseq
        %v1032 = vshrl.u32 %v1031, 7
        %v1033 = vsub.s32 0, %v1032
        %v1034 = vrot.slane %v721, %v1033
        %v1035 = vlaneseq
        %v1036 = vshrl.u32 %v1035, 7
        %v1037 = vsub.s32 0, %v1036
        %v1038 = vrot.slane %v722, %v1037
        %1043 = vrot.lane.b32.xlu0 %v1026, 17
        %v1044 = vpop.permute.xlu0 %1043
        %1045 = vrot.lane.b32.xlu0 %v1030, 17
        %v1046 = vpop.permute.xlu0 %1045
        %1047 = vrot.lane.b32.xlu0 %v1034, 17
        %v1048 = vpop.permute.xlu0 %1047
        %1049 = vrot.lane.b32.xlu0 %v1038, 17
        %v1050 = vpop.permute.xlu0 %1049
        %vm1051 = vcmask 138240
        %v1052 = vsel %vm1051, %v1044, %v1046
        %v1053 = vsel %vm1051, %v1046, %v1048
        %v1054 = vsel %vm1051, %v1048, %v1050
        %v1060 = vmul.f32 %v724, %v1044
        %v1061 = vmul.f32 %v725, %v1052
        %v1062 = vmul.f32 %v726, %v1053
        %v1063 = vmul.f32 %v727, %v1054
        %v1064 = vmul.f32 %v896, %v1050
        %1070 = vrot.lane.b32.xlu0 %v807, 127
        %v1071 = vpop.permute.xlu0 %1070
        %1072 = vrot.lane.b32.xlu0 %v808, 127
        %v1073 = vpop.permute.xlu0 %1072
        %1074 = vrot.lane.b32.xlu0 %v809, 127
        %v1075 = vpop.permute.xlu0 %1074
        %1076 = vrot.lane.b32.xlu0 %v810, 127
        %v1077 = vpop.permute.xlu0 %1076
        %1078 = vrot.lane.b32.xlu0 %v811, 127
        %v1079 = vpop.permute.xlu0 %1078
        %v1080 = vsel %vm882, %v1071, %v1073
        %v1081 = vsel %vm882, %v1073, %v1075
        %v1082 = vsel %vm882, %v1075, %v1077
        %v1083 = vsel %vm882, %v1077, %v1079
        %1094 = vrot.lane.b32.xlu0 %v849, 126
        %v1095 = vpop.permute.xlu0 %1094
        %1096 = vrot.lane.b32.xlu0 %v850, 126
        %v1097 = vpop.permute.xlu0 %1096
        %1098 = vrot.lane.b32.xlu0 %v851, 126
        %v1099 = vpop.permute.xlu0 %1098
        %1100 = vrot.lane.b32.xlu0 %v852, 126
        %v1101 = vpop.permute.xlu0 %1100
        %1102 = vrot.lane.b32.xlu0 %v853, 126
        %v1103 = vpop.permute.xlu0 %1102
        %vm1104 = vcmask 1031168
        %v1105 = vsel %vm1104, %v1095, %v1097
        %v1106 = vsel %vm1104, %v1097, %v1099
        %v1107 = vsel %vm1104, %v1099, %v1101
        %v1108 = vsel %vm1104, %v1101, %v1103
        %1119 = vrot.lane.b32.xlu0 %v891, 112
        %v1120 = vpop.permute.xlu0 %1119
        %1121 = vrot.lane.b32.xlu0 %v892, 112
        %v1122 = vpop.permute.xlu0 %1121
        %1123 = vrot.lane.b32.xlu0 %v893, 112
        %v1124 = vpop.permute.xlu0 %1123
        %1125 = vrot.lane.b32.xlu0 %v894, 112
        %v1126 = vpop.permute.xlu0 %1125
        %1127 = vrot.lane.b32.xlu0 %v895, 112
        %v1128 = vpop.permute.xlu0 %1127
        %v1129 = vsel %vm798, %v1120, %v1122
        %v1130 = vsel %vm798, %v1122, %v1124
        %v1131 = vsel %vm798, %v1124, %v1126
        %v1132 = vsel %vm798, %v1126, %v1128
        %1142 = vrot.lane.b32.xlu0 %v707, 111
        %v1143 = vpop.permute.xlu0 %1142
        %1144 = vrot.lane.b32.xlu0 %v708, 111
        %v1145 = vpop.permute.xlu0 %1144
        %1146 = vrot.lane.b32.xlu0 %v709, 111
        %v1147 = vpop.permute.xlu0 %1146
        %1148 = vrot.lane.b32.xlu0 %v710, 111
        %v1149 = vpop.permute.xlu0 %1148
        %v1150 = vsel %vm756, %v1143, %v1145
        %v1151 = vsel %vm756, %v1145, %v1147
        %v1152 = vsel %vm756, %v1147, %v1149
        %1163 = vrot.lane.b32.xlu0 %v934, 110
        %v1164 = vpop.permute.xlu0 %1163
        %1165 = vrot.lane.b32.xlu0 %v935, 110
        %v1166 = vpop.permute.xlu0 %1165
        %1167 = vrot.lane.b32.xlu0 %v936, 110
        %v1168 = vpop.permute.xlu0 %1167
        %1169 = vrot.lane.b32.xlu0 %v937, 110
        %v1170 = vpop.permute.xlu0 %1169
        %1171 = vrot.lane.b32.xlu0 %v938, 110
        %v1172 = vpop.permute.xlu0 %1171
        %vm1173 = vcmask 900096
        %v1174 = vsel %vm1173, %v1164, %v1166
        %v1175 = vsel %vm1173, %v1166, %v1168
        %v1176 = vsel %vm1173, %v1168, %v1170
        %v1177 = vsel %vm1173, %v1170, %v1172
        %1188 = vrot.lane.b32.xlu0 %v976, 96
        %v1189 = vpop.permute.xlu0 %1188
        %1190 = vrot.lane.b32.xlu0 %v977, 96
        %v1191 = vpop.permute.xlu0 %1190
        %1192 = vrot.lane.b32.xlu0 %v978, 96
        %v1193 = vpop.permute.xlu0 %1192
        %1194 = vrot.lane.b32.xlu0 %v979, 96
        %v1195 = vpop.permute.xlu0 %1194
        %1196 = vrot.lane.b32.xlu0 %v980, 96
        %v1197 = vpop.permute.xlu0 %1196
        %vm1198 = vcmask 785408
        %v1199 = vsel %vm1198, %v1189, %v1191
        %v1200 = vsel %vm1198, %v1191, %v1193
        %v1201 = vsel %vm1198, %v1193, %v1195
        %v1202 = vsel %vm1198, %v1195, %v1197
        %1213 = vrot.lane.b32.xlu0 %v1018, 95
        %v1214 = vpop.permute.xlu0 %1213
        %1215 = vrot.lane.b32.xlu0 %v1019, 95
        %v1216 = vpop.permute.xlu0 %1215
        %1217 = vrot.lane.b32.xlu0 %v1020, 95
        %v1218 = vpop.permute.xlu0 %1217
        %1219 = vrot.lane.b32.xlu0 %v1021, 95
        %v1220 = vpop.permute.xlu0 %1219
        %1221 = vrot.lane.b32.xlu0 %v1022, 95
        %v1222 = vpop.permute.xlu0 %1221
        %vm1223 = vcmask 777216
        %v1224 = vsel %vm1223, %v1214, %v1216
        %v1225 = vsel %vm1223, %v1216, %v1218
        %v1226 = vsel %vm1223, %v1218, %v1220
        %v1227 = vsel %vm1223, %v1220, %v1222
        %1238 = vrot.lane.b32.xlu0 %v1060, 94
        %v1239 = vpop.permute.xlu0 %1238
        %1240 = vrot.lane.b32.xlu0 %v1061, 94
        %v1241 = vpop.permute.xlu0 %1240
        %1242 = vrot.lane.b32.xlu0 %v1062, 94
        %v1243 = vpop.permute.xlu0 %1242
        %1244 = vrot.lane.b32.xlu0 %v1063, 94
        %v1245 = vpop.permute.xlu0 %1244
        %1246 = vrot.lane.b32.xlu0 %v1064, 94
        %v1247 = vpop.permute.xlu0 %1246
        %vm1248 = vcmask 769024
        %v1249 = vsel %vm1248, %v1239, %v1241
        %v1250 = vsel %vm1248, %v1241, %v1243
        %v1251 = vsel %vm1248, %v1243, %v1245
        %v1252 = vsel %vm1248, %v1245, %v1247
        %v1258 = vpack.c.bf16 %v1080, %v765
        %v1259 = vpack.c.bf16 %v1081, %v766
        %v1260 = vpack.c.bf16 %v1082, %v767
        %v1261 = vpack.c.bf16 %v1083, %v768
        %v1262 = vpack.c.bf16 %v1079, %v769
        %v1263 = vpack.c.bf16 %v1129, %v1105
        %v1264 = vpack.c.bf16 %v1130, %v1106
        %v1265 = vpack.c.bf16 %v1131, %v1107
        %v1266 = vpack.c.bf16 %v1132, %v1108
        %v1267 = vpack.c.bf16 %v1128, %v1103
        %v1268 = vpack.c.bf16 %v1164, %v1143
        %v1269 = vpack.c.bf16 %v1174, %v1150
        %v1270 = vpack.c.bf16 %v1175, %v1151
        %v1271 = vpack.c.bf16 %v1176, %v1152
        %v1272 = vpack.c.bf16 %v1177, %v1149
        %v1273 = vpack.c.bf16 %v1214, %v1189
        %v1274 = vpack.c.bf16 %v1224, %v1199
        %v1275 = vpack.c.bf16 %v1225, %v1200
        %v1276 = vpack.c.bf16 %v1226, %v1201
        %v1277 = vpack.c.bf16 %v1227, %v1202
        %v1278 = vpack.c.bf16 %v1239, %v1239
        %v1279 = vpack.c.bf16 %v1249, %v1249
        %v1280 = vpack.c.bf16 %v1250, %v1250
        %v1281 = vpack.c.bf16 %v1251, %v1251
        %v1282 = vpack.c.bf16 %v1252, %v1252
        %v1283 = vld [vmem:[%s1] sm:$0xf]
        %v1284 = vld [vmem:[%s2] sm:$0xff]
        %1286 = vset.pattern.permute.xlu0 0
        %1287 = vperm.xlu0 %1286, %v1284
        %v1288 = vpop.permute.xlu0 %1287
        %1315 = vrot.lane.b32.xlu0 %v1258, 17
        %v1316 = vpop.permute.xlu0 %1315
        %1317 = vrot.lane.b32.xlu0 %v1259, 17
        %v1318 = vpop.permute.xlu0 %1317
        %1319 = vrot.lane.b32.xlu0 %v1260, 17
        %v1320 = vpop.permute.xlu0 %1319
        %1321 = vrot.lane.b32.xlu0 %v1261, 17
        %v1322 = vpop.permute.xlu0 %1321
        %1323 = vrot.lane.b32.xlu0 %v1262, 17
        %v1324 = vpop.permute.xlu0 %1323
        %1325 = vrot.lane.b32.xlu0 %v1263, 17
        %v1326 = vpop.permute.xlu0 %1325
        %1327 = vrot.lane.b32.xlu0 %v1264, 17
        %v1328 = vpop.permute.xlu0 %1327
        %1329 = vrot.lane.b32.xlu0 %v1265, 17
        %v1330 = vpop.permute.xlu0 %1329
        %1331 = vrot.lane.b32.xlu0 %v1266, 17
        %v1332 = vpop.permute.xlu0 %1331
        %1333 = vrot.lane.b32.xlu0 %v1267, 17
        %v1334 = vpop.permute.xlu0 %1333
        %1335 = vrot.lane.b32.xlu0 %v1268, 17
        %v1336 = vpop.permute.xlu0 %1335
        %1337 = vrot.lane.b32.xlu0 %v1269, 17
        %v1338 = vpop.permute.xlu0 %1337
        %1339 = vrot.lane.b32.xlu0 %v1270, 17
        %v1340 = vpop.permute.xlu0 %1339
        %1341 = vrot.lane.b32.xlu0 %v1271, 17
        %v1342 = vpop.permute.xlu0 %1341
        %1343 = vrot.lane.b32.xlu0 %v1272, 17
        %v1344 = vpop.permute.xlu0 %1343
        %1345 = vrot.lane.b32.xlu0 %v1273, 17
        %v1346 = vpop.permute.xlu0 %1345
        %1347 = vrot.lane.b32.xlu0 %v1274, 17
        %v1348 = vpop.permute.xlu0 %1347
        %1349 = vrot.lane.b32.xlu0 %v1275, 17
        %v1350 = vpop.permute.xlu0 %1349
        %1351 = vrot.lane.b32.xlu0 %v1276, 17
        %v1352 = vpop.permute.xlu0 %1351
        %1353 = vrot.lane.b32.xlu0 %v1277, 17
        %v1354 = vpop.permute.xlu0 %1353
        %1355 = vrot.lane.b32.xlu0 %v1278, 17
        %v1356 = vpop.permute.xlu0 %1355
        %1357 = vrot.lane.b32.xlu0 %v1279, 17
        %v1358 = vpop.permute.xlu0 %1357
        %1359 = vrot.lane.b32.xlu0 %v1280, 17
        %v1360 = vpop.permute.xlu0 %1359
        %1361 = vrot.lane.b32.xlu0 %v1281, 17
        %v1362 = vpop.permute.xlu0 %1361
        %1363 = vrot.lane.b32.xlu0 %v1282, 17
        %v1364 = vpop.permute.xlu0 %1363
        %vm1365 = vcmask 138240
        %v1366 = vsel %vm1365, %v1316, %v1318
        %v1367 = vsel %vm1365, %v1318, %v1320
        %v1368 = vsel %vm1365, %v1320, %v1322
        %v1369 = vsel %vm1365, %v1322, %v1324
        %v1370 = vsel %vm1365, %v1326, %v1328
        %v1371 = vsel %vm1365, %v1328, %v1330
        %v1372 = vsel %vm1365, %v1330, %v1332
        %v1373 = vsel %vm1365, %v1332, %v1334
        %v1374 = vsel %vm1365, %v1336, %v1338
        %v1375 = vsel %vm1365, %v1338, %v1340
        %v1376 = vsel %vm1365, %v1340, %v1342
        %v1377 = vsel %vm1365, %v1342, %v1344
        %v1378 = vsel %vm1365, %v1346, %v1348
        %v1379 = vsel %vm1365, %v1348, %v1350
        %v1380 = vsel %vm1365, %v1350, %v1352
        %v1381 = vsel %vm1365, %v1352, %v1354
        %v1382 = vsel %vm1365, %v1356, %v1358
        %v1383 = vsel %vm1365, %v1358, %v1360
        %v1384 = vsel %vm1365, %v1360, %v1362
        %v1385 = vsel %vm1365, %v1362, %v1364
        %vm1402 = vcmask 588800
        %v1404 = vsel %vm1402, %v1283, 0
        %vm1406 = vcmask 1043456
        %v1408 = vsel %vm1406, %v1382, 0
        %v1411 = vsel %vm1406, %v1383, 0
        %v1414 = vsel %vm1406, %v1384, 0
        %v1417 = vsel %vm1406, %v1385, 0
        %1419 = vmatprep.subr.bf16.mxu0 %v1367
        %1420 = vmatpush1.bf16.msra.mxu0 %v1366
        %1421 = vmatprep.subr.bf16.mxu0 %v1371
        %1422 = vmatpush1.bf16.msra.mxu0 %v1370
        %1423 = vmatprep.subr.bf16.mxu0 %v1375
        %1424 = vmatpush1.bf16.msra.mxu0 %v1374
        %1425 = vmatprep.subr.bf16.mxu0 %v1379
        %1426 = vmatpush1.bf16.msra.mxu0 %v1378
        %1427 = vmatprep.subr.bf16.mxu0 %v1411
        %1428 = vmatpush1.bf16.msra.mxu0 %v1408
        %1429 = vmatprep.subr.bf16.mxu0 0
        %1430 = vmatpush1.bf16.msra.mxu0 0
        %1431 = vmatprep.subr.bf16.mxu0 0
        %1432 = vmatpush1.bf16.msra.mxu0 0
        %1433 = vmatprep.subr.bf16.mxu0 0
        %1434 = vmatpush1.bf16.msra.mxu0 0
        %1435 = vmatprep.subr.bf16.mxu0 0
        %1436 = vmatpush1.bf16.msra.mxu0 0
        %1437 = vmatprep.subr.bf16.mxu0 0
        %1438 = vmatpush1.bf16.msra.mxu0 0
        %1439 = vmatprep.subr.bf16.mxu0 0
        %1440 = vmatpush1.bf16.msra.mxu0 0
        %1441 = vmatprep.subr.bf16.mxu0 0
        %1442 = vmatpush1.bf16.msra.mxu0 0
        %1443 = vmatprep.subr.bf16.mxu0 0
        %1444 = vmatpush1.bf16.msra.mxu0 0
        %1445 = vmatprep.subr.bf16.mxu0 0
        %1446 = vmatpush1.bf16.msra.mxu0 0
        %1447 = vmatprep.subr.bf16.mxu0 0
        %1448 = vmatpush1.bf16.msra.mxu0 0
        %1449 = vmatprep.subr.bf16.mxu0 0
        %1450 = vmatpush1.bf16.msra.mxu0 0
        %1451 = vmatprep.mubr.bf16.mxu0 0
        %1452 = vmatmul.mubr.bf16.gmra.mrb[0].mxu0 %v1404
        %v1453 = vpop.f32.mrb[0].mxu0
        %v1454 = vadd.f32 %v1288, %v1453
        %v1455 = vpop.f32.mrb[0].mxu0
        %v1456 = vadd.f32 %v1288, %v1455
        %v1457 = vpop.f32.mrb[0].mxu0
        %v1458 = vpop.f32.mrb[0].mxu0
        %1459 = vdwg.mxu0
        %1460 = vmatprep.subr.bf16.mxu0 %v1369
        %1461 = vmatpush1.bf16.msra.mxu0 %v1368
        %1462 = vmatprep.subr.bf16.mxu0 %v1373
        %1463 = vmatpush1.bf16.msra.mxu0 %v1372
        %1464 = vmatprep.subr.bf16.mxu0 %v1377
        %1465 = vmatpush1.bf16.msra.mxu0 %v1376
        %1466 = vmatprep.subr.bf16.mxu0 %v1381
        %1467 = vmatpush1.bf16.msra.mxu0 %v1380
        %1468 = vmatprep.subr.bf16.mxu0 %v1417
        %1469 = vmatpush1.bf16.msra.mxu0 %v1414
        %1470 = vmatprep.subr.bf16.mxu0 0
        %1471 = vmatpush1.bf16.msra.mxu0 0
        %1472 = vmatprep.subr.bf16.mxu0 0
        %1473 = vmatpush1.bf16.msra.mxu0 0
        %1474 = vmatprep.subr.bf16.mxu0 0
        %1475 = vmatpush1.bf16.msra.mxu0 0
        %1476 = vmatprep.subr.bf16.mxu0 0
        %1477 = vmatpush1.bf16.msra.mxu0 0
        %1478 = vmatprep.subr.bf16.mxu0 0
        %1479 = vmatpush1.bf16.msra.mxu0 0
        %1480 = vmatprep.subr.bf16.mxu0 0
        %1481 = vmatpush1.bf16.msra.mxu0 0
        %1482 = vmatprep.subr.bf16.mxu0 0
        %1483 = vmatpush1.bf16.msra.mxu0 0
        %1484 = vmatprep.subr.bf16.mxu0 0
        %1485 = vmatpush1.bf16.msra.mxu0 0
        %1486 = vmatprep.subr.bf16.mxu0 0
        %1487 = vmatpush1.bf16.msra.mxu0 0
        %1488 = vmatprep.subr.bf16.mxu0 0
        %1489 = vmatpush1.bf16.msra.mxu0 0
        %1490 = vmatprep.subr.bf16.mxu0 0
        %1491 = vmatpush1.bf16.msra.mxu0 0
        %1492 = vmatprep.mubr.bf16.mxu0 0
        %1493 = vmatmul.mubr.bf16.gmra.mrb[0].mxu0 %v1404
        %v1494 = vpop.f32.mrb[0].mxu0
        %v1495 = vadd.f32 %v1288, %v1494
        %v1496 = vpop.f32.mrb[0].mxu0
        %v1497 = vadd.f32 %v1288, %v1496
        %v1498 = vpop.f32.mrb[0].mxu0
        %v1499 = vpop.f32.mrb[0].mxu0
        %1500 = vdwg.mxu0
        %v1501 = vmax.f32 %v1454, 0.0
        %v1502 = vmax.f32 %v1456, 0.0
        %v1503 = vmax.f32 %v1495, 0.0
        %v1504 = vmax.f32 %v1497, 0.0
        %1505 = vset.pattern.permute.xlu0 1
        %1506 = vperm.xlu0 %1505, %v1284
        %v1507 = vpop.permute.xlu0 %1506
        %v1509 = vmul.f32 %v1501, %v1507
        %v1510 = vmul.f32 %v1502, %v1507
        %v1511 = vmul.f32 %v1503, %v1507
        %v1512 = vmul.f32 %v1504, %v1507
        %1513 = vset.pattern.permute.xlu0 2
        %1514 = vperm.xlu0 %1513, %v1284
        %v1515 = vpop.permute.xlu0 %1514
        %v1517 = vadd.f32 %v1509, %v1515
        %v1518 = vadd.f32 %v1510, %v1515
        %v1519 = vadd.f32 %v1511, %v1515
        %v1520 = vadd.f32 %v1512, %v1515
        %1521 = vst [vmem:[#allocation2 + $0x8] sm:$0xff] %v1517
        %1522 = vst [vmem:[#allocation2 + $0x10] sm:$0xff] %v1518
        %1523 = vst [vmem:[#allocation2 + $0x18] sm:$0xff] %v1519
        %1524 = vst [vmem:[#allocation2 + $0x20] sm:$0xff] %v1520
        %v1525 = vld [vmem:[%s13] sm:$0xff]
        %v1526 = vld [vmem:[%s13 + $0x8] sm:$0xff]
        %v1527 = vld [vmem:[%s13 + $0x10] sm:$0xff]
        %v1528 = vld [vmem:[%s13 + $0x18] sm:$0xff]
        %v1529 = vld [vmem:[%s13 + $0x20] sm:$0x1]
        %v1530 = vld [vmem:[%s13 + $0x28] sm:$0x1]
        %v1531 = vld [vmem:[%s13 + $0x30] sm:$0x1]
        %v1532 = vld [vmem:[%s13 + $0x38] sm:$0x1]
        %v1533 = vld [vmem:[#allocation2] sm:$0xff]
        %v1534 = vld [vmem:[#allocation2 + $0x8] sm:$0xff]
        %v1535 = vld [vmem:[#allocation2 + $0x10] sm:$0xff]
        %v1536 = vld [vmem:[#allocation2 + $0x18] sm:$0xff]
        %v1537 = vld [vmem:[#allocation2 + $0x20] sm:$0xff]
        %v1538 = vlaneseq
        %v1539 = vshrl.u32 %v1538, 7
        %v1540 = vsub.s32 0, %v1539
        %v1541 = vrot.slane %v1525, %v1540
        %v1542 = vlaneseq
        %v1543 = vshrl.u32 %v1542, 7
        %v1544 = vsub.s32 0, %v1543
        %v1545 = vrot.slane %v1526, %v1544
        %v1546 = vlaneseq
        %v1547 = vshrl.u32 %v1546, 7
        %v1548 = vsub.s32 0, %v1547
        %v1549 = vrot.slane %v1527, %v1548
        %v1550 = vlaneseq
        %v1551 = vshrl.u32 %v1550, 7
        %v1552 = vsub.s32 0, %v1551
        %v1553 = vrot.slane %v1528, %v1552
        %1558 = vrot.lane.b32.xlu0 %v1541, 111
        %v1559 = vpop.permute.xlu0 %1558
        %1560 = vrot.lane.b32.xlu0 %v1545, 111
        %v1561 = vpop.permute.xlu0 %1560
        %1562 = vrot.lane.b32.xlu0 %v1549, 111
        %v1563 = vpop.permute.xlu0 %1562
        %1564 = vrot.lane.b32.xlu0 %v1553, 111
        %v1565 = vpop.permute.xlu0 %1564
        %v1566 = vsel %vm756, %v1559, %v1561
        %v1567 = vsel %vm756, %v1561, %v1563
        %v1568 = vsel %vm756, %v1563, %v1565
        %v1574 = vmul.f32 %v1533, %v1559
        %v1575 = vmul.f32 %v1534, %v1566
        %v1576 = vmul.f32 %v1535, %v1567
        %v1577 = vmul.f32 %v1536, %v1568
        %v1578 = vmul.f32 %v1537, %v1565
        %v1579 = vlaneseq
        %v1580 = vshrl.u32 %v1579, 7
        %v1581 = vsub.s32 1, %v1580
        %v1582 = vrot.slane %v1525, %v1581
        %v1583 = vlaneseq
        %v1584 = vshrl.u32 %v1583, 7
        %v1585 = vsub.s32 1, %v1584
        %v1586 = vrot.slane %v1526, %v1585
        %v1587 = vlaneseq
        %v1588 = vshrl.u32 %v1587, 7
        %v1589 = vsub.s32 1, %v1588
        %v1590 = vrot.slane %v1527, %v1589
        %v1591 = vlaneseq
        %v1592 = vshrl.u32 %v1591, 7
        %v1593 = vsub.s32 1, %v1592
        %v1594 = vrot.slane %v1528, %v1593
        %1599 = vrot.lane.b32.xlu0 %v1582, 112
        %v1600 = vpop.permute.xlu0 %1599
        %1601 = vrot.lane.b32.xlu0 %v1586, 112
        %v1602 = vpop.permute.xlu0 %1601
        %1603 = vrot.lane.b32.xlu0 %v1590, 112
        %v1604 = vpop.permute.xlu0 %1603
        %1605 = vrot.lane.b32.xlu0 %v1594, 112
        %v1606 = vpop.permute.xlu0 %1605
        %v1607 = vsel %vm798, %v1600, %v1602
        %v1608 = vsel %vm798, %v1602, %v1604
        %v1609 = vsel %vm798, %v1604, %v1606
        %v1615 = vmul.f32 %v1533, %v1600
        %v1616 = vmul.f32 %v1534, %v1607
        %v1617 = vmul.f32 %v1535, %v1608
        %v1618 = vmul.f32 %v1536, %v1609
        %v1619 = vmul.f32 %v1537, %v1606
        %v1620 = vlaneseq
        %v1621 = vshrl.u32 %v1620, 7
        %v1622 = vsub.s32 2, %v1621
        %v1623 = vrot.slane %v1525, %v1622
        %v1624 = vlaneseq
        %v1625 = vshrl.u32 %v1624, 7
        %v1626 = vsub.s32 2, %v1625
        %v1627 = vrot.slane %v1526, %v1626
        %v1628 = vlaneseq
        %v1629 = vshrl.u32 %v1628, 7
        %v1630 = vsub.s32 2, %v1629
        %v1631 = vrot.slane %v1527, %v1630
        %v1632 = vlaneseq
        %v1633 = vshrl.u32 %v1632, 7
        %v1634 = vsub.s32 2, %v1633
        %v1635 = vrot.slane %v1528, %v1634
        %1640 = vrot.lane.b32.xlu0 %v1623, 113
        %v1641 = vpop.permute.xlu0 %1640
        %1642 = vrot.lane.b32.xlu0 %v1627, 113
        %v1643 = vpop.permute.xlu0 %1642
        %1644 = vrot.lane.b32.xlu0 %v1631, 113
        %v1645 = vpop.permute.xlu0 %1644
        %1646 = vrot.lane.b32.xlu0 %v1635, 113
        %v1647 = vpop.permute.xlu0 %1646
        %v1648 = vsel %vm840, %v1641, %v1643
        %v1649 = vsel %vm840, %v1643, %v1645
        %v1650 = vsel %vm840, %v1645, %v1647
        %v1656 = vmul.f32 %v1533, %v1641
        %v1657 = vmul.f32 %v1534, %v1648
        %v1658 = vmul.f32 %v1535, %v1649
        %v1659 = vmul.f32 %v1536, %v1650
        %v1660 = vmul.f32 %v1537, %v1647
        %v1661 = vlaneseq
        %v1662 = vshrl.u32 %v1661, 7
        %v1663 = vsub.s32 3, %v1662
        %v1664 = vrot.slane %v1525, %v1663
        %v1665 = vlaneseq
        %v1666 = vshrl.u32 %v1665, 7
        %v1667 = vsub.s32 3, %v1666
        %v1668 = vrot.slane %v1526, %v1667
        %v1669 = vlaneseq
        %v1670 = vshrl.u32 %v1669, 7
        %v1671 = vsub.s32 3, %v1670
        %v1672 = vrot.slane %v1527, %v1671
        %v1673 = vlaneseq
        %v1674 = vshrl.u32 %v1673, 7
        %v1675 = vsub.s32 3, %v1674
        %v1676 = vrot.slane %v1528, %v1675
        %1681 = vrot.lane.b32.xlu0 %v1664, 127
        %v1682 = vpop.permute.xlu0 %1681
        %1683 = vrot.lane.b32.xlu0 %v1668, 127
        %v1684 = vpop.permute.xlu0 %1683
        %1685 = vrot.lane.b32.xlu0 %v1672, 127
        %v1686 = vpop.permute.xlu0 %1685
        %1687 = vrot.lane.b32.xlu0 %v1676, 127
        %v1688 = vpop.permute.xlu0 %1687
        %v1689 = vsel %vm882, %v1682, %v1684
        %v1690 = vsel %vm882, %v1684, %v1686
        %v1691 = vsel %vm882, %v1686, %v1688
        %v1697 = vmul.f32 %v1533, %v1682
        %v1698 = vmul.f32 %v1534, %v1689
        %v1699 = vmul.f32 %v1535, %v1690
        %v1700 = vmul.f32 %v1536, %v1691
        %v1701 = vmul.f32 %v1537, %v1688
        %v1702 = vld [vmem:[#allocation2 + $0x28] sm:$0xff]
        %v1703 = vlaneseq
        %v1704 = vshrl.u32 %v1703, 7
        %v1705 = vsub.s32 5, %v1704
        %v1706 = vrot.slane %v1525, %v1705
        %v1707 = vlaneseq
        %v1708 = vshrl.u32 %v1707, 7
        %v1709 = vsub.s32 5, %v1708
        %v1710 = vrot.slane %v1526, %v1709
        %v1711 = vlaneseq
        %v1712 = vshrl.u32 %v1711, 7
        %v1713 = vsub.s32 5, %v1712
        %v1714 = vrot.slane %v1527, %v1713
        %v1715 = vlaneseq
        %v1716 = vshrl.u32 %v1715, 7
        %v1717 = vsub.s32 5, %v1716
        %v1718 = vrot.slane %v1528, %v1717
        %1723 = vrot.lane.b32.xlu0 %v1706, 1
        %v1724 = vpop.permute.xlu0 %1723
        %1725 = vrot.lane.b32.xlu0 %v1710, 1
        %v1726 = vpop.permute.xlu0 %1725
        %1727 = vrot.lane.b32.xlu0 %v1714, 1
        %v1728 = vpop.permute.xlu0 %1727
        %1729 = vrot.lane.b32.xlu0 %v1718, 1
        %v1730 = vpop.permute.xlu0 %1729
        %v1731 = vsel %vm925, %v1724, %v1726
        %v1732 = vsel %vm925, %v1726, %v1728
        %v1733 = vsel %vm925, %v1728, %v1730
        %v1739 = vmul.f32 %v1534, %v1724
        %v1740 = vmul.f32 %v1535, %v1731
        %v1741 = vmul.f32 %v1536, %v1732
        %v1742 = vmul.f32 %v1537, %v1733
        %v1743 = vmul.f32 %v1702, %v1730
        %v1744 = vlaneseq
        %v1745 = vshrl.u32 %v1744, 7
        %v1746 = vsub.s32 6, %v1745
        %v1747 = vrot.slane %v1525, %v1746
        %v1748 = vlaneseq
        %v1749 = vshrl.u32 %v1748, 7
        %v1750 = vsub.s32 6, %v1749
        %v1751 = vrot.slane %v1526, %v1750
        %v1752 = vlaneseq
        %v1753 = vshrl.u32 %v1752, 7
        %v1754 = vsub.s32 6, %v1753
        %v1755 = vrot.slane %v1527, %v1754
        %v1756 = vlaneseq
        %v1757 = vshrl.u32 %v1756, 7
        %v1758 = vsub.s32 6, %v1757
        %v1759 = vrot.slane %v1528, %v1758
        %1764 = vrot.lane.b32.xlu0 %v1747, 15
        %v1765 = vpop.permute.xlu0 %1764
        %1766 = vrot.lane.b32.xlu0 %v1751, 15
        %v1767 = vpop.permute.xlu0 %1766
        %1768 = vrot.lane.b32.xlu0 %v1755, 15
        %v1769 = vpop.permute.xlu0 %1768
        %1770 = vrot.lane.b32.xlu0 %v1759, 15
        %v1771 = vpop.permute.xlu0 %1770
        %v1772 = vsel %vm967, %v1765, %v1767
        %v1773 = vsel %vm967, %v1767, %v1769
        %v1774 = vsel %vm967, %v1769, %v1771
        %v1780 = vmul.f32 %v1534, %v1765
        %v1781 = vmul.f32 %v1535, %v1772
        %v1782 = vmul.f32 %v1536, %v1773
        %v1783 = vmul.f32 %v1537, %v1774
        %v1784 = vmul.f32 %v1702, %v1771
        %v1785 = vlaneseq
        %v1786 = vshrl.u32 %v1785, 7
        %v1787 = vsub.s32 7, %v1786
        %v1788 = vrot.slane %v1525, %v1787
        %v1789 = vlaneseq
        %v1790 = vshrl.u32 %v1789, 7
        %v1791 = vsub.s32 7, %v1790
        %v1792 = vrot.slane %v1526, %v1791
        %v1793 = vlaneseq
        %v1794 = vshrl.u32 %v1793, 7
        %v1795 = vsub.s32 7, %v1794
        %v1796 = vrot.slane %v1527, %v1795
        %v1797 = vlaneseq
        %v1798 = vshrl.u32 %v1797, 7
        %v1799 = vsub.s32 7, %v1798
        %v1800 = vrot.slane %v1528, %v1799
        %1805 = vrot.lane.b32.xlu0 %v1788, 16
        %v1806 = vpop.permute.xlu0 %1805
        %1807 = vrot.lane.b32.xlu0 %v1792, 16
        %v1808 = vpop.permute.xlu0 %1807
        %1809 = vrot.lane.b32.xlu0 %v1796, 16
        %v1810 = vpop.permute.xlu0 %1809
        %1811 = vrot.lane.b32.xlu0 %v1800, 16
        %v1812 = vpop.permute.xlu0 %1811
        %v1813 = vsel %vm1009, %v1806, %v1808
        %v1814 = vsel %vm1009, %v1808, %v1810
        %v1815 = vsel %vm1009, %v1810, %v1812
        %v1821 = vmul.f32 %v1534, %v1806
        %v1822 = vmul.f32 %v1535, %v1813
        %v1823 = vmul.f32 %v1536, %v1814
        %v1824 = vmul.f32 %v1537, %v1815
        %v1825 = vmul.f32 %v1702, %v1812
        %v1826 = vlaneseq
        %v1827 = vshrl.u32 %v1826, 7
        %v1828 = vsub.s32 0, %v1827
        %v1829 = vrot.slane %v1529, %v1828
        %v1830 = vlaneseq
        %v1831 = vshrl.u32 %v1830, 7
        %v1832 = vsub.s32 0, %v1831
        %v1833 = vrot.slane %v1530, %v1832
        %v1834 = vlaneseq
        %v1835 = vshrl.u32 %v1834, 7
        %v1836 = vsub.s32 0, %v1835
        %v1837 = vrot.slane %v1531, %v1836
        %v1838 = vlaneseq
        %v1839 = vshrl.u32 %v1838, 7
        %v1840 = vsub.s32 0, %v1839
        %v1841 = vrot.slane %v1532, %v1840
        %1846 = vrot.lane.b32.xlu0 %v1829, 17
        %v1847 = vpop.permute.xlu0 %1846
        %1848 = vrot.lane.b32.xlu0 %v1833, 17
        %v1849 = vpop.permute.xlu0 %1848
        %1850 = vrot.lane.b32.xlu0 %v1837, 17
        %v1851 = vpop.permute.xlu0 %1850
        %1852 = vrot.lane.b32.xlu0 %v1841, 17
        %v1853 = vpop.permute.xlu0 %1852
        %v1854 = vsel %vm1051, %v1847, %v1849
        %v1855 = vsel %vm1051, %v1849, %v1851
        %v1856 = vsel %vm1051, %v1851, %v1853
        %v1862 = vmul.f32 %v1534, %v1847
        %v1863 = vmul.f32 %v1535, %v1854
        %v1864 = vmul.f32 %v1536, %v1855
        %v1865 = vmul.f32 %v1537, %v1856
        %v1866 = vmul.f32 %v1702, %v1853
        %1872 = vrot.lane.b32.xlu0 %v1615, 127
        %v1873 = vpop.permute.xlu0 %1872
        %1874 = vrot.lane.b32.xlu0 %v1616, 127
        %v1875 = vpop.permute.xlu0 %1874
        %1876 = vrot.lane.b32.xlu0 %v1617, 127
        %v1877 = vpop.permute.xlu0 %1876
        %1878 = vrot.lane.b32.xlu0 %v1618, 127
        %v1879 = vpop.permute.xlu0 %1878
        %1880 = vrot.lane.b32.xlu0 %v1619, 127
        %v1881 = vpop.permute.xlu0 %1880
        %v1882 = vsel %vm882, %v1873, %v1875
        %v1883 = vsel %vm882, %v1875, %v1877
        %v1884 = vsel %vm882, %v1877, %v1879
        %v1885 = vsel %vm882, %v1879, %v1881
        %1896 = vrot.lane.b32.xlu0 %v1656, 126
        %v1897 = vpop.permute.xlu0 %1896
        %1898 = vrot.lane.b32.xlu0 %v1657, 126
        %v1899 = vpop.permute.xlu0 %1898
        %1900 = vrot.lane.b32.xlu0 %v1658, 126
        %v1901 = vpop.permute.xlu0 %1900
        %1902 = vrot.lane.b32.xlu0 %v1659, 126
        %v1903 = vpop.permute.xlu0 %1902
        %1904 = vrot.lane.b32.xlu0 %v1660, 126
        %v1905 = vpop.permute.xlu0 %1904
        %v1906 = vsel %vm1104, %v1897, %v1899
        %v1907 = vsel %vm1104, %v1899, %v1901
        %v1908 = vsel %vm1104, %v1901, %v1903
        %v1909 = vsel %vm1104, %v1903, %v1905
        %1920 = vrot.lane.b32.xlu0 %v1697, 112
        %v1921 = vpop.permute.xlu0 %1920
        %1922 = vrot.lane.b32.xlu0 %v1698, 112
        %v1923 = vpop.permute.xlu0 %1922
        %1924 = vrot.lane.b32.xlu0 %v1699, 112
        %v1925 = vpop.permute.xlu0 %1924
        %1926 = vrot.lane.b32.xlu0 %v1700, 112
        %v1927 = vpop.permute.xlu0 %1926
        %1928 = vrot.lane.b32.xlu0 %v1701, 112
        %v1929 = vpop.permute.xlu0 %1928
        %v1930 = vsel %vm798, %v1921, %v1923
        %v1931 = vsel %vm798, %v1923, %v1925
        %v1932 = vsel %vm798, %v1925, %v1927
        %v1933 = vsel %vm798, %v1927, %v1929
        %1943 = vrot.lane.b32.xlu0 %v1517, 111
        %v1944 = vpop.permute.xlu0 %1943
        %1945 = vrot.lane.b32.xlu0 %v1518, 111
        %v1946 = vpop.permute.xlu0 %1945
        %1947 = vrot.lane.b32.xlu0 %v1519, 111
        %v1948 = vpop.permute.xlu0 %1947
        %1949 = vrot.lane.b32.xlu0 %v1520, 111
        %v1950 = vpop.permute.xlu0 %1949
        %v1951 = vsel %vm756, %v1944, %v1946
        %v1952 = vsel %vm756, %v1946, %v1948
        %v1953 = vsel %vm756, %v1948, %v1950
        %1964 = vrot.lane.b32.xlu0 %v1739, 110
        %v1965 = vpop.permute.xlu0 %1964
        %1966 = vrot.lane.b32.xlu0 %v1740, 110
        %v1967 = vpop.permute.xlu0 %1966
        %1968 = vrot.lane.b32.xlu0 %v1741, 110
        %v1969 = vpop.permute.xlu0 %1968
        %1970 = vrot.lane.b32.xlu0 %v1742, 110
        %v1971 = vpop.permute.xlu0 %1970
        %1972 = vrot.lane.b32.xlu0 %v1743, 110
        %v1973 = vpop.permute.xlu0 %1972
        %v1974 = vsel %vm1173, %v1965, %v1967
        %v1975 = vsel %vm1173, %v1967, %v1969
        %v1976 = vsel %vm1173, %v1969, %v1971
        %v1977 = vsel %vm1173, %v1971, %v1973
        %1988 = vrot.lane.b32.xlu0 %v1780, 96
        %v1989 = vpop.permute.xlu0 %1988
        %1990 = vrot.lane.b32.xlu0 %v1781, 96
        %v1991 = vpop.permute.xlu0 %1990
        %1992 = vrot.lane.b32.xlu0 %v1782, 96
        %v1993 = vpop.permute.xlu0 %1992
        %1994 = vrot.lane.b32.xlu0 %v1783, 96
        %v1995 = vpop.permute.xlu0 %1994
        %1996 = vrot.lane.b32.xlu0 %v1784, 96
        %v1997 = vpop.permute.xlu0 %1996
        %v1998 = vsel %vm1198, %v1989, %v1991
        %v1999 = vsel %vm1198, %v1991, %v1993
        %v2000 = vsel %vm1198, %v1993, %v1995
        %v2001 = vsel %vm1198, %v1995, %v1997
        %2012 = vrot.lane.b32.xlu0 %v1821, 95
        %v2013 = vpop.permute.xlu0 %2012
        %2014 = vrot.lane.b32.xlu0 %v1822, 95
        %v2015 = vpop.permute.xlu0 %2014
        %2016 = vrot.lane.b32.xlu0 %v1823, 95
        %v2017 = vpop.permute.xlu0 %2016
        %2018 = vrot.lane.b32.xlu0 %v1824, 95
        %v2019 = vpop.permute.xlu0 %2018
        %2020 = vrot.lane.b32.xlu0 %v1825, 95
        %v2021 = vpop.permute.xlu0 %2020
        %v2022 = vsel %vm1223, %v2013, %v2015
        %v2023 = vsel %vm1223, %v2015, %v2017
        %v2024 = vsel %vm1223, %v2017, %v2019
        %v2025 = vsel %vm1223, %v2019, %v2021
        %2036 = vrot.lane.b32.xlu0 %v1862, 94
        %v2037 = vpop.permute.xlu0 %2036
        %2038 = vrot.lane.b32.xlu0 %v1863, 94
        %v2039 = vpop.permute.xlu0 %2038
        %2040 = vrot.lane.b32.xlu0 %v1864, 94
        %v2041 = vpop.permute.xlu0 %2040
        %2042 = vrot.lane.b32.xlu0 %v1865, 94
        %v2043 = vpop.permute.xlu0 %2042
        %2044 = vrot.lane.b32.xlu0 %v1866, 94
        %v2045 = vpop.permute.xlu0 %2044
        %v2046 = vsel %vm1248, %v2037, %v2039
        %v2047 = vsel %vm1248, %v2039, %v2041
        %v2048 = vsel %vm1248, %v2041, %v2043
        %v2049 = vsel %vm1248, %v2043, %v2045
        %v2055 = vpack.c.bf16 %v1882, %v1574
        %v2056 = vpack.c.bf16 %v1883, %v1575
        %v2057 = vpack.c.bf16 %v1884, %v1576
        %v2058 = vpack.c.bf16 %v1885, %v1577
        %v2059 = vpack.c.bf16 %v1881, %v1578
        %v2060 = vpack.c.bf16 %v1930, %v1906
        %v2061 = vpack.c.bf16 %v1931, %v1907
        %v2062 = vpack.c.bf16 %v1932, %v1908
        %v2063 = vpack.c.bf16 %v1933, %v1909
        %v2064 = vpack.c.bf16 %v1929, %v1905
        %v2065 = vpack.c.bf16 %v1965, %v1944
        %v2066 = vpack.c.bf16 %v1974, %v1951
        %v2067 = vpack.c.bf16 %v1975, %v1952
        %v2068 = vpack.c.bf16 %v1976, %v1953
        %v2069 = vpack.c.bf16 %v1977, %v1950
        %v2070 = vpack.c.bf16 %v2013, %v1989
        %v2071 = vpack.c.bf16 %v2022, %v1998
        %v2072 = vpack.c.bf16 %v2023, %v1999
        %v2073 = vpack.c.bf16 %v2024, %v2000
        %v2074 = vpack.c.bf16 %v2025, %v2001
        %v2075 = vpack.c.bf16 %v2037, %v2037
        %v2076 = vpack.c.bf16 %v2046, %v2046
        %v2077 = vpack.c.bf16 %v2047, %v2047
        %v2078 = vpack.c.bf16 %v2048, %v2048
        %v2079 = vpack.c.bf16 %v2049, %v2049
        %v2080 = vld [vmem:[%s3] sm:$0xf]
        %v2081 = vld [vmem:[%s4] sm:$0xff]
        %2083 = vset.pattern.permute.xlu0 0
        %2084 = vperm.xlu0 %2083, %v2081
        %v2085 = vpop.permute.xlu0 %2084
        %2112 = vrot.lane.b32.xlu0 %v2055, 17
        %v2113 = vpop.permute.xlu0 %2112
        %2114 = vrot.lane.b32.xlu0 %v2056, 17
        %v2115 = vpop.permute.xlu0 %2114
        %2116 = vrot.lane.b32.xlu0 %v2057, 17
        %v2117 = vpop.permute.xlu0 %2116
        %2118 = vrot.lane.b32.xlu0 %v2058, 17
        %v2119 = vpop.permute.xlu0 %2118
        %2120 = vrot.lane.b32.xlu0 %v2059, 17
        %v2121 = vpop.permute.xlu0 %2120
        %2122 = vrot.lane.b32.xlu0 %v2060, 17
        %v2123 = vpop.permute.xlu0 %2122
        %2124 = vrot.lane.b32.xlu0 %v2061, 17
        %v2125 = vpop.permute.xlu0 %2124
        %2126 = vrot.lane.b32.xlu0 %v2062, 17
        %v2127 = vpop.permute.xlu0 %2126
        %2128 = vrot.lane.b32.xlu0 %v2063, 17
        %v2129 = vpop.permute.xlu0 %2128
        %2130 = vrot.lane.b32.xlu0 %v2064, 17
        %v2131 = vpop.permute.xlu0 %2130
        %2132 = vrot.lane.b32.xlu0 %v2065, 17
        %v2133 = vpop.permute.xlu0 %2132
        %2134 = vrot.lane.b32.xlu0 %v2066, 17
        %v2135 = vpop.permute.xlu0 %2134
        %2136 = vrot.lane.b32.xlu0 %v2067, 17
        %v2137 = vpop.permute.xlu0 %2136
        %2138 = vrot.lane.b32.xlu0 %v2068, 17
        %v2139 = vpop.permute.xlu0 %2138
        %2140 = vrot.lane.b32.xlu0 %v2069, 17
        %v2141 = vpop.permute.xlu0 %2140
        %2142 = vrot.lane.b32.xlu0 %v2070, 17
        %v2143 = vpop.permute.xlu0 %2142
        %2144 = vrot.lane.b32.xlu0 %v2071, 17
        %v2145 = vpop.permute.xlu0 %2144
        %2146 = vrot.lane.b32.xlu0 %v2072, 17
        %v2147 = vpop.permute.xlu0 %2146
        %2148 = vrot.lane.b32.xlu0 %v2073, 17
        %v2149 = vpop.permute.xlu0 %2148
        %2150 = vrot.lane.b32.xlu0 %v2074, 17
        %v2151 = vpop.permute.xlu0 %2150
        %2152 = vrot.lane.b32.xlu0 %v2075, 17
        %v2153 = vpop.permute.xlu0 %2152
        %2154 = vrot.lane.b32.xlu0 %v2076, 17
        %v2155 = vpop.permute.xlu0 %2154
        %2156 = vrot.lane.b32.xlu0 %v2077, 17
        %v2157 = vpop.permute.xlu0 %2156
        %2158 = vrot.lane.b32.xlu0 %v2078, 17
        %v2159 = vpop.permute.xlu0 %2158
        %2160 = vrot.lane.b32.xlu0 %v2079, 17
        %v2161 = vpop.permute.xlu0 %2160
        %v2162 = vsel %vm1365, %v2113, %v2115
        %v2163 = vsel %vm1365, %v2115, %v2117
        %v2164 = vsel %vm1365, %v2117, %v2119
        %v2165 = vsel %vm1365, %v2119, %v2121
        %v2166 = vsel %vm1365, %v2123, %v2125
        %v2167 = vsel %vm1365, %v2125, %v2127
        %v2168 = vsel %vm1365, %v2127, %v2129
        %v2169 = vsel %vm1365, %v2129, %v2131
        %v2170 = vsel %vm1365, %v2133, %v2135
        %v2171 = vsel %vm1365, %v2135, %v2137
        %v2172 = vsel %vm1365, %v2137, %v2139
        %v2173 = vsel %vm1365, %v2139, %v2141
        %v2174 = vsel %vm1365, %v2143, %v2145
        %v2175 = vsel %vm1365, %v2145, %v2147
        %v2176 = vsel %vm1365, %v2147, %v2149
        %v2177 = vsel %vm1365, %v2149, %v2151
        %v2178 = vsel %vm1365, %v2153, %v2155
        %v2179 = vsel %vm1365, %v2155, %v2157
        %v2180 = vsel %vm1365, %v2157, %v2159
        %v2181 = vsel %vm1365, %v2159, %v2161
        %v2199 = vsel %vm1402, %v2080, 0
        %v2202 = vsel %vm1406, %v2178, 0
        %v2205 = vsel %vm1406, %v2179, 0
        %v2208 = vsel %vm1406, %v2180, 0
        %v2211 = vsel %vm1406, %v2181, 0
        %2213 = vmatprep.subr.bf16.mxu0 %v2163
        %2214 = vmatpush1.bf16.msra.mxu0 %v2162
        %2215 = vmatprep.subr.bf16.mxu0 %v2167
        %2216 = vmatpush1.bf16.msra.mxu0 %v2166
        %2217 = vmatprep.subr.bf16.mxu0 %v2171
        %2218 = vmatpush1.bf16.msra.mxu0 %v2170
        %2219 = vmatprep.subr.bf16.mxu0 %v2175
        %2220 = vmatpush1.bf16.msra.mxu0 %v2174
        %2221 = vmatprep.subr.bf16.mxu0 %v2205
        %2222 = vmatpush1.bf16.msra.mxu0 %v2202
        %2223 = vmatprep.subr.bf16.mxu0 0
        %2224 = vmatpush1.bf16.msra.mxu0 0
        %2225 = vmatprep.subr.bf16.mxu0 0
        %2226 = vmatpush1.bf16.msra.mxu0 0
        %2227 = vmatprep.subr.bf16.mxu0 0
        %2228 = vmatpush1.bf16.msra.mxu0 0
        %2229 = vmatprep.subr.bf16.mxu0 0
        %2230 = vmatpush1.bf16.msra.mxu0 0
        %2231 = vmatprep.subr.bf16.mxu0 0
        %2232 = vmatpush1.bf16.msra.mxu0 0
        %2233 = vmatprep.subr.bf16.mxu0 0
        %2234 = vmatpush1.bf16.msra.mxu0 0
        %2235 = vmatprep.subr.bf16.mxu0 0
        %2236 = vmatpush1.bf16.msra.mxu0 0
        %2237 = vmatprep.subr.bf16.mxu0 0
        %2238 = vmatpush1.bf16.msra.mxu0 0
        %2239 = vmatprep.subr.bf16.mxu0 0
        %2240 = vmatpush1.bf16.msra.mxu0 0
        %2241 = vmatprep.subr.bf16.mxu0 0
        %2242 = vmatpush1.bf16.msra.mxu0 0
        %2243 = vmatprep.subr.bf16.mxu0 0
        %2244 = vmatpush1.bf16.msra.mxu0 0
        %2245 = vmatprep.mubr.bf16.mxu0 0
        %2246 = vmatmul.mubr.bf16.gmra.mrb[0].mxu0 %v2199
        %v2247 = vpop.f32.mrb[0].mxu0
        %v2248 = vadd.f32 %v2085, %v2247
        %v2249 = vpop.f32.mrb[0].mxu0
        %v2250 = vadd.f32 %v2085, %v2249
        %v2251 = vpop.f32.mrb[0].mxu0
        %v2252 = vpop.f32.mrb[0].mxu0
        %2253 = vdwg.mxu0
        %2254 = vmatprep.subr.bf16.mxu0 %v2165
        %2255 = vmatpush1.bf16.msra.mxu0 %v2164
        %2256 = vmatprep.subr.bf16.mxu0 %v2169
        %2257 = vmatpush1.bf16.msra.mxu0 %v2168
        %2258 = vmatprep.subr.bf16.mxu0 %v2173
        %2259 = vmatpush1.bf16.msra.mxu0 %v2172
        %2260 = vmatprep.subr.bf16.mxu0 %v2177
        %2261 = vmatpush1.bf16.msra.mxu0 %v2176
        %2262 = vmatprep.subr.bf16.mxu0 %v2211
        %2263 = vmatpush1.bf16.msra.mxu0 %v2208
        %2264 = vmatprep.subr.bf16.mxu0 0
        %2265 = vmatpush1.bf16.msra.mxu0 0
        %2266 = vmatprep.subr.bf16.mxu0 0
        %2267 = vmatpush1.bf16.msra.mxu0 0
        %2268 = vmatprep.subr.bf16.mxu0 0
        %2269 = vmatpush1.bf16.msra.mxu0 0
        %2270 = vmatprep.subr.bf16.mxu0 0
        %2271 = vmatpush1.bf16.msra.mxu0 0
        %2272 = vmatprep.subr.bf16.mxu0 0
        %2273 = vmatpush1.bf16.msra.mxu0 0
        %2274 = vmatprep.subr.bf16.mxu0 0
        %2275 = vmatpush1.bf16.msra.mxu0 0
        %2276 = vmatprep.subr.bf16.mxu0 0
        %2277 = vmatpush1.bf16.msra.mxu0 0
        %2278 = vmatprep.subr.bf16.mxu0 0
        %2279 = vmatpush1.bf16.msra.mxu0 0
        %2280 = vmatprep.subr.bf16.mxu0 0
        %2281 = vmatpush1.bf16.msra.mxu0 0
        %2282 = vmatprep.subr.bf16.mxu0 0
        %2283 = vmatpush1.bf16.msra.mxu0 0
        %2284 = vmatprep.subr.bf16.mxu0 0
        %2285 = vmatpush1.bf16.msra.mxu0 0
        %2286 = vmatprep.mubr.bf16.mxu0 0
        %2287 = vmatmul.mubr.bf16.gmra.mrb[0].mxu0 %v2199
        %v2288 = vpop.f32.mrb[0].mxu0
        %v2289 = vadd.f32 %v2085, %v2288
        %v2290 = vpop.f32.mrb[0].mxu0
        %v2291 = vadd.f32 %v2085, %v2290
        %v2292 = vpop.f32.mrb[0].mxu0
        %v2293 = vpop.f32.mrb[0].mxu0
        %2294 = vdwg.mxu0
        %v2295 = vmax.f32 %v2248, 0.0
        %v2296 = vmax.f32 %v2250, 0.0
        %v2297 = vmax.f32 %v2289, 0.0
        %v2298 = vmax.f32 %v2291, 0.0
        %2299 = vset.pattern.permute.xlu0 1
        %2300 = vperm.xlu0 %2299, %v2081
        %v2301 = vpop.permute.xlu0 %2300
        %v2303 = vmul.f32 %v2295, %v2301
        %v2304 = vmul.f32 %v2296, %v2301
        %v2305 = vmul.f32 %v2297, %v2301
        %v2306 = vmul.f32 %v2298, %v2301
        %2307 = vset.pattern.permute.xlu0 2
        %2308 = vperm.xlu0 %2307, %v2081
        %v2309 = vpop.permute.xlu0 %2308
        %v2311 = vadd.f32 %v2303, %v2309
        %v2312 = vadd.f32 %v2304, %v2309
        %v2313 = vadd.f32 %v2305, %v2309
        %v2314 = vadd.f32 %v2306, %v2309
        %2315 = vst [vmem:[#allocation2 + $0x8] sm:$0xff] %v2311
        %2316 = vst [vmem:[#allocation2 + $0x10] sm:$0xff] %v2312
        %2317 = vst [vmem:[#allocation2 + $0x18] sm:$0xff] %v2313
        %2318 = vst [vmem:[#allocation2 + $0x20] sm:$0xff] %v2314
        %v2319 = vld [vmem:[#allocation2 + $0x8] sm:$0xff]
        %v2320 = vld [vmem:[#allocation2 + $0x10] sm:$0xff]
        %v2321 = vld [vmem:[#allocation2 + $0x18] sm:$0xff]
        %v2322 = vld [vmem:[#allocation2 + $0x20] sm:$0xff]
        %v2323 = vld [vmem:[#allocation2 + $0x28] sm:$0xff]
        %2329 = vrot.lane.b32.xlu0 %v2319, 127
        %v2330 = vpop.permute.xlu0 %2329
        %2331 = vrot.lane.b32.xlu0 %v2320, 127
        %v2332 = vpop.permute.xlu0 %2331
        %2333 = vrot.lane.b32.xlu0 %v2321, 127
        %v2334 = vpop.permute.xlu0 %2333
        %2335 = vrot.lane.b32.xlu0 %v2322, 127
        %v2336 = vpop.permute.xlu0 %2335
        %2337 = vrot.lane.b32.xlu0 %v2323, 127
        %v2338 = vpop.permute.xlu0 %2337
        %v2339 = vsel %vm882, %v2330, %v2332
        %v2340 = vsel %vm882, %v2332, %v2334
        %v2341 = vsel %vm882, %v2334, %v2336
        %v2342 = vsel %vm882, %v2336, %v2338
        %v2347 = vmax.f32 %v2311, %v2339
        %v2348 = vmax.f32 %v2312, %v2340
        %v2349 = vmax.f32 %v2313, %v2341
        %v2350 = vmax.f32 %v2314, %v2342
        %v2352 = vmax.f32 %v2319, %v2339
        %v2353 = vmax.f32 %v2320, %v2340
        %v2354 = vmax.f32 %v2321, %v2341
        %v2355 = vmax.f32 %v2322, %v2342
        %v2356 = vmax.f32 %v2323, %v2338
        %2362 = vrot.lane.b32.xlu0 %v2352, 112
        %v2363 = vpop.permute.xlu0 %2362
        %2364 = vrot.lane.b32.xlu0 %v2353, 112
        %v2365 = vpop.permute.xlu0 %2364
        %2366 = vrot.lane.b32.xlu0 %v2354, 112
        %v2367 = vpop.permute.xlu0 %2366
        %2368 = vrot.lane.b32.xlu0 %v2355, 112
        %v2369 = vpop.permute.xlu0 %2368
        %2370 = vrot.lane.b32.xlu0 %v2356, 112
        %v2371 = vpop.permute.xlu0 %2370
        %v2372 = vsel %vm798, %v2363, %v2365
        %v2373 = vsel %vm798, %v2365, %v2367
        %v2374 = vsel %vm798, %v2367, %v2369
        %v2375 = vsel %vm798, %v2369, %v2371
        %v2380 = vmax.f32 %v2347, %v2372
        %v2381 = vmax.f32 %v2348, %v2373
        %v2382 = vmax.f32 %v2349, %v2374
        %v2383 = vmax.f32 %v2350, %v2375
        %v2384 = vpack.c.bf16 %v2380, %v2380
        %v2385 = vpack.c.bf16 %v2381, %v2381
        %v2386 = vpack.c.bf16 %v2382, %v2382
        %v2387 = vpack.c.bf16 %v2383, %v2383
        %v2388 = vld [vmem:[%s16] sm:$0xf]
        %v2389 = vld [vmem:[%s16 + $0x4] sm:$0xf]
        %v2390 = vld [vmem:[%s16 + $0x8] sm:$0xf]
        %v2391 = vld [vmem:[%s16 + $0xc] sm:$0xf]
        %v2392 = vld [vmem:[%s16 + $0x10] sm:$0xf]
        %v2393 = vld [vmem:[%s16 + $0x14] sm:$0xf]
        %v2394 = vld [vmem:[%s16 + $0x18] sm:$0xf]
        %v2395 = vld [vmem:[%s16 + $0x1c] sm:$0xf]
        %v2396 = vld [vmem:[%s16 + $0x20] sm:$0xf]
        %v2397 = vld [vmem:[%s16 + $0x24] sm:$0xf]
        %v2398 = vld [vmem:[%s16 + $0x28] sm:$0xf]
        %v2399 = vld [vmem:[%s16 + $0x2c] sm:$0xf]
        %v2400 = vld [vmem:[%s16 + $0x30] sm:$0xf]
        %v2401 = vld [vmem:[%s16 + $0x34] sm:$0xf]
        %v2402 = vld [vmem:[%s16 + $0x38] sm:$0xf]
        %v2403 = vld [vmem:[%s16 + $0x3c] sm:$0xf]
        %v2404 = vld [vmem:[%s16 + $0x40] sm:$0xf]
        %v2405 = vld [vmem:[%s16 + $0x44] sm:$0xf]
        %v2406 = vld [vmem:[%s16 + $0x48] sm:$0xf]
        %v2407 = vld [vmem:[%s16 + $0x4c] sm:$0xf]
        %v2408 = vld [vmem:[%s16 + $0x50] sm:$0xf]
        %v2409 = vld [vmem:[%s16 + $0x54] sm:$0xf]
        %v2410 = vld [vmem:[%s16 + $0x58] sm:$0xf]
        %v2411 = vld [vmem:[%s16 + $0x5c] sm:$0xf]
        %v2412 = vld [vmem:[%s16 + $0x60] sm:$0xf]
        %v2413 = vld [vmem:[%s16 + $0x64] sm:$0xf]
        %v2414 = vld [vmem:[%s16 + $0x68] sm:$0xf]
        %v2415 = vld [vmem:[%s16 + $0x6c] sm:$0xf]
        %v2416 = vld [vmem:[%s16 + $0x70] sm:$0xf]
        %v2417 = vld [vmem:[%s16 + $0x74] sm:$0xf]
        %v2418 = vld [vmem:[%s16 + $0x78] sm:$0xf]
        %v2419 = vld [vmem:[%s16 + $0x7c] sm:$0xf]
        %v2420 = vld [vmem:[%s16 + $0x80] sm:$0xf]
        %v2421 = vld [vmem:[%s16 + $0x84] sm:$0xf]
        %v2422 = vld [vmem:[%s16 + $0x88] sm:$0xf]
        %v2423 = vld [vmem:[%s16 + $0x8c] sm:$0xf]
        %v2424 = vld [vmem:[%s16 + $0x90] sm:$0xf]
        %v2425 = vld [vmem:[%s16 + $0x94] sm:$0xf]
        %v2426 = vld [vmem:[%s16 + $0x98] sm:$0xf]
        %v2427 = vld [vmem:[%s16 + $0x9c] sm:$0xf]
        %v2428 = vld [vmem:[%s16 + $0xa0] sm:$0xf]
        %v2429 = vld [vmem:[%s16 + $0xa4] sm:$0xf]
        %v2430 = vld [vmem:[%s16 + $0xa8] sm:$0xf]
        %v2431 = vld [vmem:[%s16 + $0xac] sm:$0xf]
        %v2432 = vld [vmem:[%s16 + $0xb0] sm:$0xf]
        %v2433 = vld [vmem:[%s16 + $0xb4] sm:$0xf]
        %v2434 = vld [vmem:[%s16 + $0xb8] sm:$0xf]
        %v2435 = vld [vmem:[%s16 + $0xbc] sm:$0xf]
        %v2436 = vld [vmem:[%s16 + $0xc0] sm:$0xf]
        %v2437 = vld [vmem:[%s16 + $0xc4] sm:$0xf]
        %v2438 = vld [vmem:[%s16 + $0xc8] sm:$0xf]
        %v2439 = vld [vmem:[%s16 + $0xcc] sm:$0xf]
        %v2440 = vld [vmem:[%s16 + $0xd0] sm:$0xf]
        %v2441 = vld [vmem:[%s16 + $0xd4] sm:$0xf]
        %v2442 = vld [vmem:[%s16 + $0xd8] sm:$0xf]
        %v2443 = vld [vmem:[%s16 + $0xdc] sm:$0xf]
        %v2444 = vld [vmem:[%s16 + $0xe0] sm:$0xf]
        %v2445 = vld [vmem:[%s16 + $0xe4] sm:$0xf]
        %v2446 = vld [vmem:[%s16 + $0xe8] sm:$0xf]
        %v2447 = vld [vmem:[%s16 + $0xec] sm:$0xf]
        %v2448 = vld [vmem:[%s16 + $0xf0] sm:$0xf]
        %v2449 = vld [vmem:[%s16 + $0xf4] sm:$0xf]
        %v2450 = vld [vmem:[%s16 + $0xf8] sm:$0xf]
        %v2451 = vld [vmem:[%s16 + $0xfc] sm:$0xf]
        %v2516 = vunpack.c.l.b16 %v2388
        %v2517 = vunpack.c.l.b16 %v2389
        %v2518 = vunpack.c.l.b16 %v2390
        %v2519 = vunpack.c.l.b16 %v2391
        %v2520 = vunpack.c.l.b16 %v2392
        %v2521 = vunpack.c.l.b16 %v2393
        %v2522 = vunpack.c.l.b16 %v2394
        %v2523 = vunpack.c.l.b16 %v2395
        %v2524 = vunpack.c.l.b16 %v2396
        %v2525 = vunpack.c.l.b16 %v2397
        %v2526 = vunpack.c.l.b16 %v2398
        %v2527 = vunpack.c.l.b16 %v2399
        %v2528 = vunpack.c.l.b16 %v2400
        %v2529 = vunpack.c.l.b16 %v2401
        %v2530 = vunpack.c.l.b16 %v2402
        %v2531 = vunpack.c.l.b16 %v2403
        %v2532 = vunpack.c.l.b16 %v2404
        %v2533 = vunpack.c.l.b16 %v2405
        %v2534 = vunpack.c.l.b16 %v2406
        %v2535 = vunpack.c.l.b16 %v2407
        %v2536 = vunpack.c.l.b16 %v2408
        %v2537 = vunpack.c.l.b16 %v2409
        %v2538 = vunpack.c.l.b16 %v2410
        %v2539 = vunpack.c.l.b16 %v2411
        %v2540 = vunpack.c.l.b16 %v2412
        %v2541 = vunpack.c.l.b16 %v2413
        %v2542 = vunpack.c.l.b16 %v2414
        %v2543 = vunpack.c.l.b16 %v2415
        %v2544 = vunpack.c.l.b16 %v2416
        %v2545 = vunpack.c.l.b16 %v2417
        %v2546 = vunpack.c.l.b16 %v2418
        %v2547 = vunpack.c.l.b16 %v2419
        %v2548 = vunpack.c.l.b16 %v2420
        %v2549 = vunpack.c.l.b16 %v2421
        %v2550 = vunpack.c.l.b16 %v2422
        %v2551 = vunpack.c.l.b16 %v2423
        %v2552 = vunpack.c.l.b16 %v2424
        %v2553 = vunpack.c.l.b16 %v2425
        %v2554 = vunpack.c.l.b16 %v2426
        %v2555 = vunpack.c.l.b16 %v2427
        %v2556 = vunpack.c.l.b16 %v2428
        %v2557 = vunpack.c.l.b16 %v2429
        %v2558 = vunpack.c.l.b16 %v2430
        %v2559 = vunpack.c.l.b16 %v2431
        %v2560 = vunpack.c.l.b16 %v2432
        %v2561 = vunpack.c.l.b16 %v2433
        %v2562 = vunpack.c.l.b16 %v2434
        %v2563 = vunpack.c.l.b16 %v2435
        %v2564 = vunpack.c.l.b16 %v2436
        %v2565 = vunpack.c.l.b16 %v2437
        %v2566 = vunpack.c.l.b16 %v2438
        %v2567 = vunpack.c.l.b16 %v2439
        %v2568 = vunpack.c.l.b16 %v2440
        %v2569 = vunpack.c.l.b16 %v2441
        %v2570 = vunpack.c.l.b16 %v2442
        %v2571 = vunpack.c.l.b16 %v2443
        %v2572 = vunpack.c.l.b16 %v2444
        %v2573 = vunpack.c.l.b16 %v2445
        %v2574 = vunpack.c.l.b16 %v2446
        %v2575 = vunpack.c.l.b16 %v2447
        %v2576 = vunpack.c.l.b16 %v2448
        %v2577 = vunpack.c.l.b16 %v2449
        %v2578 = vunpack.c.l.b16 %v2450
        %v2579 = vunpack.c.l.b16 %v2451
        %v2580 = vpack.c.b16 %v2517, %v2516
        %v2581 = vpack.c.b16 %v2519, %v2518
        %v2582 = vpack.c.b16 %v2521, %v2520
        %v2583 = vpack.c.b16 %v2523, %v2522
        %v2584 = vpack.c.b16 %v2525, %v2524
        %v2585 = vpack.c.b16 %v2527, %v2526
        %v2586 = vpack.c.b16 %v2529, %v2528
        %v2587 = vpack.c.b16 %v2531, %v2530
        %v2588 = vpack.c.b16 %v2533, %v2532
        %v2589 = vpack.c.b16 %v2535, %v2534
        %v2590 = vpack.c.b16 %v2537, %v2536
        %v2591 = vpack.c.b16 %v2539, %v2538
        %v2592 = vpack.c.b16 %v2541, %v2540
        %v2593 = vpack.c.b16 %v2543, %v2542
        %v2594 = vpack.c.b16 %v2545, %v2544
        %v2595 = vpack.c.b16 %v2547, %v2546
        %v2596 = vpack.c.b16 %v2549, %v2548
        %v2597 = vpack.c.b16 %v2551, %v2550
        %v2598 = vpack.c.b16 %v2553, %v2552
        %v2599 = vpack.c.b16 %v2555, %v2554
        %v2600 = vpack.c.b16 %v2557, %v2556
        %v2601 = vpack.c.b16 %v2559, %v2558
        %v2602 = vpack.c.b16 %v2561, %v2560
        %v2603 = vpack.c.b16 %v2563, %v2562
        %v2604 = vpack.c.b16 %v2565, %v2564
        %v2605 = vpack.c.b16 %v2567, %v2566
        %v2606 = vpack.c.b16 %v2569, %v2568
        %v2607 = vpack.c.b16 %v2571, %v2570
        %v2608 = vpack.c.b16 %v2573, %v2572
        %v2609 = vpack.c.b16 %v2575, %v2574
        %v2610 = vpack.c.b16 %v2577, %v2576
        %v2611 = vpack.c.b16 %v2579, %v2578
        %2644 = vmatprep.subr.bf16.mxu0 0
        %2645 = vmatpush1.bf16.msra.mxu0 %v2580
        %2646 = vmatprep.subr.bf16.mxu0 0
        %2647 = vmatpush1.bf16.msra.mxu0 %v2581
        %2648 = vmatprep.subr.bf16.mxu0 0
        %2649 = vmatpush1.bf16.msra.mxu0 %v2582
        %2650 = vmatprep.subr.bf16.mxu0 0
        %2651 = vmatpush1.bf16.msra.mxu0 %v2583
        %2652 = vmatprep.subr.bf16.mxu0 0
        %2653 = vmatpush1.bf16.msra.mxu0 %v2584
        %2654 = vmatprep.subr.bf16.mxu0 0
        %2655 = vmatpush1.bf16.msra.mxu0 %v2585
        %2656 = vmatprep.subr.bf16.mxu0 0
        %2657 = vmatpush1.bf16.msra.mxu0 %v2586
        %2658 = vmatprep.subr.bf16.mxu0 0
        %2659 = vmatpush1.bf16.msra.mxu0 %v2587
        %2660 = vmatprep.subr.bf16.mxu0 0
        %2661 = vmatpush1.bf16.msra.mxu0 %v2588
        %2662 = vmatprep.subr.bf16.mxu0 0
        %2663 = vmatpush1.bf16.msra.mxu0 %v2589
        %2664 = vmatprep.subr.bf16.mxu0 0
        %2665 = vmatpush1.bf16.msra.mxu0 %v2590
        %2666 = vmatprep.subr.bf16.mxu0 0
        %2667 = vmatpush1.bf16.msra.mxu0 %v2591
        %2668 = vmatprep.subr.bf16.mxu0 0
        %2669 = vmatpush1.bf16.msra.mxu0 %v2592
        %2670 = vmatprep.subr.bf16.mxu0 0
        %2671 = vmatpush1.bf16.msra.mxu0 %v2593
        %2672 = vmatprep.subr.bf16.mxu0 0
        %2673 = vmatpush1.bf16.msra.mxu0 %v2594
        %2674 = vmatprep.subr.bf16.mxu0 0
        %2675 = vmatpush1.bf16.msra.mxu0 %v2595
        %2676 = vmatprep.mubr.bf16.mxu0 %v2385
        %2677 = vmatmul.mubr.bf16.gmra.mrb[0].mxu0 %v2384
        %v2678 = vpop.f32.mrb[0].mxu0
        %v2679 = vadd.f32 0.0, %v2678
        %v2680 = vpop.f32.mrb[0].mxu0
        %v2681 = vpop.f32.mrb[0].mxu0
        %v2682 = vpop.f32.mrb[0].mxu0
        %2683 = vdwg.mxu0
        %2684 = vmatprep.subr.bf16.mxu0 0
        %2685 = vmatpush1.bf16.msra.mxu0 %v2596
        %2686 = vmatprep.subr.bf16.mxu0 0
        %2687 = vmatpush1.bf16.msra.mxu0 %v2597
        %2688 = vmatprep.subr.bf16.mxu0 0
        %2689 = vmatpush1.bf16.msra.mxu0 %v2598
        %2690 = vmatprep.subr.bf16.mxu0 0
        %2691 = vmatpush1.bf16.msra.mxu0 %v2599
        %2692 = vmatprep.subr.bf16.mxu0 0
        %2693 = vmatpush1.bf16.msra.mxu0 %v2600
        %2694 = vmatprep.subr.bf16.mxu0 0
        %2695 = vmatpush1.bf16.msra.mxu0 %v2601
        %2696 = vmatprep.subr.bf16.mxu0 0
        %2697 = vmatpush1.bf16.msra.mxu0 %v2602
        %2698 = vmatprep.subr.bf16.mxu0 0
        %2699 = vmatpush1.bf16.msra.mxu0 %v2603
        %2700 = vmatprep.subr.bf16.mxu0 0
        %2701 = vmatpush1.bf16.msra.mxu0 %v2604
        %2702 = vmatprep.subr.bf16.mxu0 0
        %2703 = vmatpush1.bf16.msra.mxu0 %v2605
        %2704 = vmatprep.subr.bf16.mxu0 0
        %2705 = vmatpush1.bf16.msra.mxu0 %v2606
        %2706 = vmatprep.subr.bf16.mxu0 0
        %2707 = vmatpush1.bf16.msra.mxu0 %v2607
        %2708 = vmatprep.subr.bf16.mxu0 0
        %2709 = vmatpush1.bf16.msra.mxu0 %v2608
        %2710 = vmatprep.subr.bf16.mxu0 0
        %2711 = vmatpush1.bf16.msra.mxu0 %v2609
        %2712 = vmatprep.subr.bf16.mxu0 0
        %2713 = vmatpush1.bf16.msra.mxu0 %v2610
        %2714 = vmatprep.subr.bf16.mxu0 0
        %2715 = vmatpush1.bf16.msra.mxu0 %v2611
        %2716 = vmatprep.mubr.bf16.mxu0 %v2387
        %2717 = vmatmul.mubr.bf16.gmra.mrb[0].mxu0 %v2386
        %v2718 = vpop.f32.mrb[0].mxu0
        %v2719 = vadd.f32 %v2679, %v2718
        %v2720 = vpop.f32.mrb[0].mxu0
        %v2721 = vpop.f32.mrb[0].mxu0
        %v2722 = vpop.f32.mrb[0].mxu0
        %2723 = vdwg.mxu0
        %2724 = vst [vmem:[#allocation2 + $0x8] sm:$0xff] %v2719
        %v2725 = vld [vmem:[%s14] sm:$0xff]
        %v2726 = vld [vmem:[%s14 + $0x8] sm:$0x1]
        %v2727 = vld [vmem:[#allocation2] sm:$0xff]
        %v2728 = vld [vmem:[#allocation2 + $0x8] sm:$0xff]
        %v2729 = vlaneseq
        %v2730 = vshrl.u32 %v2729, 7
        %v2731 = vsub.s32 0, %v2730
        %v2732 = vrot.slane %v2725, %v2731
        %2734 = vrot.lane.b32.xlu0 %v2732, 119
        %v2735 = vpop.permute.xlu0 %2734
        %v2737 = vmul.f32 %v2727, %v2735
        %v2738 = vmul.f32 %v2728, %v2735
        %v2739 = vlaneseq
        %v2740 = vshrl.u32 %v2739, 7
        %v2741 = vsub.s32 1, %v2740
        %v2742 = vrot.slane %v2725, %v2741
        %2744 = vrot.lane.b32.xlu0 %v2742, 120
        %v2745 = vpop.permute.xlu0 %2744
        %v2747 = vmul.f32 %v2727, %v2745
        %v2748 = vmul.f32 %v2728, %v2745
        %v2749 = vlaneseq
        %v2750 = vshrl.u32 %v2749, 7
        %v2751 = vsub.s32 2, %v2750
        %v2752 = vrot.slane %v2725, %v2751
        %2754 = vrot.lane.b32.xlu0 %v2752, 121
        %v2755 = vpop.permute.xlu0 %2754
        %v2757 = vmul.f32 %v2727, %v2755
        %v2758 = vmul.f32 %v2728, %v2755
        %v2759 = vlaneseq
        %v2760 = vshrl.u32 %v2759, 7
        %v2761 = vsub.s32 3, %v2760
        %v2762 = vrot.slane %v2725, %v2761
        %2764 = vrot.lane.b32.xlu0 %v2762, 127
        %v2765 = vpop.permute.xlu0 %2764
        %v2767 = vmul.f32 %v2727, %v2765
        %v2768 = vmul.f32 %v2728, %v2765
        %v2769 = vld [vmem:[#allocation2 + $0x10] sm:$0xff]
        %v2770 = vlaneseq
        %v2771 = vshrl.u32 %v2770, 7
        %v2772 = vsub.s32 5, %v2771
        %v2773 = vrot.slane %v2725, %v2772
        %2775 = vrot.lane.b32.xlu0 %v2773, 1
        %v2776 = vpop.permute.xlu0 %2775
        %v2778 = vmul.f32 %v2728, %v2776
        %v2779 = vmul.f32 %v2769, %v2776
        %v2780 = vlaneseq
        %v2781 = vshrl.u32 %v2780, 7
        %v2782 = vsub.s32 6, %v2781
        %v2783 = vrot.slane %v2725, %v2782
        %2785 = vrot.lane.b32.xlu0 %v2783, 7
        %v2786 = vpop.permute.xlu0 %2785
        %v2788 = vmul.f32 %v2728, %v2786
        %v2789 = vmul.f32 %v2769, %v2786
        %v2790 = vlaneseq
        %v2791 = vshrl.u32 %v2790, 7
        %v2792 = vsub.s32 7, %v2791
        %v2793 = vrot.slane %v2725, %v2792
        %2795 = vrot.lane.b32.xlu0 %v2793, 8
        %v2796 = vpop.permute.xlu0 %2795
        %v2798 = vmul.f32 %v2728, %v2796
        %v2799 = vmul.f32 %v2769, %v2796
        %v2800 = vlaneseq
        %v2801 = vshrl.u32 %v2800, 7
        %v2802 = vsub.s32 0, %v2801
        %v2803 = vrot.slane %v2726, %v2802
        %2805 = vrot.lane.b32.xlu0 %v2803, 9
        %v2806 = vpop.permute.xlu0 %2805
        %v2808 = vmul.f32 %v2728, %v2806
        %v2809 = vmul.f32 %v2769, %v2806
        %2812 = vrot.lane.b32.xlu0 %v2747, 127
        %v2813 = vpop.permute.xlu0 %2812
        %2814 = vrot.lane.b32.xlu0 %v2748, 127
        %v2815 = vpop.permute.xlu0 %2814
        %v2816 = vsel %vm882, %v2813, %v2815
        %2821 = vrot.lane.b32.xlu0 %v2757, 126
        %v2822 = vpop.permute.xlu0 %2821
        %2823 = vrot.lane.b32.xlu0 %v2758, 126
        %v2824 = vpop.permute.xlu0 %2823
        %v2825 = vsel %vm1104, %v2822, %v2824
        %2830 = vrot.lane.b32.xlu0 %v2767, 120
        %v2831 = vpop.permute.xlu0 %2830
        %2832 = vrot.lane.b32.xlu0 %v2768, 120
        %v2833 = vpop.permute.xlu0 %2832
        %vm2834 = vcmask 982016
        %v2835 = vsel %vm2834, %v2831, %v2833
        %2839 = vrot.lane.b32.xlu0 %v2719, 119
        %v2840 = vpop.permute.xlu0 %2839
        %2844 = vrot.lane.b32.xlu0 %v2778, 118
        %v2845 = vpop.permute.xlu0 %2844
        %2846 = vrot.lane.b32.xlu0 %v2779, 118
        %v2847 = vpop.permute.xlu0 %2846
        %vm2848 = vcmask 965632
        %v2849 = vsel %vm2848, %v2845, %v2847
        %2854 = vrot.lane.b32.xlu0 %v2788, 112
        %v2855 = vpop.permute.xlu0 %2854
        %2856 = vrot.lane.b32.xlu0 %v2789, 112
        %v2857 = vpop.permute.xlu0 %2856
        %v2858 = vsel %vm798, %v2855, %v2857
        %2863 = vrot.lane.b32.xlu0 %v2798, 111
        %v2864 = vpop.permute.xlu0 %2863
        %2865 = vrot.lane.b32.xlu0 %v2799, 111
        %v2866 = vpop.permute.xlu0 %2865
        %v2867 = vsel %vm756, %v2864, %v2866
        %2872 = vrot.lane.b32.xlu0 %v2808, 110
        %v2873 = vpop.permute.xlu0 %2872
        %2874 = vrot.lane.b32.xlu0 %v2809, 110
        %v2875 = vpop.permute.xlu0 %2874
        %v2876 = vsel %vm1173, %v2873, %v2875
        %v2879 = vpack.c.bf16 %v2816, %v2737
        %v2880 = vpack.c.bf16 %v2815, %v2738
        %v2881 = vpack.c.bf16 %v2835, %v2825
        %v2882 = vpack.c.bf16 %v2833, %v2824
        %v2883 = vpack.c.bf16 %v2845, %v2840
        %v2884 = vpack.c.bf16 %v2849, %v2840
        %v2885 = vpack.c.bf16 %v2864, %v2855
        %v2886 = vpack.c.bf16 %v2867, %v2858
        %v2887 = vpack.c.bf16 %v2873, %v2873
        %v2888 = vpack.c.bf16 %v2876, %v2876
        %v2889 = vld [vmem:[%s5] sm:$0xf]
        %v2890 = vld [vmem:[%s5 + $0x4] sm:$0xf]
        %v2891 = vld [vmem:[%s6] sm:$0xff]
        %v2892 = vld [vmem:[%s6 + $0x8] sm:$0xff]
        %2894 = vset.pattern.permute.xlu0 0
        %2895 = vperm.xlu0 %2894, %v2891
        %v2896 = vpop.permute.xlu0 %2895
        %2899 = vset.pattern.permute.xlu0 0
        %2900 = vperm.xlu0 %2899, %v2892
        %v2901 = vpop.permute.xlu0 %2900
        %v2905 = vunpack.c.l.b16 %v2889
        %v2906 = vunpack.c.l.b16 %v2890
        %v2907 = vpack.c.b16 %v2906, %v2905
        %2918 = vrot.lane.b32.xlu0 %v2879, 9
        %v2919 = vpop.permute.xlu0 %2918
        %2920 = vrot.lane.b32.xlu0 %v2880, 9
        %v2921 = vpop.permute.xlu0 %2920
        %2922 = vrot.lane.b32.xlu0 %v2881, 9
        %v2923 = vpop.permute.xlu0 %2922
        %2924 = vrot.lane.b32.xlu0 %v2882, 9
        %v2925 = vpop.permute.xlu0 %2924
        %2926 = vrot.lane.b32.xlu0 %v2883, 9
        %v2927 = vpop.permute.xlu0 %2926
        %2928 = vrot.lane.b32.xlu0 %v2884, 9
        %v2929 = vpop.permute.xlu0 %2928
        %2930 = vrot.lane.b32.xlu0 %v2885, 9
        %v2931 = vpop.permute.xlu0 %2930
        %2932 = vrot.lane.b32.xlu0 %v2886, 9
        %v2933 = vpop.permute.xlu0 %2932
        %2934 = vrot.lane.b32.xlu0 %v2887, 9
        %v2935 = vpop.permute.xlu0 %2934
        %2936 = vrot.lane.b32.xlu0 %v2888, 9
        %v2937 = vpop.permute.xlu0 %2936
        %vm2938 = vcmask 72704
        %v2939 = vsel %vm2938, %v2919, %v2921
        %v2940 = vsel %vm2938, %v2923, %v2925
        %v2941 = vsel %vm2938, %v2927, %v2929
        %v2942 = vsel %vm2938, %v2931, %v2933
        %v2943 = vsel %vm2938, %v2935, %v2937
        %v2949 = vsel %vm1402, %v2907, 0
        %v2952 = vsel %vm1406, %v2943, 0
        %2954 = vmatprep.subr.bf16.mxu0 0
        %2955 = vmatpush1.bf16.msra.mxu0 %v2939
        %2956 = vmatprep.subr.bf16.mxu0 0
        %2957 = vmatpush1.bf16.msra.mxu0 %v2940
        %2958 = vmatprep.subr.bf16.mxu0 0
        %2959 = vmatpush1.bf16.msra.mxu0 %v2941
        %2960 = vmatprep.subr.bf16.mxu0 0
        %2961 = vmatpush1.bf16.msra.mxu0 %v2942
        %2962 = vmatprep.subr.bf16.mxu0 0
        %2963 = vmatpush1.bf16.msra.mxu0 %v2952
        %2964 = vmatprep.subr.bf16.mxu0 0
        %2965 = vmatpush1.bf16.msra.mxu0 0
        %2966 = vmatprep.subr.bf16.mxu0 0
        %2967 = vmatpush1.bf16.msra.mxu0 0
        %2968 = vmatprep.subr.bf16.mxu0 0
        %2969 = vmatpush1.bf16.msra.mxu0 0
        %2970 = vmatprep.subr.bf16.mxu0 0
        %2971 = vmatpush1.bf16.msra.mxu0 0
        %2972 = vmatprep.subr.bf16.mxu0 0
        %2973 = vmatpush1.bf16.msra.mxu0 0
        %2974 = vmatprep.subr.bf16.mxu0 0
        %2975 = vmatpush1.bf16.msra.mxu0 0
        %2976 = vmatprep.subr.bf16.mxu0 0
        %2977 = vmatpush1.bf16.msra.mxu0 0
        %2978 = vmatprep.subr.bf16.mxu0 0
        %2979 = vmatpush1.bf16.msra.mxu0 0
        %2980 = vmatprep.subr.bf16.mxu0 0
        %2981 = vmatpush1.bf16.msra.mxu0 0
        %2982 = vmatprep.subr.bf16.mxu0 0
        %2983 = vmatpush1.bf16.msra.mxu0 0
        %2984 = vmatprep.subr.bf16.mxu0 0
        %2985 = vmatpush1.bf16.msra.mxu0 0
        %2986 = vmatprep.mubr.bf16.mxu0 0
        %2987 = vmatmul.mubr.bf16.gmra.mrb[0].mxu0 %v2949
        %v2988 = vpop.f32.mrb[0].mxu0
        %v2989 = vadd.f32 %v2896, %v2988
        %v2990 = vpop.f32.mrb[0].mxu0
        %v2991 = vpop.f32.mrb[0].mxu0
        %v2992 = vadd.f32 %v2901, %v2991
        %v2993 = vpop.f32.mrb[0].mxu0
        %2994 = vdwg.mxu0
        %v2995 = vmax.f32 %v2989, 0.0
        %v2996 = vmax.f32 %v2992, 0.0
        %2997 = vset.pattern.permute.xlu0 1
        %2998 = vperm.xlu0 %2997, %v2891
        %v2999 = vpop.permute.xlu0 %2998
        %3001 = vset.pattern.permute.xlu0 1
        %3002 = vperm.xlu0 %3001, %v2892
        %v3003 = vpop.permute.xlu0 %3002
        %v3005 = vmul.f32 %v2995, %v2999
        %v3006 = vmul.f32 %v2996, %v3003
        %3007 = vset.pattern.permute.xlu0 2
        %3008 = vperm.xlu0 %3007, %v2891
        %v3009 = vpop.permute.xlu0 %3008
        %3011 = vset.pattern.permute.xlu0 2
        %3012 = vperm.xlu0 %3011, %v2892
        %v3013 = vpop.permute.xlu0 %3012
        %v3015 = vadd.f32 %v3005, %v3009
        %v3016 = vadd.f32 %v3006, %v3013
        %3017 = vst [vmem:[#allocation2 + $0x8] sm:$0xff] %v3015
        %3018 = vst [vmem:[#allocation2 + $0x38] sm:$0xff] %v3016
        %v3019 = vld [vmem:[%s14] sm:$0xff]
        %v3020 = vld [vmem:[%s14 + $0x8] sm:$0x1]
        %v3021 = vld [vmem:[#allocation2] sm:$0xff]
        %v3022 = vld [vmem:[#allocation2 + $0x8] sm:$0xff]
        %v3023 = vld [vmem:[#allocation2 + $0x30] sm:$0xff]
        %v3024 = vld [vmem:[#allocation2 + $0x38] sm:$0xff]
        %v3025 = vlaneseq
        %v3026 = vshrl.u32 %v3025, 7
        %v3027 = vsub.s32 0, %v3026
        %v3028 = vrot.slane %v3019, %v3027
        %3030 = vrot.lane.b32.xlu0 %v3028, 119
        %v3031 = vpop.permute.xlu0 %3030
        %v3033 = vmul.f32 %v3021, %v3031
        %v3034 = vmul.f32 %v3022, %v3031
        %v3035 = vmul.f32 %v3023, %v3031
        %v3036 = vmul.f32 %v3024, %v3031
        %v3037 = vlaneseq
        %v3038 = vshrl.u32 %v3037, 7
        %v3039 = vsub.s32 1, %v3038
        %v3040 = vrot.slane %v3019, %v3039
        %3042 = vrot.lane.b32.xlu0 %v3040, 120
        %v3043 = vpop.permute.xlu0 %3042
        %v3045 = vmul.f32 %v3021, %v3043
        %v3046 = vmul.f32 %v3022, %v3043
        %v3047 = vmul.f32 %v3023, %v3043
        %v3048 = vmul.f32 %v3024, %v3043
        %v3049 = vlaneseq
        %v3050 = vshrl.u32 %v3049, 7
        %v3051 = vsub.s32 2, %v3050
        %v3052 = vrot.slane %v3019, %v3051
        %3054 = vrot.lane.b32.xlu0 %v3052, 121
        %v3055 = vpop.permute.xlu0 %3054
        %v3057 = vmul.f32 %v3021, %v3055
        %v3058 = vmul.f32 %v3022, %v3055
        %v3059 = vmul.f32 %v3023, %v3055
        %v3060 = vmul.f32 %v3024, %v3055
        %v3061 = vlaneseq
        %v3062 = vshrl.u32 %v3061, 7
        %v3063 = vsub.s32 3, %v3062
        %v3064 = vrot.slane %v3019, %v3063
        %3066 = vrot.lane.b32.xlu0 %v3064, 127
        %v3067 = vpop.permute.xlu0 %3066
        %v3069 = vmul.f32 %v3021, %v3067
        %v3070 = vmul.f32 %v3022, %v3067
        %v3071 = vmul.f32 %v3023, %v3067
        %v3072 = vmul.f32 %v3024, %v3067
        %v3073 = vld [vmem:[#allocation2 + $0x10] sm:$0xff]
        %v3074 = vld [vmem:[#allocation2 + $0x40] sm:$0xff]
        %v3075 = vlaneseq
        %v3076 = vshrl.u32 %v3075, 7
        %v3077 = vsub.s32 5, %v3076
        %v3078 = vrot.slane %v3019, %v3077
        %3080 = vrot.lane.b32.xlu0 %v3078, 1
        %v3081 = vpop.permute.xlu0 %3080
        %v3083 = vmul.f32 %v3022, %v3081
        %v3084 = vmul.f32 %v3073, %v3081
        %v3085 = vmul.f32 %v3024, %v3081
        %v3086 = vmul.f32 %v3074, %v3081
        %v3087 = vlaneseq
        %v3088 = vshrl.u32 %v3087, 7
        %v3089 = vsub.s32 6, %v3088
        %v3090 = vrot.slane %v3019, %v3089
        %3092 = vrot.lane.b32.xlu0 %v3090, 7
        %v3093 = vpop.permute.xlu0 %3092
        %v3095 = vmul.f32 %v3022, %v3093
        %v3096 = vmul.f32 %v3073, %v3093
        %v3097 = vmul.f32 %v3024, %v3093
        %v3098 = vmul.f32 %v3074, %v3093
        %v3099 = vlaneseq
        %v3100 = vshrl.u32 %v3099, 7
        %v3101 = vsub.s32 7, %v3100
        %v3102 = vrot.slane %v3019, %v3101
        %3104 = vrot.lane.b32.xlu0 %v3102, 8
        %v3105 = vpop.permute.xlu0 %3104
        %v3107 = vmul.f32 %v3022, %v3105
        %v3108 = vmul.f32 %v3073, %v3105
        %v3109 = vmul.f32 %v3024, %v3105
        %v3110 = vmul.f32 %v3074, %v3105
        %v3111 = vlaneseq
        %v3112 = vshrl.u32 %v3111, 7
        %v3113 = vsub.s32 0, %v3112
        %v3114 = vrot.slane %v3020, %v3113
        %3116 = vrot.lane.b32.xlu0 %v3114, 9
        %v3117 = vpop.permute.xlu0 %3116
        %v3119 = vmul.f32 %v3022, %v3117
        %v3120 = vmul.f32 %v3073, %v3117
        %v3121 = vmul.f32 %v3024, %v3117
        %v3122 = vmul.f32 %v3074, %v3117
        %3127 = vrot.lane.b32.xlu0 %v3045, 127
        %v3128 = vpop.permute.xlu0 %3127
        %3129 = vrot.lane.b32.xlu0 %v3046, 127
        %v3130 = vpop.permute.xlu0 %3129
        %3131 = vrot.lane.b32.xlu0 %v3047, 127
        %v3132 = vpop.permute.xlu0 %3131
        %3133 = vrot.lane.b32.xlu0 %v3048, 127
        %v3134 = vpop.permute.xlu0 %3133
        %v3135 = vsel %vm882, %v3128, %v3130
        %v3136 = vsel %vm882, %v3132, %v3134
        %3145 = vrot.lane.b32.xlu0 %v3057, 126
        %v3146 = vpop.permute.xlu0 %3145
        %3147 = vrot.lane.b32.xlu0 %v3058, 126
        %v3148 = vpop.permute.xlu0 %3147
        %3149 = vrot.lane.b32.xlu0 %v3059, 126
        %v3150 = vpop.permute.xlu0 %3149
        %3151 = vrot.lane.b32.xlu0 %v3060, 126
        %v3152 = vpop.permute.xlu0 %3151
        %v3153 = vsel %vm1104, %v3146, %v3148
        %v3154 = vsel %vm1104, %v3150, %v3152
        %3163 = vrot.lane.b32.xlu0 %v3069, 120
        %v3164 = vpop.permute.xlu0 %3163
        %3165 = vrot.lane.b32.xlu0 %v3070, 120
        %v3166 = vpop.permute.xlu0 %3165
        %3167 = vrot.lane.b32.xlu0 %v3071, 120
        %v3168 = vpop.permute.xlu0 %3167
        %3169 = vrot.lane.b32.xlu0 %v3072, 120
        %v3170 = vpop.permute.xlu0 %3169
        %v3171 = vsel %vm2834, %v3164, %v3166
        %v3172 = vsel %vm2834, %v3168, %v3170
        %3179 = vrot.lane.b32.xlu0 %v3015, 119
        %v3180 = vpop.permute.xlu0 %3179
        %3181 = vrot.lane.b32.xlu0 %v3016, 119
        %v3182 = vpop.permute.xlu0 %3181
        %3189 = vrot.lane.b32.xlu0 %v3083, 118
        %v3190 = vpop.permute.xlu0 %3189
        %3191 = vrot.lane.b32.xlu0 %v3084, 118
        %v3192 = vpop.permute.xlu0 %3191
        %3193 = vrot.lane.b32.xlu0 %v3085, 118
        %v3194 = vpop.permute.xlu0 %3193
        %3195 = vrot.lane.b32.xlu0 %v3086, 118
        %v3196 = vpop.permute.xlu0 %3195
        %v3197 = vsel %vm2848, %v3190, %v3192
        %v3198 = vsel %vm2848, %v3194, %v3196
        %3207 = vrot.lane.b32.xlu0 %v3095, 112
        %v3208 = vpop.permute.xlu0 %3207
        %3209 = vrot.lane.b32.xlu0 %v3096, 112
        %v3210 = vpop.permute.xlu0 %3209
        %3211 = vrot.lane.b32.xlu0 %v3097, 112
        %v3212 = vpop.permute.xlu0 %3211
        %3213 = vrot.lane.b32.xlu0 %v3098, 112
        %v3214 = vpop.permute.xlu0 %3213
        %v3215 = vsel %vm798, %v3208, %v3210
        %v3216 = vsel %vm798, %v3212, %v3214
        %3225 = vrot.lane.b32.xlu0 %v3107, 111
        %v3226 = vpop.permute.xlu0 %3225
        %3227 = vrot.lane.b32.xlu0 %v3108, 111
        %v3228 = vpop.permute.xlu0 %3227
        %3229 = vrot.lane.b32.xlu0 %v3109, 111
        %v3230 = vpop.permute.xlu0 %3229
        %3231 = vrot.lane.b32.xlu0 %v3110, 111
        %v3232 = vpop.permute.xlu0 %3231
        %v3233 = vsel %vm756, %v3226, %v3228
        %v3234 = vsel %vm756, %v3230, %v3232
        %3243 = vrot.lane.b32.xlu0 %v3119, 110
        %v3244 = vpop.permute.xlu0 %3243
        %3245 = vrot.lane.b32.xlu0 %v3120, 110
        %v3246 = vpop.permute.xlu0 %3245
        %3247 = vrot.lane.b32.xlu0 %v3121, 110
        %v3248 = vpop.permute.xlu0 %3247
        %3249 = vrot.lane.b32.xlu0 %v3122, 110
        %v3250 = vpop.permute.xlu0 %3249
        %v3251 = vsel %vm1173, %v3244, %v3246
        %v3252 = vsel %vm1173, %v3248, %v3250
        %v3257 = vpack.c.bf16 %v3035, %v3033
        %v3258 = vpack.c.bf16 %v3036, %v3034
        %v3259 = vpack.c.bf16 %v3136, %v3135
        %v3260 = vpack.c.bf16 %v3134, %v3130
        %v3261 = vpack.c.bf16 %v3154, %v3153
        %v3262 = vpack.c.bf16 %v3152, %v3148
        %v3263 = vpack.c.bf16 %v3172, %v3171
        %v3264 = vpack.c.bf16 %v3170, %v3166
        %v3265 = vpack.c.bf16 %v3182, %v3180
        %v3266 = vpack.c.bf16 %v3194, %v3190
        %v3267 = vpack.c.bf16 %v3198, %v3197
        %v3268 = vpack.c.bf16 %v3212, %v3208
        %v3269 = vpack.c.bf16 %v3216, %v3215
        %v3270 = vpack.c.bf16 %v3230, %v3226
        %v3271 = vpack.c.bf16 %v3234, %v3233
        %v3272 = vpack.c.bf16 %v3248, %v3244
        %v3273 = vpack.c.bf16 %v3252, %v3251
        %v3274 = vld [vmem:[%s7] sm:$0xff]
        %v3275 = vld [vmem:[%s7 + $0x8] sm:$0xff]
        %v3276 = vld [vmem:[%s8] sm:$0xff]
        %v3277 = vld [vmem:[%s8 + $0x8] sm:$0xff]
        %3279 = vset.pattern.permute.xlu0 0
        %3280 = vperm.xlu0 %3279, %v3276
        %v3281 = vpop.permute.xlu0 %3280
        %3284 = vset.pattern.permute.xlu0 0
        %3285 = vperm.xlu0 %3284, %v3277
        %v3286 = vpop.permute.xlu0 %3285
        %v3290 = vunpack.c.l.b16 %v3274
        %v3291 = vunpack.c.h.b16 %v3274
        %v3292 = vunpack.c.l.b16 %v3275
        %v3293 = vunpack.c.h.b16 %v3275
        %v3294 = vpack.c.b16 %v3292, %v3290
        %v3295 = vpack.c.b16 %v3293, %v3291
        %3314 = vrot.lane.b32.xlu0 %v3257, 9
        %v3315 = vpop.permute.xlu0 %3314
        %3316 = vrot.lane.b32.xlu0 %v3258, 9
        %v3317 = vpop.permute.xlu0 %3316
        %3318 = vrot.lane.b32.xlu0 %v3259, 9
        %v3319 = vpop.permute.xlu0 %3318
        %3320 = vrot.lane.b32.xlu0 %v3260, 9
        %v3321 = vpop.permute.xlu0 %3320
        %3322 = vrot.lane.b32.xlu0 %v3261, 9
        %v3323 = vpop.permute.xlu0 %3322
        %3324 = vrot.lane.b32.xlu0 %v3262, 9
        %v3325 = vpop.permute.xlu0 %3324
        %3326 = vrot.lane.b32.xlu0 %v3263, 9
        %v3327 = vpop.permute.xlu0 %3326
        %3328 = vrot.lane.b32.xlu0 %v3264, 9
        %v3329 = vpop.permute.xlu0 %3328
        %3330 = vrot.lane.b32.xlu0 %v3265, 9
        %v3331 = vpop.permute.xlu0 %3330
        %3332 = vrot.lane.b32.xlu0 %v3266, 9
        %v3333 = vpop.permute.xlu0 %3332
        %3334 = vrot.lane.b32.xlu0 %v3267, 9
        %v3335 = vpop.permute.xlu0 %3334
        %3336 = vrot.lane.b32.xlu0 %v3268, 9
        %v3337 = vpop.permute.xlu0 %3336
        %3338 = vrot.lane.b32.xlu0 %v3269, 9
        %v3339 = vpop.permute.xlu0 %3338
        %3340 = vrot.lane.b32.xlu0 %v3270, 9
        %v3341 = vpop.permute.xlu0 %3340
        %3342 = vrot.lane.b32.xlu0 %v3271, 9
        %v3343 = vpop.permute.xlu0 %3342
        %3344 = vrot.lane.b32.xlu0 %v3272, 9
        %v3345 = vpop.permute.xlu0 %3344
        %3346 = vrot.lane.b32.xlu0 %v3273, 9
        %v3347 = vpop.permute.xlu0 %3346
        %v3348 = vsel %vm2938, %v3315, %v3317
        %v3349 = vsel %vm2938, %v3319, %v3321
        %v3350 = vsel %vm2938, %v3323, %v3325
        %v3351 = vsel %vm2938, %v3327, %v3329
        %v3352 = vsel %vm2938, %v3333, %v3335
        %v3353 = vsel %vm2938, %v3337, %v3339
        %v3354 = vsel %vm2938, %v3341, %v3343
        %v3355 = vsel %vm2938, %v3345, %v3347
        %v3366 = vsel %vm1009, %v3295, 0
        %3368 = vmatprep.subr.bf16.mxu0 0
        %3369 = vmatpush1.bf16.msra.mxu0 %v3348
        %3370 = vmatprep.subr.bf16.mxu0 0
        %3371 = vmatpush1.bf16.msra.mxu0 %v3349
        %3372 = vmatprep.subr.bf16.mxu0 0
        %3373 = vmatpush1.bf16.msra.mxu0 %v3350
        %3374 = vmatprep.subr.bf16.mxu0 0
        %3375 = vmatpush1.bf16.msra.mxu0 %v3351
        %3376 = vmatprep.subr.bf16.mxu0 0
        %3377 = vmatpush1.bf16.msra.mxu0 %v3331
        %3378 = vmatprep.subr.bf16.mxu0 0
        %3379 = vmatpush1.bf16.msra.mxu0 %v3352
        %3380 = vmatprep.subr.bf16.mxu0 0
        %3381 = vmatpush1.bf16.msra.mxu0 %v3353
        %3382 = vmatprep.subr.bf16.mxu0 0
        %3383 = vmatpush1.bf16.msra.mxu0 %v3354
        %3384 = vmatprep.subr.bf16.mxu0 0
        %3385 = vmatpush1.bf16.msra.mxu0 %v3355
        %3386 = vmatprep.subr.bf16.mxu0 0
        %3387 = vmatpush1.bf16.msra.mxu0 0
        %3388 = vmatprep.subr.bf16.mxu0 0
        %3389 = vmatpush1.bf16.msra.mxu0 0
        %3390 = vmatprep.subr.bf16.mxu0 0
        %3391 = vmatpush1.bf16.msra.mxu0 0
        %3392 = vmatprep.subr.bf16.mxu0 0
        %3393 = vmatpush1.bf16.msra.mxu0 0
        %3394 = vmatprep.subr.bf16.mxu0 0
        %3395 = vmatpush1.bf16.msra.mxu0 0
        %3396 = vmatprep.subr.bf16.mxu0 0
        %3397 = vmatpush1.bf16.msra.mxu0 0
        %3398 = vmatprep.subr.bf16.mxu0 0
        %3399 = vmatpush1.bf16.msra.mxu0 0
        %3400 = vmatprep.mubr.bf16.mxu0 %v3366
        %3401 = vmatmul.mubr.bf16.gmra.mrb[0].mxu0 %v3294
        %v3402 = vpop.f32.mrb[0].mxu0
        %v3403 = vadd.f32 %v3281, %v3402
        %v3404 = vpop.f32.mrb[0].mxu0
        %v3405 = vpop.f32.mrb[0].mxu0
        %v3406 = vadd.f32 %v3286, %v3405
        %v3407 = vpop.f32.mrb[0].mxu0
        %3408 = vdwg.mxu0
        %v3409 = vmax.f32 %v3403, 0.0
        %v3410 = vmax.f32 %v3406, 0.0
        %3411 = vset.pattern.permute.xlu0 1
        %3412 = vperm.xlu0 %3411, %v3276
        %v3413 = vpop.permute.xlu0 %3412
        %3415 = vset.pattern.permute.xlu0 1
        %3416 = vperm.xlu0 %3415, %v3277
        %v3417 = vpop.permute.xlu0 %3416
        %v3419 = vmul.f32 %v3409, %v3413
        %v3420 = vmul.f32 %v3410, %v3417
        %3421 = vset.pattern.permute.xlu0 2
        %3422 = vperm.xlu0 %3421, %v3276
        %v3423 = vpop.permute.xlu0 %3422
        %3425 = vset.pattern.permute.xlu0 2
        %3426 = vperm.xlu0 %3425, %v3277
        %v3427 = vpop.permute.xlu0 %3426
        %v3429 = vadd.f32 %v3419, %v3423
        %v3430 = vadd.f32 %v3420, %v3427
        %3431 = vst [vmem:[#allocation2 + $0x8] sm:$0xff] %v3429
        %3432 = vst [vmem:[#allocation2 + $0x38] sm:$0xff] %v3430
        %v3433 = vld [vmem:[#allocation2 + $0x8] sm:$0xff]
        %v3434 = vld [vmem:[#allocation2 + $0x10] sm:$0xff]
        %v3435 = vld [vmem:[#allocation2 + $0x38] sm:$0xff]
        %v3436 = vld [vmem:[#allocation2 + $0x40] sm:$0xff]
        %3441 = vrot.lane.b32.xlu0 %v3433, 127
        %v3442 = vpop.permute.xlu0 %3441
        %3443 = vrot.lane.b32.xlu0 %v3434, 127
        %v3444 = vpop.permute.xlu0 %3443
        %3445 = vrot.lane.b32.xlu0 %v3435, 127
        %v3446 = vpop.permute.xlu0 %3445
        %3447 = vrot.lane.b32.xlu0 %v3436, 127
        %v3448 = vpop.permute.xlu0 %3447
        %v3449 = vsel %vm882, %v3442, %v3444
        %v3450 = vsel %vm882, %v3446, %v3448
        %v3453 = vmax.f32 %v3429, %v3449
        %v3454 = vmax.f32 %v3430, %v3450
        %v3457 = vmax.f32 %v3433, %v3449
        %v3458 = vmax.f32 %v3434, %v3444
        %v3459 = vmax.f32 %v3435, %v3450
        %v3460 = vmax.f32 %v3436, %v3448
        %3465 = vrot.lane.b32.xlu0 %v3457, 120
        %v3466 = vpop.permute.xlu0 %3465
        %3467 = vrot.lane.b32.xlu0 %v3458, 120
        %v3468 = vpop.permute.xlu0 %3467
        %3469 = vrot.lane.b32.xlu0 %v3459, 120
        %v3470 = vpop.permute.xlu0 %3469
        %3471 = vrot.lane.b32.xlu0 %v3460, 120
        %v3472 = vpop.permute.xlu0 %3471
        %v3473 = vsel %vm2834, %v3466, %v3468
        %v3474 = vsel %vm2834, %v3470, %v3472
        %v3477 = vmax.f32 %v3453, %v3473
        %v3478 = vmax.f32 %v3454, %v3474
        %v3479 = vpack.c.bf16 %v3478, %v3477
        %v3480 = vld [vmem:[%s17] sm:$0xf]
        %v3481 = vld [vmem:[%s17 + $0x4] sm:$0xf]
        %v3482 = vld [vmem:[%s17 + $0x8] sm:$0xf]
        %v3483 = vld [vmem:[%s17 + $0xc] sm:$0xf]
        %v3484 = vld [vmem:[%s17 + $0x10] sm:$0xf]
        %v3485 = vld [vmem:[%s17 + $0x14] sm:$0xf]
        %v3486 = vld [vmem:[%s17 + $0x18] sm:$0xf]
        %v3487 = vld [vmem:[%s17 + $0x1c] sm:$0xf]
        %v3488 = vld [vmem:[%s17 + $0x20] sm:$0xf]
        %v3489 = vld [vmem:[%s17 + $0x24] sm:$0xf]
        %v3490 = vld [vmem:[%s17 + $0x28] sm:$0xf]
        %v3491 = vld [vmem:[%s17 + $0x2c] sm:$0xf]
        %v3492 = vld [vmem:[%s17 + $0x30] sm:$0xf]
        %v3493 = vld [vmem:[%s17 + $0x34] sm:$0xf]
        %v3494 = vld [vmem:[%s17 + $0x38] sm:$0xf]
        %v3495 = vld [vmem:[%s17 + $0x3c] sm:$0xf]
        %v3512 = vunpack.c.l.b16 %v3480
        %v3513 = vunpack.c.l.b16 %v3481
        %v3514 = vunpack.c.l.b16 %v3482
        %v3515 = vunpack.c.l.b16 %v3483
        %v3516 = vunpack.c.l.b16 %v3484
        %v3517 = vunpack.c.l.b16 %v3485
        %v3518 = vunpack.c.l.b16 %v3486
        %v3519 = vunpack.c.l.b16 %v3487
        %v3520 = vunpack.c.l.b16 %v3488
        %v3521 = vunpack.c.l.b16 %v3489
        %v3522 = vunpack.c.l.b16 %v3490
        %v3523 = vunpack.c.l.b16 %v3491
        %v3524 = vunpack.c.l.b16 %v3492
        %v3525 = vunpack.c.l.b16 %v3493
        %v3526 = vunpack.c.l.b16 %v3494
        %v3527 = vunpack.c.l.b16 %v3495
        %v3528 = vpack.c.b16 %v3513, %v3512
        %v3529 = vpack.c.b16 %v3515, %v3514
        %v3530 = vpack.c.b16 %v3517, %v3516
        %v3531 = vpack.c.b16 %v3519, %v3518
        %v3532 = vpack.c.b16 %v3521, %v3520
        %v3533 = vpack.c.b16 %v3523, %v3522
        %v3534 = vpack.c.b16 %v3525, %v3524
        %v3535 = vpack.c.b16 %v3527, %v3526
        %3544 = vmatprep.subr.bf16.mxu0 0
        %3545 = vmatpush1.bf16.msra.mxu0 %v3528
        %3546 = vmatprep.subr.bf16.mxu0 0
        %3547 = vmatpush1.bf16.msra.mxu0 %v3529
        %3548 = vmatprep.subr.bf16.mxu0 0
        %3549 = vmatpush1.bf16.msra.mxu0 %v3530
        %3550 = vmatprep.subr.bf16.mxu0 0
        %3551 = vmatpush1.bf16.msra.mxu0 %v3531
        %3552 = vmatprep.subr.bf16.mxu0 0
        %3553 = vmatpush1.bf16.msra.mxu0 %v3532
        %3554 = vmatprep.subr.bf16.mxu0 0
        %3555 = vmatpush1.bf16.msra.mxu0 %v3533
        %3556 = vmatprep.subr.bf16.mxu0 0
        %3557 = vmatpush1.bf16.msra.mxu0 %v3534
        %3558 = vmatprep.subr.bf16.mxu0 0
        %3559 = vmatpush1.bf16.msra.mxu0 %v3535
        %3560 = vmatprep.subr.bf16.mxu0 0
        %3561 = vmatpush1.bf16.msra.mxu0 0
        %3562 = vmatprep.subr.bf16.mxu0 0
        %3563 = vmatpush1.bf16.msra.mxu0 0
        %3564 = vmatprep.subr.bf16.mxu0 0
        %3565 = vmatpush1.bf16.msra.mxu0 0
        %3566 = vmatprep.subr.bf16.mxu0 0
        %3567 = vmatpush1.bf16.msra.mxu0 0
        %3568 = vmatprep.subr.bf16.mxu0 0
        %3569 = vmatpush1.bf16.msra.mxu0 0
        %3570 = vmatprep.subr.bf16.mxu0 0
        %3571 = vmatpush1.bf16.msra.mxu0 0
        %3572 = vmatprep.subr.bf16.mxu0 0
        %3573 = vmatpush1.bf16.msra.mxu0 0
        %3574 = vmatprep.subr.bf16.mxu0 0
        %3575 = vmatpush1.bf16.msra.mxu0 0
        %3576 = vmatprep.mubr.bf16.mxu0 0
        %3577 = vmatmul.mubr.bf16.gmra.mrb[0].mxu0 %v3479
        %v3578 = vpop.f32.mrb[0].mxu0
        %v3579 = vadd.f32 0.0, %v3578
        %v3580 = vpop.f32.mrb[0].mxu0
        %v3581 = vpop.f32.mrb[0].mxu0
        %v3582 = vadd.f32 0.0, %v3581
        %v3583 = vpop.f32.mrb[0].mxu0
        %3584 = vdwg.mxu0
        %vm3585 = vcmask 261120
        %3586 = vst.msk [vmem:[#allocation2 + $0x8] sm:$0xff] %vm3585, %v3579
        %3587 = vst.msk [vmem:[#allocation2 + $0x38] sm:$0xff] %vm3585, %v3582
        %v3588 = vld [vmem:[%s15] sm:$0xff]
        %v3589 = vld [vmem:[%s15 + $0x8] sm:$0x1]
        %v3590 = vld [vmem:[#allocation2] sm:$0xff]
        %v3591 = vld [vmem:[#allocation2 + $0x8] sm:$0xff]
        %v3592 = vld [vmem:[#allocation2 + $0x30] sm:$0xff]
        %v3593 = vld [vmem:[#allocation2 + $0x38] sm:$0xff]
        %v3594 = vlaneseq
        %v3595 = vshrl.u32 %v3594, 7
        %v3596 = vsub.s32 0, %v3595
        %v3597 = vrot.slane %v3588, %v3596
        %3599 = vrot.lane.b32.xlu0 %v3597, 123
        %v3600 = vpop.permute.xlu0 %3599
        %v3602 = vmul.f32 %v3590, %v3600
        %v3603 = vmul.f32 %v3591, %v3600
        %v3604 = vmul.f32 %v3592, %v3600
        %v3605 = vmul.f32 %v3593, %v3600
        %v3606 = vlaneseq
        %v3607 = vshrl.u32 %v3606, 7
        %v3608 = vsub.s32 1, %v3607
        %v3609 = vrot.slane %v3588, %v3608
        %3611 = vrot.lane.b32.xlu0 %v3609, 124
        %v3612 = vpop.permute.xlu0 %3611
        %v3614 = vmul.f32 %v3590, %v3612
        %v3615 = vmul.f32 %v3591, %v3612
        %v3616 = vmul.f32 %v3592, %v3612
        %v3617 = vmul.f32 %v3593, %v3612
        %v3618 = vlaneseq
        %v3619 = vshrl.u32 %v3618, 7
        %v3620 = vsub.s32 2, %v3619
        %v3621 = vrot.slane %v3588, %v3620
        %3623 = vrot.lane.b32.xlu0 %v3621, 125
        %v3624 = vpop.permute.xlu0 %3623
        %v3626 = vmul.f32 %v3590, %v3624
        %v3627 = vmul.f32 %v3591, %v3624
        %v3628 = vmul.f32 %v3592, %v3624
        %v3629 = vmul.f32 %v3593, %v3624
        %v3630 = vlaneseq
        %v3631 = vshrl.u32 %v3630, 7
        %v3632 = vsub.s32 3, %v3631
        %v3633 = vrot.slane %v3588, %v3632
        %3635 = vrot.lane.b32.xlu0 %v3633, 127
        %v3636 = vpop.permute.xlu0 %3635
        %v3638 = vmul.f32 %v3590, %v3636
        %v3639 = vmul.f32 %v3591, %v3636
        %v3640 = vmul.f32 %v3592, %v3636
        %v3641 = vmul.f32 %v3593, %v3636
        %v3642 = vlaneseq
        %v3643 = vshrl.u32 %v3642, 7
        %v3644 = vsub.s32 5, %v3643
        %v3645 = vrot.slane %v3588, %v3644
        %3647 = vrot.lane.b32.xlu0 %v3645, 1
        %v3648 = vpop.permute.xlu0 %3647
        %v3650 = vmul.f32 %v3591, %v3648
        %v3651 = vmul.f32 %v3593, %v3648
        %v3652 = vlaneseq
        %v3653 = vshrl.u32 %v3652, 7
        %v3654 = vsub.s32 6, %v3653
        %v3655 = vrot.slane %v3588, %v3654
        %3657 = vrot.lane.b32.xlu0 %v3655, 3
        %v3658 = vpop.permute.xlu0 %3657
        %v3660 = vmul.f32 %v3591, %v3658
        %v3661 = vmul.f32 %v3593, %v3658
        %v3662 = vlaneseq
        %v3663 = vshrl.u32 %v3662, 7
        %v3664 = vsub.s32 7, %v3663
        %v3665 = vrot.slane %v3588, %v3664
        %3667 = vrot.lane.b32.xlu0 %v3665, 4
        %v3668 = vpop.permute.xlu0 %3667
        %v3670 = vmul.f32 %v3591, %v3668
        %v3671 = vmul.f32 %v3593, %v3668
        %v3672 = vlaneseq
        %v3673 = vshrl.u32 %v3672, 7
        %v3674 = vsub.s32 0, %v3673
        %v3675 = vrot.slane %v3589, %v3674
        %3677 = vrot.lane.b32.xlu0 %v3675, 5
        %v3678 = vpop.permute.xlu0 %3677
        %v3680 = vmul.f32 %v3591, %v3678
        %v3681 = vmul.f32 %v3593, %v3678
        %3686 = vrot.lane.b32.xlu0 %v3614, 127
        %v3687 = vpop.permute.xlu0 %3686
        %3688 = vrot.lane.b32.xlu0 %v3615, 127
        %v3689 = vpop.permute.xlu0 %3688
        %3690 = vrot.lane.b32.xlu0 %v3616, 127
        %v3691 = vpop.permute.xlu0 %3690
        %3692 = vrot.lane.b32.xlu0 %v3617, 127
        %v3693 = vpop.permute.xlu0 %3692
        %v3694 = vsel %vm882, %v3687, %v3689
        %v3695 = vsel %vm882, %v3691, %v3693
        %3704 = vrot.lane.b32.xlu0 %v3626, 126
        %v3705 = vpop.permute.xlu0 %3704
        %3706 = vrot.lane.b32.xlu0 %v3627, 126
        %v3707 = vpop.permute.xlu0 %3706
        %3708 = vrot.lane.b32.xlu0 %v3628, 126
        %v3709 = vpop.permute.xlu0 %3708
        %3710 = vrot.lane.b32.xlu0 %v3629, 126
        %v3711 = vpop.permute.xlu0 %3710
        %v3712 = vsel %vm1104, %v3705, %v3707
        %v3713 = vsel %vm1104, %v3709, %v3711
        %3722 = vrot.lane.b32.xlu0 %v3638, 124
        %v3723 = vpop.permute.xlu0 %3722
        %3724 = vrot.lane.b32.xlu0 %v3639, 124
        %v3725 = vpop.permute.xlu0 %3724
        %3726 = vrot.lane.b32.xlu0 %v3640, 124
        %v3727 = vpop.permute.xlu0 %3726
        %3728 = vrot.lane.b32.xlu0 %v3641, 124
        %v3729 = vpop.permute.xlu0 %3728
        %vm3730 = vcmask 1014784
        %v3731 = vsel %vm3730, %v3723, %v3725
        %v3732 = vsel %vm3730, %v3727, %v3729
        %3739 = vrot.lane.b32.xlu0 %v3579, 123
        %v3740 = vpop.permute.xlu0 %3739
        %3741 = vrot.lane.b32.xlu0 %v3582, 123
        %v3742 = vpop.permute.xlu0 %3741
        %3747 = vrot.lane.b32.xlu0 %v3650, 122
        %v3748 = vpop.permute.xlu0 %3747
        %3749 = vrot.lane.b32.xlu0 %v3651, 122
        %v3750 = vpop.permute.xlu0 %3749
        %3755 = vrot.lane.b32.xlu0 %v3660, 120
        %v3756 = vpop.permute.xlu0 %3755
        %3757 = vrot.lane.b32.xlu0 %v3661, 120
        %v3758 = vpop.permute.xlu0 %3757
        %3763 = vrot.lane.b32.xlu0 %v3670, 119
        %v3764 = vpop.permute.xlu0 %3763
        %3765 = vrot.lane.b32.xlu0 %v3671, 119
        %v3766 = vpop.permute.xlu0 %3765
        %3771 = vrot.lane.b32.xlu0 %v3680, 118
        %v3772 = vpop.permute.xlu0 %3771
        %3773 = vrot.lane.b32.xlu0 %v3681, 118
        %v3774 = vpop.permute.xlu0 %3773
        %v3777 = vpack.c.bf16 %v3604, %v3602
        %v3778 = vpack.c.bf16 %v3605, %v3603
        %v3779 = vpack.c.bf16 %v3695, %v3694
        %v3780 = vpack.c.bf16 %v3693, %v3689
        %v3781 = vpack.c.bf16 %v3713, %v3712
        %v3782 = vpack.c.bf16 %v3711, %v3707
        %v3783 = vpack.c.bf16 %v3732, %v3731
        %v3784 = vpack.c.bf16 %v3729, %v3725
        %v3785 = vpack.c.bf16 %v3742, %v3740
        %v3786 = vpack.c.bf16 %v3750, %v3748
        %v3787 = vpack.c.bf16 %v3758, %v3756
        %v3788 = vpack.c.bf16 %v3766, %v3764
        %v3789 = vpack.c.bf16 %v3774, %v3772
        %v3790 = vld [vmem:[%s9] sm:$0xff]
        %v3791 = vld [vmem:[%s9 + $0x8] sm:$0xff]
        %v3792 = vld [vmem:[%s9 + $0x10] sm:$0xff]
        %v3793 = vld [vmem:[%s9 + $0x18] sm:$0xff]
        %v3794 = vld [vmem:[%s10] sm:$0xff]
        %v3795 = vld [vmem:[%s10 + $0x8] sm:$0xff]
        %v3796 = vld [vmem:[%s10 + $0x10] sm:$0xff]
        %v3797 = vld [vmem:[%s10 + $0x18] sm:$0xff]
        %3799 = vset.pattern.permute.xlu0 0
        %3800 = vperm.xlu0 %3799, %v3794
        %v3801 = vpop.permute.xlu0 %3800
        %3804 = vset.pattern.permute.xlu0 0
        %3805 = vperm.xlu0 %3804, %v3795
        %v3806 = vpop.permute.xlu0 %3805
        %3809 = vset.pattern.permute.xlu0 0
        %3810 = vperm.xlu0 %3809, %v3796
        %v3811 = vpop.permute.xlu0 %3810
        %3814 = vset.pattern.permute.xlu0 0
        %3815 = vperm.xlu0 %3814, %v3797
        %v3816 = vpop.permute.xlu0 %3815
        %v3822 = vunpack.c.l.b16 %v3790
        %v3823 = vunpack.c.h.b16 %v3790
        %v3824 = vunpack.c.l.b16 %v3791
        %v3825 = vunpack.c.h.b16 %v3791
        %v3826 = vunpack.c.l.b16 %v3792
        %v3827 = vunpack.c.h.b16 %v3792
        %v3828 = vunpack.c.l.b16 %v3793
        %v3829 = vunpack.c.h.b16 %v3793
        %v3830 = vpack.c.b16 %v3824, %v3822
        %v3831 = vpack.c.b16 %v3825, %v3823
        %v3832 = vpack.c.b16 %v3828, %v3826
        %v3833 = vpack.c.b16 %v3829, %v3827
        %3849 = vrot.lane.b32.xlu0 %v3777, 5
        %v3850 = vpop.permute.xlu0 %3849
        %3851 = vrot.lane.b32.xlu0 %v3778, 5
        %v3852 = vpop.permute.xlu0 %3851
        %3853 = vrot.lane.b32.xlu0 %v3779, 5
        %v3854 = vpop.permute.xlu0 %3853
        %3855 = vrot.lane.b32.xlu0 %v3780, 5
        %v3856 = vpop.permute.xlu0 %3855
        %3857 = vrot.lane.b32.xlu0 %v3781, 5
        %v3858 = vpop.permute.xlu0 %3857
        %3859 = vrot.lane.b32.xlu0 %v3782, 5
        %v3860 = vpop.permute.xlu0 %3859
        %3861 = vrot.lane.b32.xlu0 %v3783, 5
        %v3862 = vpop.permute.xlu0 %3861
        %3863 = vrot.lane.b32.xlu0 %v3784, 5
        %v3864 = vpop.permute.xlu0 %3863
        %3865 = vrot.lane.b32.xlu0 %v3785, 5
        %v3866 = vpop.permute.xlu0 %3865
        %3867 = vrot.lane.b32.xlu0 %v3786, 5
        %v3868 = vpop.permute.xlu0 %3867
        %3869 = vrot.lane.b32.xlu0 %v3787, 5
        %v3870 = vpop.permute.xlu0 %3869
        %3871 = vrot.lane.b32.xlu0 %v3788, 5
        %v3872 = vpop.permute.xlu0 %3871
        %3873 = vrot.lane.b32.xlu0 %v3789, 5
        %v3874 = vpop.permute.xlu0 %3873
        %vm3875 = vcmask 39936
        %v3876 = vsel %vm3875, %v3850, %v3852
        %v3877 = vsel %vm3875, %v3854, %v3856
        %v3878 = vsel %vm3875, %v3858, %v3860
        %v3879 = vsel %vm3875, %v3862, %v3864
        %v3890 = vsel %vm1009, %v3831, 0
        %v3893 = vsel %vm1009, %v3833, 0
        %3895 = vmatprep.subr.bf16.mxu0 0
        %3896 = vmatpush1.bf16.msra.mxu0 %v3876
        %3897 = vmatprep.subr.bf16.mxu0 0
        %3898 = vmatpush1.bf16.msra.mxu0 %v3877
        %3899 = vmatprep.subr.bf16.mxu0 0
        %3900 = vmatpush1.bf16.msra.mxu0 %v3878
        %3901 = vmatprep.subr.bf16.mxu0 0
        %3902 = vmatpush1.bf16.msra.mxu0 %v3879
        %3903 = vmatprep.subr.bf16.mxu0 0
        %3904 = vmatpush1.bf16.msra.mxu0 %v3866
        %3905 = vmatprep.subr.bf16.mxu0 0
        %3906 = vmatpush1.bf16.msra.mxu0 %v3868
        %3907 = vmatprep.subr.bf16.mxu0 0
        %3908 = vmatpush1.bf16.msra.mxu0 %v3870
        %3909 = vmatprep.subr.bf16.mxu0 0
        %3910 = vmatpush1.bf16.msra.mxu0 %v3872
        %3911 = vmatprep.subr.bf16.mxu0 0
        %3912 = vmatpush1.bf16.msra.mxu0 %v3874
        %3913 = vmatprep.subr.bf16.mxu0 0
        %3914 = vmatpush1.bf16.msra.mxu0 0
        %3915 = vmatprep.subr.bf16.mxu0 0
        %3916 = vmatpush1.bf16.msra.mxu0 0
        %3917 = vmatprep.subr.bf16.mxu0 0
        %3918 = vmatpush1.bf16.msra.mxu0 0
        %3919 = vmatprep.subr.bf16.mxu0 0
        %3920 = vmatpush1.bf16.msra.mxu0 0
        %3921 = vmatprep.subr.bf16.mxu0 0
        %3922 = vmatpush1.bf16.msra.mxu0 0
        %3923 = vmatprep.subr.bf16.mxu0 0
        %3924 = vmatpush1.bf16.msra.mxu0 0
        %3925 = vmatprep.subr.bf16.mxu0 0
        %3926 = vmatpush1.bf16.msra.mxu0 0
        %3927 = vmatprep.mubr.bf16.mxu0 %v3890
        %3928 = vmatmul.mubr.bf16.gmra.mrb[0].mxu0 %v3830
        %v3929 = vpop.f32.mrb[0].mxu0
        %v3930 = vadd.f32 %v3801, %v3929
        %v3931 = vpop.f32.mrb[0].mxu0
        %v3932 = vpop.f32.mrb[0].mxu0
        %v3933 = vadd.f32 %v3806, %v3932
        %v3934 = vpop.f32.mrb[0].mxu0
        %3935 = vmatprep.mubr.bf16.mxu0 %v3893
        %3936 = vmatmul.mubr.bf16.gmra.mrb[0].mxu0 %v3832
        %v3937 = vpop.f32.mrb[0].mxu0
        %v3938 = vadd.f32 %v3811, %v3937
        %v3939 = vpop.f32.mrb[0].mxu0
        %v3940 = vpop.f32.mrb[0].mxu0
        %v3941 = vadd.f32 %v3816, %v3940
        %v3942 = vpop.f32.mrb[0].mxu0
        %3943 = vdwg.mxu0
        %v3944 = vmax.f32 %v3930, 0.0
        %v3945 = vmax.f32 %v3933, 0.0
        %v3946 = vmax.f32 %v3938, 0.0
        %v3947 = vmax.f32 %v3941, 0.0
        %3948 = vset.pattern.permute.xlu0 1
        %3949 = vperm.xlu0 %3948, %v3794
        %v3950 = vpop.permute.xlu0 %3949
        %3952 = vset.pattern.permute.xlu0 1
        %3953 = vperm.xlu0 %3952, %v3795
        %v3954 = vpop.permute.xlu0 %3953
        %3956 = vset.pattern.permute.xlu0 1
        %3957 = vperm.xlu0 %3956, %v3796
        %v3958 = vpop.permute.xlu0 %3957
        %3960 = vset.pattern.permute.xlu0 1
        %3961 = vperm.xlu0 %3960, %v3797
        %v3962 = vpop.permute.xlu0 %3961
        %v3964 = vmul.f32 %v3944, %v3950
        %v3965 = vmul.f32 %v3945, %v3954
        %v3966 = vmul.f32 %v3946, %v3958
        %v3967 = vmul.f32 %v3947, %v3962
        %3968 = vset.pattern.permute.xlu0 2
        %3969 = vperm.xlu0 %3968, %v3794
        %v3970 = vpop.permute.xlu0 %3969
        %3972 = vset.pattern.permute.xlu0 2
        %3973 = vperm.xlu0 %3972, %v3795
        %v3974 = vpop.permute.xlu0 %3973
        %3976 = vset.pattern.permute.xlu0 2
        %3977 = vperm.xlu0 %3976, %v3796
        %v3978 = vpop.permute.xlu0 %3977
        %3980 = vset.pattern.permute.xlu0 2
        %3981 = vperm.xlu0 %3980, %v3797
        %v3982 = vpop.permute.xlu0 %3981
        %v3984 = vadd.f32 %v3964, %v3970
        %v3985 = vadd.f32 %v3965, %v3974
        %v3986 = vadd.f32 %v3966, %v3978
        %v3987 = vadd.f32 %v3967, %v3982
        %3988 = vst.msk [vmem:[#allocation2 + $0x8] sm:$0xff] %vm3585, %v3984
        %3989 = vst.msk [vmem:[#allocation2 + $0x38] sm:$0xff] %vm3585, %v3985
        %3990 = vst.msk [vmem:[#allocation2 + $0x68] sm:$0xff] %vm3585, %v3986
        %3991 = vst.msk [vmem:[#allocation2 + $0x98] sm:$0xff] %vm3585, %v3987
        %v3992 = vld [vmem:[%s15] sm:$0xff]
        %v3993 = vld [vmem:[%s15 + $0x8] sm:$0x1]
        %v3994 = vld [vmem:[#allocation2] sm:$0xff]
        %v3995 = vld [vmem:[#allocation2 + $0x8] sm:$0xff]
        %v3996 = vld [vmem:[#allocation2 + $0x30] sm:$0xff]
        %v3997 = vld [vmem:[#allocation2 + $0x38] sm:$0xff]
        %v3998 = vld [vmem:[#allocation2 + $0x60] sm:$0xff]
        %v3999 = vld [vmem:[#allocation2 + $0x68] sm:$0xff]
        %v4000 = vld [vmem:[#allocation2 + $0x90] sm:$0xff]
        %v4001 = vld [vmem:[#allocation2 + $0x98] sm:$0xff]
        %v4002 = vlaneseq
        %v4003 = vshrl.u32 %v4002, 7
        %v4004 = vsub.s32 0, %v4003
        %v4005 = vrot.slane %v3992, %v4004
        %4007 = vrot.lane.b32.xlu0 %v4005, 123
        %v4008 = vpop.permute.xlu0 %4007
        %v4010 = vmul.f32 %v3994, %v4008
        %v4011 = vmul.f32 %v3995, %v4008
        %v4012 = vmul.f32 %v3996, %v4008
        %v4013 = vmul.f32 %v3997, %v4008
        %v4014 = vmul.f32 %v3998, %v4008
        %v4015 = vmul.f32 %v3999, %v4008
        %v4016 = vmul.f32 %v4000, %v4008
        %v4017 = vmul.f32 %v4001, %v4008
        %v4018 = vlaneseq
        %v4019 = vshrl.u32 %v4018, 7
        %v4020 = vsub.s32 1, %v4019
        %v4021 = vrot.slane %v3992, %v4020
        %4023 = vrot.lane.b32.xlu0 %v4021, 124
        %v4024 = vpop.permute.xlu0 %4023
        %v4026 = vmul.f32 %v3994, %v4024
        %v4027 = vmul.f32 %v3995, %v4024
        %v4028 = vmul.f32 %v3996, %v4024
        %v4029 = vmul.f32 %v3997, %v4024
        %v4030 = vmul.f32 %v3998, %v4024
        %v4031 = vmul.f32 %v3999, %v4024
        %v4032 = vmul.f32 %v4000, %v4024
        %v4033 = vmul.f32 %v4001, %v4024
        %v4034 = vlaneseq
        %v4035 = vshrl.u32 %v4034, 7
        %v4036 = vsub.s32 2, %v4035
        %v4037 = vrot.slane %v3992, %v4036
        %4039 = vrot.lane.b32.xlu0 %v4037, 125
        %v4040 = vpop.permute.xlu0 %4039
        %v4042 = vmul.f32 %v3994, %v4040
        %v4043 = vmul.f32 %v3995, %v4040
        %v4044 = vmul.f32 %v3996, %v4040
        %v4045 = vmul.f32 %v3997, %v4040
        %v4046 = vmul.f32 %v3998, %v4040
        %v4047 = vmul.f32 %v3999, %v4040
        %v4048 = vmul.f32 %v4000, %v4040
        %v4049 = vmul.f32 %v4001, %v4040
        %v4050 = vlaneseq
        %v4051 = vshrl.u32 %v4050, 7
        %v4052 = vsub.s32 3, %v4051
        %v4053 = vrot.slane %v3992, %v4052
        %4055 = vrot.lane.b32.xlu0 %v4053, 127
        %v4056 = vpop.permute.xlu0 %4055
        %v4058 = vmul.f32 %v3994, %v4056
        %v4059 = vmul.f32 %v3995, %v4056
        %v4060 = vmul.f32 %v3996, %v4056
        %v4061 = vmul.f32 %v3997, %v4056
        %v4062 = vmul.f32 %v3998, %v4056
        %v4063 = vmul.f32 %v3999, %v4056
        %v4064 = vmul.f32 %v4000, %v4056
        %v4065 = vmul.f32 %v4001, %v4056
        %v4066 = vlaneseq
        %v4067 = vshrl.u32 %v4066, 7
        %v4068 = vsub.s32 5, %v4067
        %v4069 = vrot.slane %v3992, %v4068
        %4071 = vrot.lane.b32.xlu0 %v4069, 1
        %v4072 = vpop.permute.xlu0 %4071
        %v4074 = vmul.f32 %v3995, %v4072
        %v4075 = vmul.f32 %v3997, %v4072
        %v4076 = vmul.f32 %v3999, %v4072
        %v4077 = vmul.f32 %v4001, %v4072
        %v4078 = vlaneseq
        %v4079 = vshrl.u32 %v4078, 7
        %v4080 = vsub.s32 6, %v4079
        %v4081 = vrot.slane %v3992, %v4080
        %4083 = vrot.lane.b32.xlu0 %v4081, 3
        %v4084 = vpop.permute.xlu0 %4083
        %v4086 = vmul.f32 %v3995, %v4084
        %v4087 = vmul.f32 %v3997, %v4084
        %v4088 = vmul.f32 %v3999, %v4084
        %v4089 = vmul.f32 %v4001, %v4084
        %v4090 = vlaneseq
        %v4091 = vshrl.u32 %v4090, 7
        %v4092 = vsub.s32 7, %v4091
        %v4093 = vrot.slane %v3992, %v4092
        %4095 = vrot.lane.b32.xlu0 %v4093, 4
        %v4096 = vpop.permute.xlu0 %4095
        %v4098 = vmul.f32 %v3995, %v4096
        %v4099 = vmul.f32 %v3997, %v4096
        %v4100 = vmul.f32 %v3999, %v4096
        %v4101 = vmul.f32 %v4001, %v4096
        %v4102 = vlaneseq
        %v4103 = vshrl.u32 %v4102, 7
        %v4104 = vsub.s32 0, %v4103
        %v4105 = vrot.slane %v3993, %v4104
        %4107 = vrot.lane.b32.xlu0 %v4105, 5
        %v4108 = vpop.permute.xlu0 %4107
        %v4110 = vmul.f32 %v3995, %v4108
        %v4111 = vmul.f32 %v3997, %v4108
        %v4112 = vmul.f32 %v3999, %v4108
        %v4113 = vmul.f32 %v4001, %v4108
        %4122 = vrot.lane.b32.xlu0 %v4026, 127
        %v4123 = vpop.permute.xlu0 %4122
        %4124 = vrot.lane.b32.xlu0 %v4027, 127
        %v4125 = vpop.permute.xlu0 %4124
        %4126 = vrot.lane.b32.xlu0 %v4028, 127
        %v4127 = vpop.permute.xlu0 %4126
        %4128 = vrot.lane.b32.xlu0 %v4029, 127
        %v4129 = vpop.permute.xlu0 %4128
        %4130 = vrot.lane.b32.xlu0 %v4030, 127
        %v4131 = vpop.permute.xlu0 %4130
        %4132 = vrot.lane.b32.xlu0 %v4031, 127
        %v4133 = vpop.permute.xlu0 %4132
        %4134 = vrot.lane.b32.xlu0 %v4032, 127
        %v4135 = vpop.permute.xlu0 %4134
        %4136 = vrot.lane.b32.xlu0 %v4033, 127
        %v4137 = vpop.permute.xlu0 %4136
        %v4138 = vsel %vm882, %v4123, %v4125
        %v4139 = vsel %vm882, %v4127, %v4129
        %v4140 = vsel %vm882, %v4131, %v4133
        %v4141 = vsel %vm882, %v4135, %v4137
        %4158 = vrot.lane.b32.xlu0 %v4042, 126
        %v4159 = vpop.permute.xlu0 %4158
        %4160 = vrot.lane.b32.xlu0 %v4043, 126
        %v4161 = vpop.permute.xlu0 %4160
        %4162 = vrot.lane.b32.xlu0 %v4044, 126
        %v4163 = vpop.permute.xlu0 %4162
        %4164 = vrot.lane.b32.xlu0 %v4045, 126
        %v4165 = vpop.permute.xlu0 %4164
        %4166 = vrot.lane.b32.xlu0 %v4046, 126
        %v4167 = vpop.permute.xlu0 %4166
        %4168 = vrot.lane.b32.xlu0 %v4047, 126
        %v4169 = vpop.permute.xlu0 %4168
        %4170 = vrot.lane.b32.xlu0 %v4048, 126
        %v4171 = vpop.permute.xlu0 %4170
        %4172 = vrot.lane.b32.xlu0 %v4049, 126
        %v4173 = vpop.permute.xlu0 %4172
        %v4174 = vsel %vm1104, %v4159, %v4161
        %v4175 = vsel %vm1104, %v4163, %v4165
        %v4176 = vsel %vm1104, %v4167, %v4169
        %v4177 = vsel %vm1104, %v4171, %v4173
        %4194 = vrot.lane.b32.xlu0 %v4058, 124
        %v4195 = vpop.permute.xlu0 %4194
        %4196 = vrot.lane.b32.xlu0 %v4059, 124
        %v4197 = vpop.permute.xlu0 %4196
        %4198 = vrot.lane.b32.xlu0 %v4060, 124
        %v4199 = vpop.permute.xlu0 %4198
        %4200 = vrot.lane.b32.xlu0 %v4061, 124
        %v4201 = vpop.permute.xlu0 %4200
        %4202 = vrot.lane.b32.xlu0 %v4062, 124
        %v4203 = vpop.permute.xlu0 %4202
        %4204 = vrot.lane.b32.xlu0 %v4063, 124
        %v4205 = vpop.permute.xlu0 %4204
        %4206 = vrot.lane.b32.xlu0 %v4064, 124
        %v4207 = vpop.permute.xlu0 %4206
        %4208 = vrot.lane.b32.xlu0 %v4065, 124
        %v4209 = vpop.permute.xlu0 %4208
        %v4210 = vsel %vm3730, %v4195, %v4197
        %v4211 = vsel %vm3730, %v4199, %v4201
        %v4212 = vsel %vm3730, %v4203, %v4205
        %v4213 = vsel %vm3730, %v4207, %v4209
        %4226 = vrot.lane.b32.xlu0 %v3984, 123
        %v4227 = vpop.permute.xlu0 %4226
        %4228 = vrot.lane.b32.xlu0 %v3985, 123
        %v4229 = vpop.permute.xlu0 %4228
        %4230 = vrot.lane.b32.xlu0 %v3986, 123
        %v4231 = vpop.permute.xlu0 %4230
        %4232 = vrot.lane.b32.xlu0 %v3987, 123
        %v4233 = vpop.permute.xlu0 %4232
        %4242 = vrot.lane.b32.xlu0 %v4074, 122
        %v4243 = vpop.permute.xlu0 %4242
        %4244 = vrot.lane.b32.xlu0 %v4075, 122
        %v4245 = vpop.permute.xlu0 %4244
        %4246 = vrot.lane.b32.xlu0 %v4076, 122
        %v4247 = vpop.permute.xlu0 %4246
        %4248 = vrot.lane.b32.xlu0 %v4077, 122
        %v4249 = vpop.permute.xlu0 %4248
        %4258 = vrot.lane.b32.xlu0 %v4086, 120
        %v4259 = vpop.permute.xlu0 %4258
        %4260 = vrot.lane.b32.xlu0 %v4087, 120
        %v4261 = vpop.permute.xlu0 %4260
        %4262 = vrot.lane.b32.xlu0 %v4088, 120
        %v4263 = vpop.permute.xlu0 %4262
        %4264 = vrot.lane.b32.xlu0 %v4089, 120
        %v4265 = vpop.permute.xlu0 %4264
        %4274 = vrot.lane.b32.xlu0 %v4098, 119
        %v4275 = vpop.permute.xlu0 %4274
        %4276 = vrot.lane.b32.xlu0 %v4099, 119
        %v4277 = vpop.permute.xlu0 %4276
        %4278 = vrot.lane.b32.xlu0 %v4100, 119
        %v4279 = vpop.permute.xlu0 %4278
        %4280 = vrot.lane.b32.xlu0 %v4101, 119
        %v4281 = vpop.permute.xlu0 %4280
        %4290 = vrot.lane.b32.xlu0 %v4110, 118
        %v4291 = vpop.permute.xlu0 %4290
        %4292 = vrot.lane.b32.xlu0 %v4111, 118
        %v4293 = vpop.permute.xlu0 %4292
        %4294 = vrot.lane.b32.xlu0 %v4112, 118
        %v4295 = vpop.permute.xlu0 %4294
        %4296 = vrot.lane.b32.xlu0 %v4113, 118
        %v4297 = vpop.permute.xlu0 %4296
        %v4302 = vpack.c.bf16 %v4012, %v4010
        %v4303 = vpack.c.bf16 %v4013, %v4011
        %v4304 = vpack.c.bf16 %v4016, %v4014
        %v4305 = vpack.c.bf16 %v4017, %v4015
        %v4306 = vpack.c.bf16 %v4139, %v4138
        %v4307 = vpack.c.bf16 %v4129, %v4125
        %v4308 = vpack.c.bf16 %v4141, %v4140
        %v4309 = vpack.c.bf16 %v4137, %v4133
        %v4310 = vpack.c.bf16 %v4175, %v4174
        %v4311 = vpack.c.bf16 %v4165, %v4161
        %v4312 = vpack.c.bf16 %v4177, %v4176
        %v4313 = vpack.c.bf16 %v4173, %v4169
        %v4314 = vpack.c.bf16 %v4211, %v4210
        %v4315 = vpack.c.bf16 %v4201, %v4197
        %v4316 = vpack.c.bf16 %v4213, %v4212
        %v4317 = vpack.c.bf16 %v4209, %v4205
        %v4318 = vpack.c.bf16 %v4229, %v4227
        %v4319 = vpack.c.bf16 %v4233, %v4231
        %v4320 = vpack.c.bf16 %v4245, %v4243
        %v4321 = vpack.c.bf16 %v4249, %v4247
        %v4322 = vpack.c.bf16 %v4261, %v4259
        %v4323 = vpack.c.bf16 %v4265, %v4263
        %v4324 = vpack.c.bf16 %v4277, %v4275
        %v4325 = vpack.c.bf16 %v4281, %v4279
        %v4326 = vpack.c.bf16 %v4293, %v4291
        %v4327 = vpack.c.bf16 %v4297, %v4295
        %v4328 = vld [vmem:[%s11] sm:$0xff]
        %v4329 = vld [vmem:[%s11 + $0x8] sm:$0xf]
        %v4330 = vld [vmem:[%s11 + $0xc] sm:$0xff]
        %v4331 = vld [vmem:[%s11 + $0x14] sm:$0xf]
        %v4332 = vld [vmem:[%s11 + $0x18] sm:$0xff]
        %v4333 = vld [vmem:[%s11 + $0x20] sm:$0xf]
        %v4334 = vld [vmem:[%s11 + $0x24] sm:$0xff]
        %v4335 = vld [vmem:[%s11 + $0x2c] sm:$0xf]
        %v4336 = vld [vmem:[%s12] sm:$0xff]
        %v4337 = vld [vmem:[%s12 + $0x8] sm:$0xff]
        %v4338 = vld [vmem:[%s12 + $0x10] sm:$0xff]
        %v4339 = vld [vmem:[%s12 + $0x18] sm:$0xff]
        %4341 = vset.pattern.permute.xlu0 0
        %4342 = vperm.xlu0 %4341, %v4336
        %v4343 = vpop.permute.xlu0 %4342
        %4346 = vset.pattern.permute.xlu0 0
        %4347 = vperm.xlu0 %4346, %v4337
        %v4348 = vpop.permute.xlu0 %4347
        %4351 = vset.pattern.permute.xlu0 0
        %4352 = vperm.xlu0 %4351, %v4338
        %v4353 = vpop.permute.xlu0 %4352
        %4356 = vset.pattern.permute.xlu0 0
        %4357 = vperm.xlu0 %4356, %v4339
        %v4358 = vpop.permute.xlu0 %4357
        %v4368 = vunpack.c.l.b16 %v4328
        %v4369 = vunpack.c.h.b16 %v4328
        %v4370 = vunpack.c.l.b16 %v4329
        %v4371 = vunpack.c.l.b16 %v4330
        %v4372 = vunpack.c.h.b16 %v4330
        %v4373 = vunpack.c.l.b16 %v4331
        %v4374 = vunpack.c.l.b16 %v4332
        %v4375 = vunpack.c.h.b16 %v4332
        %v4376 = vunpack.c.l.b16 %v4333
        %v4377 = vunpack.c.l.b16 %v4334
        %v4378 = vunpack.c.h.b16 %v4334
        %v4379 = vunpack.c.l.b16 %v4335
        %v4380 = vpack.c.b16 %v4371, %v4368
        %v4381 = vpack.c.b16 %v4372, %v4369
        %v4382 = vpack.c.b16 %v4373, %v4370
        %v4383 = vpack.c.b16 %v4377, %v4374
        %v4384 = vpack.c.b16 %v4378, %v4375
        %v4385 = vpack.c.b16 %v4379, %v4376
        %4416 = vrot.lane.b32.xlu0 %v4302, 5
        %v4417 = vpop.permute.xlu0 %4416
        %4418 = vrot.lane.b32.xlu0 %v4303, 5
        %v4419 = vpop.permute.xlu0 %4418
        %4420 = vrot.lane.b32.xlu0 %v4304, 5
        %v4421 = vpop.permute.xlu0 %4420
        %4422 = vrot.lane.b32.xlu0 %v4305, 5
        %v4423 = vpop.permute.xlu0 %4422
        %4424 = vrot.lane.b32.xlu0 %v4306, 5
        %v4425 = vpop.permute.xlu0 %4424
        %4426 = vrot.lane.b32.xlu0 %v4307, 5
        %v4427 = vpop.permute.xlu0 %4426
        %4428 = vrot.lane.b32.xlu0 %v4308, 5
        %v4429 = vpop.permute.xlu0 %4428
        %4430 = vrot.lane.b32.xlu0 %v4309, 5
        %v4431 = vpop.permute.xlu0 %4430
        %4432 = vrot.lane.b32.xlu0 %v4310, 5
        %v4433 = vpop.permute.xlu0 %4432
        %4434 = vrot.lane.b32.xlu0 %v4311, 5
        %v4435 = vpop.permute.xlu0 %4434
        %4436 = vrot.lane.b32.xlu0 %v4312, 5
        %v4437 = vpop.permute.xlu0 %4436
        %4438 = vrot.lane.b32.xlu0 %v4313, 5
        %v4439 = vpop.permute.xlu0 %4438
        %4440 = vrot.lane.b32.xlu0 %v4314, 5
        %v4441 = vpop.permute.xlu0 %4440
        %4442 = vrot.lane.b32.xlu0 %v4315, 5
        %v4443 = vpop.permute.xlu0 %4442
        %4444 = vrot.lane.b32.xlu0 %v4316, 5
        %v4445 = vpop.permute.xlu0 %4444
        %4446 = vrot.lane.b32.xlu0 %v4317, 5
        %v4447 = vpop.permute.xlu0 %4446
        %4448 = vrot.lane.b32.xlu0 %v4318, 5
        %v4449 = vpop.permute.xlu0 %4448
        %4450 = vrot.lane.b32.xlu0 %v4319, 5
        %v4451 = vpop.permute.xlu0 %4450
        %4452 = vrot.lane.b32.xlu0 %v4320, 5
        %v4453 = vpop.permute.xlu0 %4452
        %4454 = vrot.lane.b32.xlu0 %v4321, 5
        %v4455 = vpop.permute.xlu0 %4454
        %4456 = vrot.lane.b32.xlu0 %v4322, 5
        %v4457 = vpop.permute.xlu0 %4456
        %4458 = vrot.lane.b32.xlu0 %v4323, 5
        %v4459 = vpop.permute.xlu0 %4458
        %4460 = vrot.lane.b32.xlu0 %v4324, 5
        %v4461 = vpop.permute.xlu0 %4460
        %4462 = vrot.lane.b32.xlu0 %v4325, 5
        %v4463 = vpop.permute.xlu0 %4462
        %4464 = vrot.lane.b32.xlu0 %v4326, 5
        %v4465 = vpop.permute.xlu0 %4464
        %4466 = vrot.lane.b32.xlu0 %v4327, 5
        %v4467 = vpop.permute.xlu0 %4466
        %v4468 = vsel %vm3875, %v4417, %v4419
        %v4469 = vsel %vm3875, %v4421, %v4423
        %v4470 = vsel %vm3875, %v4425, %v4427
        %v4471 = vsel %vm3875, %v4429, %v4431
        %v4472 = vsel %vm3875, %v4433, %v4435
        %v4473 = vsel %vm3875, %v4437, %v4439
        %v4474 = vsel %vm3875, %v4441, %v4443
        %v4475 = vsel %vm3875, %v4445, %v4447
        %v4495 = vsel %vm3585, %v4382, 0
        %v4498 = vsel %vm3585, %v4385, 0
        %4500 = vmatprep.subr.bf16.mxu0 0
        %4501 = vmatpush1.bf16.msra.mxu0 %v4468
        %4502 = vmatprep.subr.bf16.mxu0 0
        %4503 = vmatpush1.bf16.msra.mxu0 %v4469
        %4504 = vmatprep.subr.bf16.mxu0 0
        %4505 = vmatpush1.bf16.msra.mxu0 %v4470
        %4506 = vmatprep.subr.bf16.mxu0 0
        %4507 = vmatpush1.bf16.msra.mxu0 %v4471
        %4508 = vmatprep.subr.bf16.mxu0 0
        %4509 = vmatpush1.bf16.msra.mxu0 %v4472
        %4510 = vmatprep.subr.bf16.mxu0 0
        %4511 = vmatpush1.bf16.msra.mxu0 %v4473
        %4512 = vmatprep.subr.bf16.mxu0 0
        %4513 = vmatpush1.bf16.msra.mxu0 %v4474
        %4514 = vmatprep.subr.bf16.mxu0 0
        %4515 = vmatpush1.bf16.msra.mxu0 %v4475
        %4516 = vmatprep.subr.bf16.mxu0 0
        %4517 = vmatpush1.bf16.msra.mxu0 %v4449
        %4518 = vmatprep.subr.bf16.mxu0 0
        %4519 = vmatpush1.bf16.msra.mxu0 %v4451
        %4520 = vmatprep.subr.bf16.mxu0 0
        %4521 = vmatpush1.bf16.msra.mxu0 %v4453
        %4522 = vmatprep.subr.bf16.mxu0 0
        %4523 = vmatpush1.bf16.msra.mxu0 %v4455
        %4524 = vmatprep.subr.bf16.mxu0 0
        %4525 = vmatpush1.bf16.msra.mxu0 %v4457
        %4526 = vmatprep.subr.bf16.mxu0 0
        %4527 = vmatpush1.bf16.msra.mxu0 %v4459
        %4528 = vmatprep.subr.bf16.mxu0 0
        %4529 = vmatpush1.bf16.msra.mxu0 %v4461
        %4530 = vmatprep.subr.bf16.mxu0 0
        %4531 = vmatpush1.bf16.msra.mxu0 %v4463
        %4532 = vmatprep.mubr.bf16.mxu0 %v4381
        %4533 = vmatmul.mubr.bf16.gmra.mrb[0].mxu0 %v4380
        %v4534 = vpop.f32.mrb[0].mxu0
        %v4535 = vadd.f32 %v4343, %v4534
        %v4536 = vpop.f32.mrb[0].mxu0
        %v4537 = vpop.f32.mrb[0].mxu0
        %v4538 = vadd.f32 %v4348, %v4537
        %v4539 = vpop.f32.mrb[0].mxu0
        %4540 = vmatprep.mubr.bf16.mxu0 %v4384
        %4541 = vmatmul.mubr.bf16.gmra.mrb[0].mxu0 %v4383
        %v4542 = vpop.f32.mrb[0].mxu0
        %v4543 = vadd.f32 %v4353, %v4542
        %v4544 = vpop.f32.mrb[0].mxu0
        %v4545 = vpop.f32.mrb[0].mxu0
        %v4546 = vadd.f32 %v4358, %v4545
        %v4547 = vpop.f32.mrb[0].mxu0
        %4548 = vdwg.mxu0
        %4549 = vmatprep.subr.bf16.mxu0 0
        %4550 = vmatpush1.bf16.msra.mxu0 %v4465
        %4551 = vmatprep.subr.bf16.mxu0 0
        %4552 = vmatpush1.bf16.msra.mxu0 %v4467
        %4553 = vmatprep.subr.bf16.mxu0 0
        %4554 = vmatpush1.bf16.msra.mxu0 0
        %4555 = vmatprep.subr.bf16.mxu0 0
        %4556 = vmatpush1.bf16.msra.mxu0 0
        %4557 = vmatprep.subr.bf16.mxu0 0
        %4558 = vmatpush1.bf16.msra.mxu0 0
        %4559 = vmatprep.subr.bf16.mxu0 0
        %4560 = vmatpush1.bf16.msra.mxu0 0
        %4561 = vmatprep.subr.bf16.mxu0 0
        %4562 = vmatpush1.bf16.msra.mxu0 0
        %4563 = vmatprep.subr.bf16.mxu0 0
        %4564 = vmatpush1.bf16.msra.mxu0 0
        %4565 = vmatprep.subr.bf16.mxu0 0
        %4566 = vmatpush1.bf16.msra.mxu0 0
        %4567 = vmatprep.subr.bf16.mxu0 0
        %4568 = vmatpush1.bf16.msra.mxu0 0
        %4569 = vmatprep.subr.bf16.mxu0 0
        %4570 = vmatpush1.bf16.msra.mxu0 0
        %4571 = vmatprep.subr.bf16.mxu0 0
        %4572 = vmatpush1.bf16.msra.mxu0 0
        %4573 = vmatprep.subr.bf16.mxu0 0
        %4574 = vmatpush1.bf16.msra.mxu0 0
        %4575 = vmatprep.subr.bf16.mxu0 0
        %4576 = vmatpush1.bf16.msra.mxu0 0
        %4577 = vmatprep.subr.bf16.mxu0 0
        %4578 = vmatpush1.bf16.msra.mxu0 0
        %4579 = vmatprep.subr.bf16.mxu0 0
        %4580 = vmatpush1.bf16.msra.mxu0 0
        %4581 = vmatprep.mubr.bf16.mxu0 0
        %4582 = vmatmul.mubr.bf16.gmra.mrb[0].mxu0 %v4495
        %v4583 = vpop.f32.mrb[0].mxu0
        %v4584 = vadd.f32 %v4535, %v4583
        %v4585 = vpop.f32.mrb[0].mxu0
        %v4586 = vpop.f32.mrb[0].mxu0
        %v4587 = vadd.f32 %v4538, %v4586
        %v4588 = vpop.f32.mrb[0].mxu0
        %4589 = vmatprep.mubr.bf16.mxu0 0
        %4590 = vmatmul.mubr.bf16.gmra.mrb[0].mxu0 %v4498
        %v4591 = vpop.f32.mrb[0].mxu0
        %v4592 = vadd.f32 %v4543, %v4591
        %v4593 = vpop.f32.mrb[0].mxu0
        %v4594 = vpop.f32.mrb[0].mxu0
        %v4595 = vadd.f32 %v4546, %v4594
        %v4596 = vpop.f32.mrb[0].mxu0
        %4597 = vdwg.mxu0
        %v4598 = vmax.f32 %v4584, 0.0
        %v4599 = vmax.f32 %v4587, 0.0
        %v4600 = vmax.f32 %v4592, 0.0
        %v4601 = vmax.f32 %v4595, 0.0
        %4602 = vset.pattern.permute.xlu0 1
        %4603 = vperm.xlu0 %4602, %v4336
        %v4604 = vpop.permute.xlu0 %4603
        %4606 = vset.pattern.permute.xlu0 1
        %4607 = vperm.xlu0 %4606, %v4337
        %v4608 = vpop.permute.xlu0 %4607
        %4610 = vset.pattern.permute.xlu0 1
        %4611 = vperm.xlu0 %4610, %v4338
        %v4612 = vpop.permute.xlu0 %4611
        %4614 = vset.pattern.permute.xlu0 1
        %4615 = vperm.xlu0 %4614, %v4339
        %v4616 = vpop.permute.xlu0 %4615
        %v4618 = vmul.f32 %v4598, %v4604
        %v4619 = vmul.f32 %v4599, %v4608
        %v4620 = vmul.f32 %v4600, %v4612
        %v4621 = vmul.f32 %v4601, %v4616
        %4622 = vset.pattern.permute.xlu0 2
        %4623 = vperm.xlu0 %4622, %v4336
        %v4624 = vpop.permute.xlu0 %4623
        %4626 = vset.pattern.permute.xlu0 2
        %4627 = vperm.xlu0 %4626, %v4337
        %v4628 = vpop.permute.xlu0 %4627
        %4630 = vset.pattern.permute.xlu0 2
        %4631 = vperm.xlu0 %4630, %v4338
        %v4632 = vpop.permute.xlu0 %4631
        %4634 = vset.pattern.permute.xlu0 2
        %4635 = vperm.xlu0 %4634, %v4339
        %v4636 = vpop.permute.xlu0 %4635
        %v4638 = vadd.f32 %v4618, %v4624
        %v4639 = vadd.f32 %v4619, %v4628
        %v4640 = vadd.f32 %v4620, %v4632
        %v4641 = vadd.f32 %v4621, %v4636
        %4642 = vst.msk [vmem:[#allocation2 + $0x8] sm:$0xff] %vm3585, %v4638
        %4643 = vst.msk [vmem:[#allocation2 + $0x38] sm:$0xff] %vm3585, %v4639
        %4644 = vst.msk [vmem:[#allocation2 + $0x68] sm:$0xff] %vm3585, %v4640
        %4645 = vst.msk [vmem:[#allocation2 + $0x98] sm:$0xff] %vm3585, %v4641
        %v4646 = vld [vmem:[#allocation2 + $0x8] sm:$0xff]
        %v4647 = vld [vmem:[#allocation2 + $0x38] sm:$0xff]
        %v4648 = vld [vmem:[#allocation2 + $0x68] sm:$0xff]
        %v4649 = vld [vmem:[#allocation2 + $0x98] sm:$0xff]
        %4654 = vrot.lane.b32.xlu0 %v4646, 127
        %v4655 = vpop.permute.xlu0 %4654
        %4656 = vrot.lane.b32.xlu0 %v4647, 127
        %v4657 = vpop.permute.xlu0 %4656
        %4658 = vrot.lane.b32.xlu0 %v4648, 127
        %v4659 = vpop.permute.xlu0 %4658
        %4660 = vrot.lane.b32.xlu0 %v4649, 127
        %v4661 = vpop.permute.xlu0 %4660
        %v4666 = vmax.f32 %v4638, %v4655
        %v4667 = vmax.f32 %v4639, %v4657
        %v4668 = vmax.f32 %v4640, %v4659
        %v4669 = vmax.f32 %v4641, %v4661
        %v4670 = vmax.f32 %v4646, %v4655
        %v4671 = vmax.f32 %v4647, %v4657
        %v4672 = vmax.f32 %v4648, %v4659
        %v4673 = vmax.f32 %v4649, %v4661
        %4678 = vrot.lane.b32.xlu0 %v4670, 124
        %v4679 = vpop.permute.xlu0 %4678
        %4680 = vrot.lane.b32.xlu0 %v4671, 124
        %v4681 = vpop.permute.xlu0 %4680
        %4682 = vrot.lane.b32.xlu0 %v4672, 124
        %v4683 = vpop.permute.xlu0 %4682
        %4684 = vrot.lane.b32.xlu0 %v4673, 124
        %v4685 = vpop.permute.xlu0 %4684
        %v4690 = vmax.f32 %v4666, %v4679
        %v4691 = vmax.f32 %v4667, %v4681
        %v4692 = vmax.f32 %v4668, %v4683
        %v4693 = vmax.f32 %v4669, %v4685
        %v4694 = vpack.c.bf16 %v4691, %v4690
        %v4695 = vpack.c.bf16 %v4693, %v4692
        %v4696 = vld [vmem:[%s18] sm:$0xf]
        %v4697 = vld [vmem:[%s18 + $0x4] sm:$0xf]
        %v4698 = vld [vmem:[%s18 + $0x8] sm:$0xf]
        %v4699 = vld [vmem:[%s18 + $0xc] sm:$0xf]
        %v4704 = vunpack.c.l.b16 %v4696
        %v4705 = vunpack.c.l.b16 %v4697
        %v4706 = vunpack.c.l.b16 %v4698
        %v4707 = vunpack.c.l.b16 %v4699
        %v4708 = vpack.c.b16 %v4705, %v4704
        %v4709 = vpack.c.b16 %v4707, %v4706
        %v4713 = vsel %vm3585, %v4694, 0
        %v4716 = vsel %vm3585, %v4695, 0
        %4718 = vmatprep.subr.bf16.mxu0 0
        %4719 = vmatpush1.bf16.msra.mxu0 %v4708
        %4720 = vmatprep.subr.bf16.mxu0 0
        %4721 = vmatpush1.bf16.msra.mxu0 %v4709
        %4722 = vmatprep.subr.bf16.mxu0 0
        %4723 = vmatpush1.bf16.msra.mxu0 0
        %4724 = vmatprep.subr.bf16.mxu0 0
        %4725 = vmatpush1.bf16.msra.mxu0 0
        %4726 = vmatprep.subr.bf16.mxu0 0
        %4727 = vmatpush1.bf16.msra.mxu0 0
        %4728 = vmatprep.subr.bf16.mxu0 0
        %4729 = vmatpush1.bf16.msra.mxu0 0
        %4730 = vmatprep.subr.bf16.mxu0 0
        %4731 = vmatpush1.bf16.msra.mxu0 0
        %4732 = vmatprep.subr.bf16.mxu0 0
        %4733 = vmatpush1.bf16.msra.mxu0 0
        %4734 = vmatprep.subr.bf16.mxu0 0
        %4735 = vmatpush1.bf16.msra.mxu0 0
        %4736 = vmatprep.subr.bf16.mxu0 0
        %4737 = vmatpush1.bf16.msra.mxu0 0
        %4738 = vmatprep.subr.bf16.mxu0 0
        %4739 = vmatpush1.bf16.msra.mxu0 0
        %4740 = vmatprep.subr.bf16.mxu0 0
        %4741 = vmatpush1.bf16.msra.mxu0 0
        %4742 = vmatprep.subr.bf16.mxu0 0
        %4743 = vmatpush1.bf16.msra.mxu0 0
        %4744 = vmatprep.subr.bf16.mxu0 0
        %4745 = vmatpush1.bf16.msra.mxu0 0
        %4746 = vmatprep.subr.bf16.mxu0 0
        %4747 = vmatpush1.bf16.msra.mxu0 0
        %4748 = vmatprep.subr.bf16.mxu0 0
        %4749 = vmatpush1.bf16.msra.mxu0 0
        %4750 = vmatprep.mubr.bf16.mxu0 0
        %4751 = vmatmul.mubr.bf16.gmra.mrb[0].mxu0 %v4713
        %v4752 = vpop.f32.mrb[0].mxu0
        %v4753 = vadd.f32 0.0, %v4752
        %v4754 = vpop.f32.mrb[0].mxu0
        %v4755 = vpop.f32.mrb[0].mxu0
        %v4756 = vadd.f32 0.0, %v4755
        %v4757 = vpop.f32.mrb[0].mxu0
        %4758 = vmatprep.mubr.bf16.mxu0 0
        %4759 = vmatmul.mubr.bf16.gmra.mrb[0].mxu0 %v4716
        %v4760 = vpop.f32.mrb[0].mxu0
        %v4761 = vadd.f32 0.0, %v4760
        %v4762 = vpop.f32.mrb[0].mxu0
        %v4763 = vpop.f32.mrb[0].mxu0
        %v4764 = vadd.f32 0.0, %v4763
        %v4765 = vpop.f32.mrb[0].mxu0
        %4766 = vdwg.mxu0
        %v4767 = vld [vmem:[%s19] sm:$0x3]
        %vm4768 = vcmask 64512
        %v4770 = vsel %vm4768, %v4767, 0
        %v4773 = vsel %vm4768, %v4753, 0
        %v4776 = vsel %vm4768, %v4756, 0
        %v4779 = vsel %vm4768, %v4761, 0
        %v4782 = vsel %vm4768, %v4764, 0
        %4784 = vmatprep.subr.mxu0 0.0
        %4785 = vmatpush1.xpose.msra.mxu0 %v4773
        %4786 = vmatprep.subr.mxu0 0.0
        %4787 = vmatpush1.xpose.msra.mxu0 %v4776
        %4788 = vmatprep.subr.mxu0 0.0
        %4789 = vmatpush1.xpose.msra.mxu0 %v4779
        %4790 = vmatprep.subr.mxu0 0.0
        %4791 = vmatpush1.xpose.msra.mxu0 %v4782
        %4792 = vmatprep.subr.mxu0 0.0
        %4793 = vmatpush1.xpose.msra.mxu0 0.0
        %4794 = vmatprep.subr.mxu0 0.0
        %4795 = vmatpush1.xpose.msra.mxu0 0.0
        %4796 = vmatprep.subr.mxu0 0.0
        %4797 = vmatpush1.xpose.msra.mxu0 0.0
        %4798 = vmatprep.subr.mxu0 0.0
        %4799 = vmatpush1.xpose.msra.mxu0 0.0
        %4800 = vmatprep.subr.mxu0 0.0
        %4801 = vmatpush1.xpose.msra.mxu0 0.0
        %4802 = vmatprep.subr.mxu0 0.0
        %4803 = vmatpush1.xpose.msra.mxu0 0.0
        %4804 = vmatprep.subr.mxu0 0.0
        %4805 = vmatpush1.xpose.msra.mxu0 0.0
        %4806 = vmatprep.subr.mxu0 0.0
        %4807 = vmatpush1.xpose.msra.mxu0 0.0
        %4808 = vmatprep.subr.mxu0 0.0
        %4809 = vmatpush1.xpose.msra.mxu0 0.0
        %4810 = vmatprep.subr.mxu0 0.0
        %4811 = vmatpush1.xpose.msra.mxu0 0.0
        %4812 = vmatprep.subr.mxu0 0.0
        %4813 = vmatpush1.xpose.msra.mxu0 0.0
        %4814 = vmatprep.subr.mxu0 0.0
        %4815 = vmatpush1.xpose.msra.mxu0 0.0
        %4816 = vmatprep.subr.mxu0 0.0
        %4817 = vmatpush1.xpose.msra.mxu0 0.0
        %4818 = vmatprep.subr.mxu0 0.0
        %4819 = vmatpush1.xpose.msra.mxu0 0.0
        %4820 = vmatprep.subr.mxu0 0.0
        %4821 = vmatpush1.xpose.msra.mxu0 0.0
        %4822 = vmatprep.subr.mxu0 0.0
        %4823 = vmatpush1.xpose.msra.mxu0 0.0
        %4824 = vmatprep.subr.mxu0 0.0
        %4825 = vmatpush1.xpose.msra.mxu0 0.0
        %4826 = vmatprep.subr.mxu0 0.0
        %4827 = vmatpush1.xpose.msra.mxu0 0.0
        %4828 = vmatprep.subr.mxu0 0.0
        %4829 = vmatpush1.xpose.msra.mxu0 0.0
        %4830 = vmatprep.subr.mxu0 0.0
        %4831 = vmatpush1.xpose.msra.mxu0 0.0
        %4832 = vmatprep.subr.mxu0 0.0
        %4833 = vmatpush1.xpose.msra.mxu0 0.0
        %4834 = vmatprep.subr.mxu0 0.0
        %4835 = vmatpush1.xpose.msra.mxu0 0.0
        %4836 = vmatprep.subr.mxu0 0.0
        %4837 = vmatpush1.xpose.msra.mxu0 0.0
        %4838 = vmatprep.subr.mxu0 0.0
        %4839 = vmatpush1.xpose.msra.mxu0 0.0
        %4840 = vmatprep.subr.mxu0 0.0
        %4841 = vmatpush1.xpose.msra.mxu0 0.0
        %4842 = vmatprep.subr.mxu0 0.0
        %4843 = vmatpush1.xpose.msra.mxu0 0.0
        %4844 = vmatprep.subr.mxu0 0.0
        %4845 = vmatpush1.xpose.msra.mxu0 0.0
        %4846 = vmatprep.subr.mxu0 0.0
        %4847 = vmatpush1.xpose.msra.mxu0 0.0
        %4848 = vmatprep.mubr.f32.mxu0 0.0
        %4849 = vmatmul.mubr.f32.gmra.mrb[0].mxu0 %v4770
        %v4850 = vpop.f32.mrb[0].mxu0
        %v4851 = vadd.f32 0.0, %v4850
        %v4852 = vpop.f32.mrb[0].mxu0
        %4853 = vdwg.mxu0
        %v4854 = vld [vmem:[%s20] sm:$0xff]
        %v4855 = vld [vmem:[%s20 + $0x8] sm:$0xff]
        %v4856 = vld [vmem:[%s20 + $0x10] sm:$0xff]
        %v4857 = vld [vmem:[%s20 + $0x18] sm:$0xff]
        %v4858 = vld [vmem:[%s21] sm:$0x1]
        %v4860 = vlaneseq
        %v4861 = vshrl.u32 %v4860, 7
        %v4862 = vsub.s32 0, %v4861
        %v4863 = vrot.slane %v4858, %v4862
        %v4866 = vsel %vm3585, %v4851, 0
        %4868 = vmatprep.subr.mxu0 0.0
        %4869 = vmatpush1.msra.mxu0 %v4854
        %4870 = vmatprep.subr.mxu0 0.0
        %4871 = vmatpush1.msra.mxu0 %v4855
        %4872 = vmatprep.subr.mxu0 0.0
        %4873 = vmatpush1.msra.mxu0 %v4856
        %4874 = vmatprep.subr.mxu0 0.0
        %4875 = vmatpush1.msra.mxu0 %v4857
        %4876 = vmatprep.subr.mxu0 0.0
        %4877 = vmatpush1.msra.mxu0 0.0
        %4878 = vmatprep.subr.mxu0 0.0
        %4879 = vmatpush1.msra.mxu0 0.0
        %4880 = vmatprep.subr.mxu0 0.0
        %4881 = vmatpush1.msra.mxu0 0.0
        %4882 = vmatprep.subr.mxu0 0.0
        %4883 = vmatpush1.msra.mxu0 0.0
        %4884 = vmatprep.subr.mxu0 0.0
        %4885 = vmatpush1.msra.mxu0 0.0
        %4886 = vmatprep.subr.mxu0 0.0
        %4887 = vmatpush1.msra.mxu0 0.0
        %4888 = vmatprep.subr.mxu0 0.0
        %4889 = vmatpush1.msra.mxu0 0.0
        %4890 = vmatprep.subr.mxu0 0.0
        %4891 = vmatpush1.msra.mxu0 0.0
        %4892 = vmatprep.subr.mxu0 0.0
        %4893 = vmatpush1.msra.mxu0 0.0
        %4894 = vmatprep.subr.mxu0 0.0
        %4895 = vmatpush1.msra.mxu0 0.0
        %4896 = vmatprep.subr.mxu0 0.0
        %4897 = vmatpush1.msra.mxu0 0.0
        %4898 = vmatprep.subr.mxu0 0.0
        %4899 = vmatpush1.msra.mxu0 0.0
        %4900 = vmatprep.subr.mxu0 0.0
        %4901 = vmatpush1.msra.mxu0 0.0
        %4902 = vmatprep.subr.mxu0 0.0
        %4903 = vmatpush1.msra.mxu0 0.0
        %4904 = vmatprep.subr.mxu0 0.0
        %4905 = vmatpush1.msra.mxu0 0.0
        %4906 = vmatprep.subr.mxu0 0.0
        %4907 = vmatpush1.msra.mxu0 0.0
        %4908 = vmatprep.subr.mxu0 0.0
        %4909 = vmatpush1.msra.mxu0 0.0
        %4910 = vmatprep.subr.mxu0 0.0
        %4911 = vmatpush1.msra.mxu0 0.0
        %4912 = vmatprep.subr.mxu0 0.0
        %4913 = vmatpush1.msra.mxu0 0.0
        %4914 = vmatprep.subr.mxu0 0.0
        %4915 = vmatpush1.msra.mxu0 0.0
        %4916 = vmatprep.subr.mxu0 0.0
        %4917 = vmatpush1.msra.mxu0 0.0
        %4918 = vmatprep.subr.mxu0 0.0
        %4919 = vmatpush1.msra.mxu0 0.0
        %4920 = vmatprep.subr.mxu0 0.0
        %4921 = vmatpush1.msra.mxu0 0.0
        %4922 = vmatprep.subr.mxu0 0.0
        %4923 = vmatpush1.msra.mxu0 0.0
        %4924 = vmatprep.subr.mxu0 0.0
        %4925 = vmatpush1.msra.mxu0 0.0
        %4926 = vmatprep.subr.mxu0 0.0
        %4927 = vmatpush1.msra.mxu0 0.0
        %4928 = vmatprep.subr.mxu0 0.0
        %4929 = vmatpush1.msra.mxu0 0.0
        %4930 = vmatprep.subr.mxu0 0.0
        %4931 = vmatpush1.msra.mxu0 0.0
        %4932 = vmatprep.mubr.f32.mxu0 0.0
        %4933 = vmatmul.mubr.f32.gmra.mrb[0].mxu0 %v4866
        %v4934 = vpop.f32.mrb[0].mxu0
        %v4935 = vadd.f32 %v4863, %v4934
        %v4936 = vpop.f32.mrb[0].mxu0
        %4937 = vdwg.mxu0
        %vm4938 = vcmask 74752
        %4939 = vst.msk [vmem:[%s676] sm:$0x3] %vm4938, %v4935
        %s4940 = sand.u32 %s511, 1
        %s4941 = scalar_lea.sflag [#allocation4], %s4940
        %s4942 = sand.u32 %s511, 1
        %s4943 = smul.addr %s4942, 2
        %s4944 = scalar_lea.vmem [#allocation3], %s4943
        // Predicated region
        $region109: #{enhanced_model_forward.1} parent=107 // pred_check
          %p4945 = pneg %p521
        $region110: #{enhanced_model_forward.1} parent=107 // pred_check_branch
          %4947 = sbr.rel (%p4945) target = $region112
        $region111: #{enhanced_model_forward.1} parent=107 // pred_region
          %s4949 = ssub.s32 32, 32
          %4950 = vsyncadd %s4941, %s4949
          %s4951 = smul.addr %s36, 32
          %s4952 = scalar_lea.hbm %s22, %s4951
          %s4954 = sshll.u32 %s4944, 4
          %s4955 = int_to_ptr.vmem [resolvable:$true] %s4954
          %4957 = dma.vmem_to_hbm [thread:$0]  %s4955, 32, %s4952, %s4941
        $region112: #{enhanced_model_forward.1} parent=107 // pred_fallthru
          _
      $region108: #{enhanced_model_forward.1} parent=5 // pred_fallthru
        _
      %p4958 = scmp.le.s32.totalorder 2, %s31
      // Predicated region
      $region113: #{enhanced_model_forward.1} parent=5 // pred_check
        %p4959 = pneg %p4958
      $region114: #{enhanced_model_forward.1} parent=5 // pred_check_branch
        %4961 = sbr.rel (%p4959) target = $region116
      $region115: #{enhanced_model_forward.1} parent=5 // pred_region
        %s4962 = ssub.s32 %s31, 2
        // Predicated region
        $region117: #{enhanced_model_forward.1} parent=115 // pred_check
          %p4963 = pneg %p527
        $region118: #{enhanced_model_forward.1} parent=115 // pred_check_branch
          %4965 = sbr.rel (%p4963) target = $region120
        $region119: #{enhanced_model_forward.1} parent=115 // pred_region
          %s4966 = sand.u32 %s512, 1
          %s4967 = scalar_lea.sflag [#allocation4], %s4966
          %s4968 = sand.u32 %s512, 1
          %s4969 = smul.addr %s4968, 2
          %s4970 = scalar_lea.vmem [#allocation3], %s4969
          %4971 = dma.done %s4967, 32
        $region120: #{enhanced_model_forward.1} parent=115 // pred_fallthru
          _
      $region116: #{enhanced_model_forward.1} parent=5 // pred_fallthru
        _
    $region6: #{enhanced_model_forward.1} parent=1 // loop_footer
      %s35 = sadd.s32 1, %s31
    $region7: #{enhanced_model_forward.1} parent=1 // loop_footer_branch
      %30 = sbr.rel target = $region3
    $region8: #{enhanced_model_forward.1} parent=1 // loop_exit
      _
    %4972 = vsyncpa [#allocation4], 1
    %s4973 = scalar_lea.sflag [#allocation4], 1
    %4974 = vsyncpa %s4973, 1

</llo_original>
